<compile_context>
chip_gen: v5e
topology: v5e:2x2
jax: 0.10.0
libtpu: 0.0.40
codegen_flags: <defaults>
</compile_context>

<pallas_src>
import math
from functools import partial

import numpy as np
import jax
import jax.numpy as jnp
from jax import lax
from jax.experimental import pallas as pl
from jax.experimental.pallas import tpu as pltpu

# ----------------------------- configuration --------------------------------
LAYERS      = 50                 # args.layers  (ResNet-50 -> blocks [3, 4, 6] used)
CLASSES     = 3                  # args.classes
ZOOM_FACTOR = 8                  # args.zoom_factor
PPM_SCALES  = [1.0, 0.5]         # args.ppm_scales  (pyramid=True branch)
REDUCE_DIM  = 256
FEA_DIM     = 1024 + 512

_BN_SCALE = 1.0 / math.sqrt(1.0 + 1e-5)   # BatchNorm2d eval, default stats


# ----------------------------- Pallas matmul kernel --------------------------
def _matmul_kernel(*refs, relu, has_bias, has_res):
    # refs: a (TM, Kp) bf16, b (Kp, TN) bf16, [bias (1, TN) f32],
    #       [res (TM, TN) bf16], out (TM, TN) bf16.
    # Single K step: the whole reduction happens inside one MXU dot; the f32
    # accumulator lives in registers only and is cast to bf16 on store.
    a_ref, b_ref = refs[0], refs[1]
    o_ref = refs[-1]
    idx = 2
    bias_ref = None
    res_ref = None
    if has_bias:
        bias_ref = refs[idx]
        idx += 1
    if has_res:
        res_ref = refs[idx]
        idx += 1

    acc = jnp.dot(a_ref[...], b_ref[...], preferred_element_type=jnp.float32)
    if has_bias:
        acc = acc + bias_ref[...]
    if has_res:
        acc = acc + res_ref[...].astype(jnp.float32)
    if relu:
        acc = jnp.maximum(acc, 0.0)
    o_ref[...] = acc.astype(o_ref.dtype)


def _round_up(x, m):
    return -(-x // m) * m


def _pick_m(m):
    """(padded M, TM); TM a multiple of 16 (bf16 sublane packing)."""
    mp = _round_up(m, 16)
    if mp <= 256:
        return mp, mp                       # single M tile
    return _round_up(m, 256), 256           # 256 rows feeds the 256-row MXU per pass


def _pick_n(n, m_tiles):
    """(padded N, TN); TN a multiple of 128 (lane width), <= 512."""
    np_ = _round_up(n, 128)
    if np_ <= 128:
        return np_, np_
    cap = 512
    if m_tiles == 1:
        # keep >= 2 grid tiles so both v7x TensorCores get work
        cap = min(cap, np_ // 2)
    tn = 128
    for t in (512, 384, 256, 128):
        if t <= cap and np_ % t == 0:
            tn = t
            break
    return np_, tn


def _xla_matmul(a, b, bias, residual, relu):
    out = jnp.dot(a.astype(jnp.bfloat16), b.astype(jnp.bfloat16),
                  preferred_element_type=jnp.float32)
    if bias is not None:
        out = out + bias.astype(jnp.float32)[None, :]
    if residual is not None:
        out = out + residual.astype(jnp.float32)
    if relu:
        out = jnp.maximum(out, 0.0)
    return out


def pallas_matmul(a, b, bias=None, residual=None, relu=False):
    """a: (M, K); b: (K, N) bf16 weights; bias: (N,) f32 or None;
    residual: (M, N) or None (added pre-ReLU).  Returns (M, N)."""
    M, K = a.shape
    K2, N = b.shape
    assert K == K2

    # Tiny GEMMs: classifier heads (N = classes) and the 5x5 / 2x2 pyramid maps
    # (M <= 50).  The pallas_call launch + pad/slice glue costs far more than
    # the matmul and the MXU tile would be >90% padding -> plain XLA dot.
    if N < 16 or M < 128:
        return _xla_matmul(a, b, bias, residual, relu)

    Mp, TM = _pick_m(M)
    Np, TN = _pick_n(N, Mp // TM)
    Kp = _round_up(K, 128)

    # Full-K single-step tiles: keep the double-buffered bf16 working set under
    # the smallest (v5e, 16 MiB) scoped-VMEM default.  Never triggers at this
    # model's shapes (K <= 2304 on the Pallas path) -- pure safety net.
    vmem_est = 2 * 2 * (TM * Kp + Kp * TN + 2 * TM * TN)
    if vmem_est > 12 * 1024 * 1024:
        return _xla_matmul(a, b, bias, residual, relu)

    has_bias = bias is not None
    has_res = residual is not None

    a_p = jnp.pad(a.astype(jnp.bfloat16), ((0, Mp - M), (0, Kp - K)))
    b_p = jnp.pad(b.astype(jnp.bfloat16), ((0, Kp - K), (0, Np - N)))

    operands = [a_p, b_p]
    in_specs = [
        pl.BlockSpec((TM, Kp), lambda i, j: (i, 0)),
        pl.BlockSpec((Kp, TN), lambda i, j: (0, j)),
    ]
    if has_bias:
        operands.append(jnp.pad(bias.astype(jnp.float32)[None, :],
                                ((0, 0), (0, Np - N))))
        in_specs.append(pl.BlockSpec((1, TN), lambda i, j: (0, j)))
    if has_res:
        operands.append(jnp.pad(residual.astype(jnp.bfloat16),
                                ((0, Mp - M), (0, Np - N))))
        in_specs.append(pl.BlockSpec((TM, TN), lambda i, j: (i, j)))

    out = pl.pallas_call(
        partial(_matmul_kernel, relu=relu, has_bias=has_bias, has_res=has_res),
        out_shape=jax.ShapeDtypeStruct((Mp, Np), jnp.bfloat16),
        grid_spec=pltpu.PrefetchScalarGridSpec(
            num_scalar_prefetch=0,
            grid=(Mp // TM, Np // TN),
            in_specs=in_specs,
            out_specs=pl.BlockSpec((TM, TN), lambda i, j: (i, j)),
        ),
        compiler_params=pltpu.CompilerParams(
            dimension_semantics=("parallel", "parallel"),
            vmem_limit_bytes=32 * 1024 * 1024),
    )(*operands)
    return out[:M, :N]


# ----------------------------- conv / misc helpers ---------------------------
def conv2d(x, w, bias=None, stride=1, padding=0, dilation=1, relu=False,
           residual=None):
    """x: (N, H, W, Cin) NHWC; w: (kh, kw, Cin, Cout) HWIO bf16.
    residual: optional (N, OH, OW, Cout), added before ReLU (fused epilogue)."""
    n, h, wid, cin = x.shape
    kh, kw, _, cout = w.shape
    oh = (h + 2 * padding - dilation * (kh - 1) - 1) // stride + 1
    ow = (wid + 2 * padding - dilation * (kw - 1) - 1) // stride + 1
    xb = x.astype(jnp.bfloat16)          # bf16 im2col halves HBM traffic of the glue
    if kh == 1 and kw == 1 and padding == 0:
        a = xb[:, ::stride, ::stride, :].reshape(n * oh * ow, cin)
    else:
        xp = jnp.pad(xb, ((0, 0), (padding, padding), (padding, padding), (0, 0)))
        cols = []
        for dy in range(kh):
            for dx in range(kw):
                ys, xs = dy * dilation, dx * dilation
                cols.append(xp[:, ys: ys + (oh - 1) * stride + 1: stride,
                                  xs: xs + (ow - 1) * stride + 1: stride, :])
        a = jnp.concatenate(cols, axis=-1).reshape(n * oh * ow, kh * kw * cin)
    # TODO(synk): fold the (dy,dx) taps into the kernel's K axis (implicit GEMM)
    #             so the kh*kw-wide im2col matrix is never materialized in HBM.
    res2d = None
    if residual is not None:
        res2d = residual.reshape(n * oh * ow, cout)
    out = pallas_matmul(a, w.reshape(kh * kw * cin, cout),
                        bias=bias, residual=res2d, relu=relu)
    return out.reshape(n, oh, ow, cout)


def maxpool_3x3_s2_p1(x):
    return lax.reduce_window(x, jnp.asarray(-jnp.inf, dtype=x.dtype), lax.max,
                             (1, 3, 3, 1), (1, 2, 2, 1),
                             [(0, 0), (1, 1), (1, 1), (0, 0)])


def adaptive_avg_pool(x, out_size):
    n, h, w, c = x.shape
    rows = []
    for i in range(out_size):
        hs, he = (i * h) // out_size, -(-((i + 1) * h) // out_size)
        cols = []
        for j in range(out_size):
            ws, we = (j * w) // out_size, -(-((j + 1) * w) // out_size)
            cols.append(jnp.mean(x[:, hs:he, ws:we, :].astype(jnp.float32),
                                 axis=(1, 2)))
        rows.append(jnp.stack(cols, axis=1))
    return jnp.stack(rows, axis=1)


def interp_bilinear(x, out_h, out_w):
    """F.interpolate(mode='bilinear', align_corners=True) on NHWC."""
    n, h, w, c = x.shape
    x32 = x.astype(jnp.float32)

    def coords(o, i):
        if o == 1:
            return jnp.zeros((1,), jnp.float32)
        return jnp.arange(o, dtype=jnp.float32) * ((i - 1) / (o - 1))

    ys, xs = coords(out_h, h), coords(out_w, w)
    y0 = jnp.floor(ys).astype(jnp.int32)
    x0 = jnp.floor(xs).astype(jnp.int32)
    y1 = jnp.minimum(y0 + 1, h - 1)
    x1 = jnp.minimum(x0 + 1, w - 1)
    wy = (ys - y0.astype(jnp.float32))[None, :, None, None]
    wx = (xs - x0.astype(jnp.float32))[None, None, :, None]
    a = x32[:, y0][:, :, x0]
    b = x32[:, y0][:, :, x1]
    cc = x32[:, y1][:, :, x0]
    d = x32[:, y1][:, :, x1]
    top = a * (1 - wx) + b * wx
    bot = cc * (1 - wx) + d * wx
    return top * (1 - wy) + bot * wy


# ----------------------------- parameters ------------------------------------
_KEY = jax.random.PRNGKey(0)
_counter = [0]


def _next_key():
    _counter[0] += 1
    return jax.random.fold_in(_KEY, _counter[0])


def conv_w(kh, kw, cin, cout, scale=1.0):
    # Pre-cast to bf16 once; `scale` folds the (constant) eval-mode BatchNorm.
    fan = kh * kw * cin
    w = jax.random.normal(_next_key(), (kh, kw, cin, cout),
                          jnp.float32) / np.sqrt(fan)
    return (w * scale).astype(jnp.bfloat16)


def bb_conv_w(kh, kw, cin, cout):
    # Backbone conv followed by BatchNorm2d (eval, default stats): fold the scale.
    return conv_w(kh, kw, cin, cout, scale=_BN_SCALE)


def bias_w(n):
    return jax.random.normal(_next_key(), (n,), jnp.float32) * 0.1


def make_bottleneck(inplanes, planes, has_down):
    p = {
        "conv1": bb_conv_w(1, 1, inplanes, planes),
        "conv2": bb_conv_w(3, 3, planes, planes),
        "conv3": bb_conv_w(1, 1, planes, planes * 4),
    }
    if has_down:
        p["down"] = bb_conv_w(1, 1, inplanes, planes * 4)
    return p


def make_layer(inplanes, planes, blocks):
    params = []
    for i in range(blocks):
        params.append(make_bottleneck(inplanes if i == 0 else planes * 4,
                                      planes, has_down=(i == 0)))
    return params


def make_params():
    p = {
        "layer0": {"conv1": bb_conv_w(3, 3, 3, 64),
                   "conv2": bb_conv_w(3, 3, 64, 64),
                   "conv3": bb_conv_w(3, 3, 64, 128)},
        "layer1": make_layer(128, 64, 3),
        "layer2": make_layer(256, 128, 4),
        "layer3": make_layer(512, 256, 6),
        "down_conv": conv_w(1, 1, FEA_DIM, REDUCE_DIM),
        "pyramid": {
            "beta": [[conv_w(3, 3, REDUCE_DIM, REDUCE_DIM),
                      conv_w(3, 3, REDUCE_DIM, REDUCE_DIM)]
                     for _ in PPM_SCALES],
            "inner_cls": [{"conv": conv_w(3, 3, REDUCE_DIM, REDUCE_DIM),
                           "cls_w": conv_w(1, 1, REDUCE_DIM, CLASSES),
                           "cls_b": bias_w(CLASSES)}
                          for _ in PPM_SCALES],
            "alpha": [conv_w(1, 1, 2 * REDUCE_DIM, REDUCE_DIM)
                      for _ in range(len(PPM_SCALES) - 1)],
            "res1": conv_w(1, 1, REDUCE_DIM * len(PPM_SCALES), REDUCE_DIM),
            "res2": [conv_w(3, 3, REDUCE_DIM, REDUCE_DIM),
                     conv_w(3, 3, REDUCE_DIM, REDUCE_DIM)],
        },
        "cls": {"conv": conv_w(3, 3, REDUCE_DIM, REDUCE_DIM),
                "cls_w": conv_w(1, 1, REDUCE_DIM, CLASSES),
                "cls_b": bias_w(CLASSES)},
    }
    return p


# ----------------------------- model forward ---------------------------------
def bottleneck_fwd(x, p, stride=1, dilation=1):
    # BatchNorm (eval, default stats) is a constant scale folded into the conv
    # weights; the residual add + final ReLU are fused into conv3's epilogue.
    out = conv2d(x, p["conv1"], relu=True)
    out = conv2d(out, p["conv2"], stride=stride,
                 padding=dilation, dilation=dilation, relu=True)
    identity = conv2d(x, p["down"], stride=stride) if "down" in p else x
    return conv2d(out, p["conv3"], residual=identity, relu=True)


def run_layer(x, blocks, stride, dilation):
    for i, bp in enumerate(blocks):
        x = bottleneck_fwd(x, bp, stride=stride if i == 0 else 1,
                           dilation=dilation)
    return x


def model_forward(params, x):
    # x: (B, H, W) grayscale; mirrors x.unsqueeze(1).repeat(1, 3, 1, 1)
    B, H, W = x.shape
    assert (H - 1) % 8 == 0 and (W - 1) % 8 == 0
    h = (H - 1) // 8 * ZOOM_FACTOR + 1
    w = (W - 1) // 8 * ZOOM_FACTOR + 1
    x = jnp.repeat(x[..., None], 3, axis=-1)                 # NHWC, 3 channels

    # ---- frozen backbone (torch.no_grad in reference) ----
    p0 = params["layer0"]
    o = conv2d(x, p0["conv1"], stride=2, padding=1, relu=True)
    o = conv2d(o, p0["conv2"], stride=1, padding=1, relu=True)
    o = conv2d(o, p0["conv3"], stride=1, padding=1, relu=True)
    x_0 = maxpool_3x3_s2_p1(o)
    x_1 = run_layer(x_0, params["layer1"], stride=1, dilation=1)
    x_2 = run_layer(x_1, params["layer2"], stride=2, dilation=1)
    x_3 = run_layer(x_2, params["layer3"], stride=1, dilation=2)  # dilated, stride 1

    # ---- head ----
    feat = jnp.concatenate([x_3, x_2], axis=-1)               # cat along channels
    xq = conv2d(feat, params["down_conv"])                    # + Dropout2d(0.5): identity (eval)

    hx, wx = xq.shape[1], xq.shape[2]
    pyr = params["pyramid"]
    pyramid_feat_list, out_list = [], []
    for idx, tmp_bin in enumerate(PPM_SCALES):
        b = int(hx * tmp_bin)                                  # tmp_bin <= 1.0 path
        x_tmp = adaptive_avg_pool(xq, b)
        if idx >= 1:
            pre = interp_bilinear(pyramid_feat_list[idx - 1], b, b)
            rec = jnp.concatenate([x_tmp, pre], axis=-1)
            x_tmp = conv2d(rec, pyr["alpha"][idx - 1], relu=True) + x_tmp
        t = conv2d(x_tmp, pyr["beta"][idx][0], padding=1, relu=True)
        t = conv2d(t, pyr["beta"][idx][1], padding=1, relu=True)
        x_tmp = t + x_tmp
        ic = pyr["inner_cls"][idx]
        inner = conv2d(x_tmp, ic["conv"], padding=1, relu=True)
        inner = conv2d(inner, ic["cls_w"], bias=ic["cls_b"])
        out_list.append(inner)                                 # unused in eval mode
        x_tmp = interp_bilinear(x_tmp, hx, wx)
        pyramid_feat_list.append(x_tmp)

    final_feat = jnp.concatenate(pyramid_feat_list, axis=-1)
    final_feat = conv2d(final_feat, pyr["res1"], relu=True)
    t = conv2d(final_feat, pyr["res2"][0], padding=1, relu=True)
    t = conv2d(t, pyr["res2"][1], padding=1, relu=True)
    final_feat = t + final_feat

    c = params["cls"]
    out = conv2d(final_feat, c["conv"], padding=1, relu=True)  # + Dropout2d(0.1): identity
    out = conv2d(out, c["cls_w"], bias=c["cls_b"])

    if ZOOM_FACTOR != 1:
        out = interp_bilinear(out, h, w)
    return jnp.transpose(out, (0, 3, 1, 2))                    # NCHW (B, classes, h, w)


# ----------------------------- main -------------------------------------------
if __name__ == "__main__":
    params = make_params()
    x = jax.random.normal(jax.random.PRNGKey(0), (2, 33, 33), jnp.float32)

    fwd = jax.jit(model_forward)
    out = fwd(params, x)
    jax.block_until_ready(out)

    expected = (2, CLASSES, 33, 33)
    assert out.shape == expected, (out.shape, expected)
    assert bool(jnp.all(jnp.isfinite(out)))
    print("KERNEL_OK")
</pallas_src>

<mosaic_0001>
module attributes {stable_mosaic.version = 11 : i64} {
  func.func @_matmul_kernel(%arg0: i32, %arg1: i32, %arg2: memref<256x128xbf16, #tpu.memory_space<vmem>>, %arg3: memref<128x128xbf16, #tpu.memory_space<vmem>>, %arg4: memref<256x128xbf16, #tpu.memory_space<vmem>>) attributes {dimension_semantics = [#tpu.dimension_semantics<parallel>, #tpu.dimension_semantics<parallel>], iteration_bounds = array<i64: 3, 1>, scalar_prefetch = 0 : i64, scratch_operands = 0 : i64, tpu.core_type = #tpu.core_type<tc>, window_params = [{transform_indices = @transform_0, window_bounds = array<i64: 256, 128>}, {transform_indices = @transform_1, window_bounds = array<i64: 128, 128>}, {transform_indices = @transform_2, window_bounds = array<i64: 256, 128>}]} {
    %c0 = arith.constant 0 : index
    %c0_0 = arith.constant 0 : index
    %0 = vector.load %arg2[%c0, %c0_0] : memref<256x128xbf16, #tpu.memory_space<vmem>>, vector<256x128xbf16>
    %c0_1 = arith.constant 0 : index
    %c0_2 = arith.constant 0 : index
    %1 = vector.load %arg3[%c0_1, %c0_2] : memref<128x128xbf16, #tpu.memory_space<vmem>>, vector<128x128xbf16>
    %cst = arith.constant dense<0.000000e+00> : vector<256x128xf32>
    %2 = tpu.matmul %0, %1, %cst {dimension_numbers = #tpu.dot_dimension_numbers<[1], [0], [0], [1], [0, 0, 1, 1], [], []>} : vector<256x128xbf16>, vector<128x128xbf16>, vector<256x128xf32> -> vector<256x128xf32>
    %cst_3 = arith.constant 0.000000e+00 : f32
    %3 = vector.broadcast %cst_3 : f32 to vector<256x128xf32>
    %4 = arith.maximumf %2, %3 : vector<256x128xf32>
    %5 = arith.truncf %4 : vector<256x128xf32> to vector<256x128xbf16>
    %c0_4 = arith.constant 0 : index
    %c0_5 = arith.constant 0 : index
    %6 = vector.load %arg4[%c0_4, %c0_5] : memref<256x128xbf16, #tpu.memory_space<vmem>>, vector<256x128xbf16>
    tpu.vector_store %arg4[%c0_4, %c0_5], %5 {strides = array<i32>} : memref<256x128xbf16, #tpu.memory_space<vmem>>, vector<256x128xbf16>,
    return
  }
  func.func @transform_0(%arg0: i32, %arg1: i32) -> (i32, i32) {
    %c0_i32 = arith.constant 0 : i32
    %c0_i32_0 = arith.constant 0 : i32
    return %arg0, %c0_i32 : i32, i32
  }
  func.func @transform_1(%arg0: i32, %arg1: i32) -> (i32, i32) {
    %c0_i32 = arith.constant 0 : i32
    %c0_i32_0 = arith.constant 0 : i32
    return %c0_i32, %arg1 : i32, i32
  }
  func.func @transform_2(%arg0: i32, %arg1: i32) -> (i32, i32) {
    %c0_i32 = arith.constant 0 : i32
    return %arg0, %arg1 : i32, i32
  }
}

module attributes {stable_mosaic.version = 11 : i64} {
  func.func @_matmul_kernel(%arg0: i32, %arg1: i32, %arg2: memref<256x640xbf16, #tpu.memory_space<vmem>>, %arg3: memref<640x128xbf16, #tpu.memory_space<vmem>>, %arg4: memref<256x128xbf16, #tpu.memory_space<vmem>>) attributes {dimension_semantics = [#tpu.dimension_semantics<parallel>, #tpu.dimension_semantics<parallel>], iteration_bounds = array<i64: 3, 1>, scalar_prefetch = 0 : i64, scratch_operands = 0 : i64, tpu.core_type = #tpu.core_type<tc>, window_params = [{transform_indices = @transform_0, window_bounds = array<i64: 256, 640>}, {transform_indices = @transform_1, window_bounds = array<i64: 640, 128>}, {transform_indices = @transform_2, window_bounds = array<i64: 256, 128>}]} {
    %c0 = arith.constant 0 : index
    %c0_0 = arith.constant 0 : index
    %0 = vector.load %arg2[%c0, %c0_0] : memref<256x640xbf16, #tpu.memory_space<vmem>>, vector<256x640xbf16>
    %c0_1 = arith.constant 0 : index
    %c0_2 = arith.constant 0 : index
    %1 = vector.load %arg3[%c0_1, %c0_2] : memref<640x128xbf16, #tpu.memory_space<vmem>>, vector<640x128xbf16>
    %cst = arith.constant dense<0.000000e+00> : vector<256x128xf32>
    %2 = tpu.matmul %0, %1, %cst {dimension_numbers = #tpu.dot_dimension_numbers<[1], [0], [0], [1], [0, 0, 1, 1], [], []>} : vector<256x640xbf16>, vector<640x128xbf16>, vector<256x128xf32> -> vector<256x128xf32>
    %cst_3 = arith.constant 0.000000e+00 : f32
    %3 = vector.broadcast %cst_3 : f32 to vector<256x128xf32>
    %4 = arith.maximumf %2, %3 : vector<256x128xf32>
    %5 = arith.truncf %4 : vector<256x128xf32> to vector<256x128xbf16>
    %c0_4 = arith.constant 0 : index
    %c0_5 = arith.constant 0 : index
    %6 = vector.load %arg4[%c0_4, %c0_5] : memref<256x128xbf16, #tpu.memory_space<vmem>>, vector<256x128xbf16>
    tpu.vector_store %arg4[%c0_4, %c0_5], %5 {strides = array<i32>} : memref<256x128xbf16, #tpu.memory_space<vmem>>, vector<256x128xbf16>,
    return
  }
  func.func @transform_0(%arg0: i32, %arg1: i32) -> (i32, i32) {
    %c0_i32 = arith.constant 0 : i32
    %c0_i32_0 = arith.constant 0 : i32
    return %arg0, %c0_i32 : i32, i32
  }
  func.func @transform_1(%arg0: i32, %arg1: i32) -> (i32, i32) {
    %c0_i32 = arith.constant 0 : i32
    %c0_i32_0 = arith.constant 0 : i32
    return %c0_i32, %arg1 : i32, i32
  }
  func.func @transform_2(%arg0: i32, %arg1: i32) -> (i32, i32) {
    %c0_i32 = arith.constant 0 : i32
    return %arg0, %arg1 : i32, i32
  }
}

module attributes {stable_mosaic.version = 11 : i64} {
  func.func @_matmul_kernel(%arg0: i32, %arg1: i32, %arg2: memref<176x128xbf16, #tpu.memory_space<vmem>>, %arg3: memref<128x128xbf16, #tpu.memory_space<vmem>>, %arg4: memref<176x128xbf16, #tpu.memory_space<vmem>>) attributes {dimension_semantics = [#tpu.dimension_semantics<parallel>, #tpu.dimension_semantics<parallel>], iteration_bounds = array<i64: 1, 1>, scalar_prefetch = 0 : i64, scratch_operands = 0 : i64, tpu.core_type = #tpu.core_type<tc>, window_params = [{transform_indices = @transform_0, window_bounds = array<i64: 176, 128>}, {transform_indices = @transform_1, window_bounds = array<i64: 128, 128>}, {transform_indices = @transform_2, window_bounds = array<i64: 176, 128>}]} {
    %c0 = arith.constant 0 : index
    %c0_0 = arith.constant 0 : index
    %0 = vector.load %arg2[%c0, %c0_0] : memref<176x128xbf16, #tpu.memory_space<vmem>>, vector<176x128xbf16>
    %c0_1 = arith.constant 0 : index
    %c0_2 = arith.constant 0 : index
    %1 = vector.load %arg3[%c0_1, %c0_2] : memref<128x128xbf16, #tpu.memory_space<vmem>>, vector<128x128xbf16>
    %cst = arith.constant dense<0.000000e+00> : vector<176x128xf32>
    %2 = tpu.matmul %0, %1, %cst {dimension_numbers = #tpu.dot_dimension_numbers<[1], [0], [0], [1], [0, 0, 1, 1], [], []>} : vector<176x128xbf16>, vector<128x128xbf16>, vector<176x128xf32> -> vector<176x128xf32>
    %cst_3 = arith.constant 0.000000e+00 : f32
    %3 = vector.broadcast %cst_3 : f32 to vector<176x128xf32>
    %4 = arith.maximumf %2, %3 : vector<176x128xf32>
    %5 = arith.truncf %4 : vector<176x128xf32> to vector<176x128xbf16>
    %c0_4 = arith.constant 0 : index
    %c0_5 = arith.constant 0 : index
    %6 = vector.load %arg4[%c0_4, %c0_5] : memref<176x128xbf16, #tpu.memory_space<vmem>>, vector<176x128xbf16>
    tpu.vector_store %arg4[%c0_4, %c0_5], %5 {strides = array<i32>} : memref<176x128xbf16, #tpu.memory_space<vmem>>, vector<176x128xbf16>,
    return
  }
  func.func @transform_0(%arg0: i32, %arg1: i32) -> (i32, i32) {
    %c0_i32 = arith.constant 0 : i32
    %c0_i32_0 = arith.constant 0 : i32
    return %arg0, %c0_i32 : i32, i32
  }
  func.func @transform_1(%arg0: i32, %arg1: i32) -> (i32, i32) {
    %c0_i32 = arith.constant 0 : i32
    %c0_i32_0 = arith.constant 0 : i32
    return %c0_i32, %arg1 : i32, i32
  }
  func.func @transform_2(%arg0: i32, %arg1: i32) -> (i32, i32) {
    %c0_i32 = arith.constant 0 : i32
    return %arg0, %arg1 : i32, i32
  }
}

module attributes {stable_mosaic.version = 11 : i64} {
  func.func @_matmul_kernel(%arg0: i32, %arg1: i32, %arg2: memref<176x640xbf16, #tpu.memory_space<vmem>>, %arg3: memref<640x128xbf16, #tpu.memory_space<vmem>>, %arg4: memref<176x128xbf16, #tpu.memory_space<vmem>>) attributes {dimension_semantics = [#tpu.dimension_semantics<parallel>, #tpu.dimension_semantics<parallel>], iteration_bounds = array<i64: 1, 1>, scalar_prefetch = 0 : i64, scratch_operands = 0 : i64, tpu.core_type = #tpu.core_type<tc>, window_params = [{transform_indices = @transform_0, window_bounds = array<i64: 176, 640>}, {transform_indices = @transform_1, window_bounds = array<i64: 640, 128>}, {transform_indices = @transform_2, window_bounds = array<i64: 176, 128>}]} {
    %c0 = arith.constant 0 : index
    %c0_0 = arith.constant 0 : index
    %0 = vector.load %arg2[%c0, %c0_0] : memref<176x640xbf16, #tpu.memory_space<vmem>>, vector<176x640xbf16>
    %c0_1 = arith.constant 0 : index
    %c0_2 = arith.constant 0 : index
    %1 = vector.load %arg3[%c0_1, %c0_2] : memref<640x128xbf16, #tpu.memory_space<vmem>>, vector<640x128xbf16>
    %cst = arith.constant dense<0.000000e+00> : vector<176x128xf32>
    %2 = tpu.matmul %0, %1, %cst {dimension_numbers = #tpu.dot_dimension_numbers<[1], [0], [0], [1], [0, 0, 1, 1], [], []>} : vector<176x640xbf16>, vector<640x128xbf16>, vector<176x128xf32> -> vector<176x128xf32>
    %cst_3 = arith.constant 0.000000e+00 : f32
    %3 = vector.broadcast %cst_3 : f32 to vector<176x128xf32>
    %4 = arith.maximumf %2, %3 : vector<176x128xf32>
    %5 = arith.truncf %4 : vector<176x128xf32> to vector<176x128xbf16>
    %c0_4 = arith.constant 0 : index
    %c0_5 = arith.constant 0 : index
    %6 = vector.load %arg4[%c0_4, %c0_5] : memref<176x128xbf16, #tpu.memory_space<vmem>>, vector<176x128xbf16>
    tpu.vector_store %arg4[%c0_4, %c0_5], %5 {strides = array<i32>} : memref<176x128xbf16, #tpu.memory_space<vmem>>, vector<176x128xbf16>,
    return
  }
  func.func @transform_0(%arg0: i32, %arg1: i32) -> (i32, i32) {
    %c0_i32 = arith.constant 0 : i32
    %c0_i32_0 = arith.constant 0 : i32
    return %arg0, %c0_i32 : i32, i32
  }
  func.func @transform_1(%arg0: i32, %arg1: i32) -> (i32, i32) {
    %c0_i32 = arith.constant 0 : i32
    %c0_i32_0 = arith.constant 0 : i32
    return %c0_i32, %arg1 : i32, i32
  }
  func.func @transform_2(%arg0: i32, %arg1: i32) -> (i32, i32) {
    %c0_i32 = arith.constant 0 : i32
    return %arg0, %arg1 : i32, i32
  }
}

module attributes {stable_mosaic.version = 11 : i64} {
  func.func @_matmul_kernel(%arg0: i32, %arg1: i32, %arg2: memref<176x128xbf16, #tpu.memory_space<vmem>>, %arg3: memref<128x128xbf16, #tpu.memory_space<vmem>>, %arg4: memref<176x128xbf16, #tpu.memory_space<vmem>>) attributes {dimension_semantics = [#tpu.dimension_semantics<parallel>, #tpu.dimension_semantics<parallel>], iteration_bounds = array<i64: 1, 2>, scalar_prefetch = 0 : i64, scratch_operands = 0 : i64, tpu.core_type = #tpu.core_type<tc>, window_params = [{transform_indices = @transform_0, window_bounds = array<i64: 176, 128>}, {transform_indices = @transform_1, window_bounds = array<i64: 128, 128>}, {transform_indices = @transform_2, window_bounds = array<i64: 176, 128>}]} {
    %c0 = arith.constant 0 : index
    %c0_0 = arith.constant 0 : index
    %0 = vector.load %arg2[%c0, %c0_0] : memref<176x128xbf16, #tpu.memory_space<vmem>>, vector<176x128xbf16>
    %c0_1 = arith.constant 0 : index
    %c0_2 = arith.constant 0 : index
    %1 = vector.load %arg3[%c0_1, %c0_2] : memref<128x128xbf16, #tpu.memory_space<vmem>>, vector<128x128xbf16>
    %cst = arith.constant dense<0.000000e+00> : vector<176x128xf32>
    %2 = tpu.matmul %0, %1, %cst {dimension_numbers = #tpu.dot_dimension_numbers<[1], [0], [0], [1], [0, 0, 1, 1], [], []>} : vector<176x128xbf16>, vector<128x128xbf16>, vector<176x128xf32> -> vector<176x128xf32>
    %3 = arith.truncf %2 : vector<176x128xf32> to vector<176x128xbf16>
    %c0_3 = arith.constant 0 : index
    %c0_4 = arith.constant 0 : index
    %4 = vector.load %arg4[%c0_3, %c0_4] : memref<176x128xbf16, #tpu.memory_space<vmem>>, vector<176x128xbf16>
    tpu.vector_store %arg4[%c0_3, %c0_4], %3 {strides = array<i32>} : memref<176x128xbf16, #tpu.memory_space<vmem>>, vector<176x128xbf16>,
    return
  }
  func.func @transform_0(%arg0: i32, %arg1: i32) -> (i32, i32) {
    %c0_i32 = arith.constant 0 : i32
    %c0_i32_0 = arith.constant 0 : i32
    return %arg0, %c0_i32 : i32, i32
  }
  func.func @transform_1(%arg0: i32, %arg1: i32) -> (i32, i32) {
    %c0_i32 = arith.constant 0 : i32
    %c0_i32_0 = arith.constant 0 : i32
    return %c0_i32, %arg1 : i32, i32
  }
  func.func @transform_2(%arg0: i32, %arg1: i32) -> (i32, i32) {
    %c0_i32 = arith.constant 0 : i32
    return %arg0, %arg1 : i32, i32
  }
}

module attributes {stable_mosaic.version = 11 : i64} {
  func.func @_matmul_kernel(%arg0: i32, %arg1: i32, %arg2: memref<176x128xbf16, #tpu.memory_space<vmem>>, %arg3: memref<128x128xbf16, #tpu.memory_space<vmem>>, %arg4: memref<176x128xbf16, #tpu.memory_space<vmem>>, %arg5: memref<176x128xbf16, #tpu.memory_space<vmem>>) attributes {dimension_semantics = [#tpu.dimension_semantics<parallel>, #tpu.dimension_semantics<parallel>], iteration_bounds = array<i64: 1, 2>, scalar_prefetch = 0 : i64, scratch_operands = 0 : i64, tpu.core_type = #tpu.core_type<tc>, window_params = [{transform_indices = @transform_0, window_bounds = array<i64: 176, 128>}, {transform_indices = @transform_1, window_bounds = array<i64: 128, 128>}, {transform_indices = @transform_2, window_bounds = array<i64: 176, 128>}, {transform_indices = @transform_3, window_bounds = array<i64: 176, 128>}]} {
    %c0 = arith.constant 0 : index
    %c0_0 = arith.constant 0 : index
    %0 = vector.load %arg2[%c0, %c0_0] : memref<176x128xbf16, #tpu.memory_space<vmem>>, vector<176x128xbf16>
    %c0_1 = arith.constant 0 : index
    %c0_2 = arith.constant 0 : index
    %1 = vector.load %arg3[%c0_1, %c0_2] : memref<128x128xbf16, #tpu.memory_space<vmem>>, vector<128x128xbf16>
    %cst = arith.constant dense<0.000000e+00> : vector<176x128xf32>
    %2 = tpu.matmul %0, %1, %cst {dimension_numbers = #tpu.dot_dimension_numbers<[1], [0], [0], [1], [0, 0, 1, 1], [], []>} : vector<176x128xbf16>, vector<128x128xbf16>, vector<176x128xf32> -> vector<176x128xf32>
    %c0_3 = arith.constant 0 : index
    %c0_4 = arith.constant 0 : index
    %3 = vector.load %arg4[%c0_3, %c0_4] : memref<176x128xbf16, #tpu.memory_space<vmem>>, vector<176x128xbf16>
    %4 = arith.extf %3 : vector<176x128xbf16> to vector<176x128xf32>
    %5 = arith.addf %2, %4 : vector<176x128xf32>
    %cst_5 = arith.constant 0.000000e+00 : f32
    %6 = vector.broadcast %cst_5 : f32 to vector<176x128xf32>
    %7 = arith.maximumf %5, %6 : vector<176x128xf32>
    %8 = arith.truncf %7 : vector<176x128xf32> to vector<176x128xbf16>
    %c0_6 = arith.constant 0 : index
    %c0_7 = arith.constant 0 : index
    %9 = vector.load %arg5[%c0_6, %c0_7] : memref<176x128xbf16, #tpu.memory_space<vmem>>, vector<176x128xbf16>
    tpu.vector_store %arg5[%c0_6, %c0_7], %8 {strides = array<i32>} : memref<176x128xbf16, #tpu.memory_space<vmem>>, vector<176x128xbf16>,
    return
  }
  func.func @transform_0(%arg0: i32, %arg1: i32) -> (i32, i32) {
    %c0_i32 = arith.constant 0 : i32
    %c0_i32_0 = arith.constant 0 : i32
    return %arg0, %c0_i32 : i32, i32
  }
  func.func @transform_1(%arg0: i32, %arg1: i32) -> (i32, i32) {
    %c0_i32 = arith.constant 0 : i32
    %c0_i32_0 = arith.constant 0 : i32
    return %c0_i32, %arg1 : i32, i32
  }
  func.func @transform_2(%arg0: i32, %arg1: i32) -> (i32, i32) {
    %c0_i32 = arith.constant 0 : i32
    return %arg0, %arg1 : i32, i32
  }
  func.func @transform_3(%arg0: i32, %arg1: i32) -> (i32, i32) {
    %c0_i32 = arith.constant 0 : i32
    return %arg0, %arg1 : i32, i32
  }
}

module attributes {stable_mosaic.version = 11 : i64} {
  func.func @_matmul_kernel(%arg0: i32, %arg1: i32, %arg2: memref<176x256xbf16, #tpu.memory_space<vmem>>, %arg3: memref<256x128xbf16, #tpu.memory_space<vmem>>, %arg4: memref<176x128xbf16, #tpu.memory_space<vmem>>) attributes {dimension_semantics = [#tpu.dimension_semantics<parallel>, #tpu.dimension_semantics<parallel>], iteration_bounds = array<i64: 1, 1>, scalar_prefetch = 0 : i64, scratch_operands = 0 : i64, tpu.core_type = #tpu.core_type<tc>, window_params = [{transform_indices = @transform_0, window_bounds = array<i64: 176, 256>}, {transform_indices = @transform_1, window_bounds = array<i64: 256, 128>}, {transform_indices = @transform_2, window_bounds = array<i64: 176, 128>}]} {
    %c0 = arith.constant 0 : index
    %c0_0 = arith.constant 0 : index
    %0 = vector.load %arg2[%c0, %c0_0] : memref<176x256xbf16, #tpu.memory_space<vmem>>, vector<176x256xbf16>
    %c0_1 = arith.constant 0 : index
    %c0_2 = arith.constant 0 : index
    %1 = vector.load %arg3[%c0_1, %c0_2] : memref<256x128xbf16, #tpu.memory_space<vmem>>, vector<256x128xbf16>
    %cst = arith.constant dense<0.000000e+00> : vector<176x128xf32>
    %2 = tpu.matmul %0, %1, %cst {dimension_numbers = #tpu.dot_dimension_numbers<[1], [0], [0], [1], [0, 0, 1, 1], [], []>} : vector<176x256xbf16>, vector<256x128xbf16>, vector<176x128xf32> -> vector<176x128xf32>
    %cst_3 = arith.constant 0.000000e+00 : f32
    %3 = vector.broadcast %cst_3 : f32 to vector<176x128xf32>
    %4 = arith.maximumf %2, %3 : vector<176x128xf32>
    %5 = arith.truncf %4 : vector<176x128xf32> to vector<176x128xbf16>
    %c0_4 = arith.constant 0 : index
    %c0_5 = arith.constant 0 : index
    %6 = vector.load %arg4[%c0_4, %c0_5] : memref<176x128xbf16, #tpu.memory_space<vmem>>, vector<176x128xbf16>
    tpu.vector_store %arg4[%c0_4, %c0_5], %5 {strides = array<i32>} : memref<176x128xbf16, #tpu.memory_space<vmem>>, vector<176x128xbf16>,
    return
  }
  func.func @transform_0(%arg0: i32, %arg1: i32) -> (i32, i32) {
    %c0_i32 = arith.constant 0 : i32
    %c0_i32_0 = arith.constant 0 : i32
    return %arg0, %c0_i32 : i32, i32
  }
  func.func @transform_1(%arg0: i32, %arg1: i32) -> (i32, i32) {
    %c0_i32 = arith.constant 0 : i32
    %c0_i32_0 = arith.constant 0 : i32
    return %c0_i32, %arg1 : i32, i32
  }
  func.func @transform_2(%arg0: i32, %arg1: i32) -> (i32, i32) {
    %c0_i32 = arith.constant 0 : i32
    return %arg0, %arg1 : i32, i32
  }
}

</mosaic_0001>

<llo_original>
// kernel: model_forward.14
$region0: #{model_forward.14}
  #allocation0 [shape = 'u32[]', space=smem, size = 0x4, offset = 0x4, fixed_abs, tag = 'smem constant byte address 0x4 - core index']
  #allocation1 [shape = 'u32[72,128]{1,0:T(1,128)}', space=vmem, size = 0x9000, scoped, tag = 'internal scratch']
  %s0 = inlined_call_operand.vmem [shape: bf16[768,128], index: 0, kind: input, shape index: {}]
  %s1 = inlined_call_operand.vmem [shape: bf16[128,128], index: 1, kind: input, shape index: {}]
  %s2 = inlined_call_operand.vmem [shape: bf16[768,128], index: 2, kind: output, shape index: {}]
  %s3 = sld [smem:[#allocation0]]
  $region41: #{model_forward.14} parent=0
    _
  %s5 = ssub.s32 1, %s3
  %s6 = scalar_select 0, %s5, %s3
  loop: start=0, step=1, limit=5
  $region2: #{model_forward.14} parent=0 // loop_pre_header
    _
  $region3: #{model_forward.14} parent=0 // loop_header
    %s8 = sphi 0, %s12
    %p9 = scmp.ge.s32.totalorder %s8, 5
    %s15 = sphi 0, %s27
    %s16 = sphi 0, %s23
    %s17 = sphi 0, %s15
    %s18 = sphi 0, %s16
    %s19 = sphi 0, %s17
    %s20 = sphi 0, %s18
    %s30 = sphi 0, %s32
    %s33 = sphi 0, %s30
    %s34 = sphi 0, %s33
    %s50 = sphi 0, %s34
    %s56 = sphi 0, %s58
    %s59 = sphi 0, %s56
    %s60 = sphi 0, %s59
    %s76 = sphi 0, %s60
    %s84 = sphi 0, %s86
    %s87 = sphi 0, %s84
    %s88 = sphi 0, %s87
    %s104 = sphi 0, %s88
  $region4: #{model_forward.14} parent=0 // loop_header_branch
    %11 = sbr.rel (%p9) target = $region8
  $region5: #{model_forward.14} parent=0 // loop_body
    %s13 = ssub.s32 %s8, 1
    %s14 = ssub.s32 %s8, 2
    %s21 = sadd.s32 1, %s16
    %p22 = scmp.ge.s32.totalorder %s21, 1
    %s23 = scalar_select %p22, 0, %s21
    %s24 = sadd.s32 1, %s15
    %s25 = scalar_select %p22, %s24, %s15
    %p26 = scmp.ge.s32.totalorder %s25, 3
    %s27 = scalar_select %p26, 0, %s25
    %s28 = ssub.s32 %s15, %s27
    %p29 = scmp.eq.s32.totalorder %s28, 0
    %s31 = sadd.s32 %s30, 1
    %s32 = scalar_select %p29, %s30, %s31
    %p35 = pneg %p29
    %p36 = scmp.eq.s32.totalorder %s8, 2
    %p37 = por %p35, %p36
    %p38 = scmp.ne.s32.totalorder %s30, %s33
    %p39 = scmp.eq.s32.totalorder %s8, 0
    %p40 = por %p38, %p39
    %p41 = scmp.ne.s32.totalorder %s30, %s33
    %p42 = scmp.eq.s32.totalorder %s13, 2
    %p43 = por %p41, %p42
    %p44 = scmp.ne.s32.totalorder %s33, %s34
    %p45 = scmp.eq.s32.totalorder %s13, 0
    %p46 = por %p44, %p45
    %p47 = scmp.ne.s32.totalorder %s33, %s34
    %p48 = scmp.eq.s32.totalorder %s14, 2
    %p49 = por %p47, %p48
    %p51 = scmp.ne.s32.totalorder %s34, %s50
    %p52 = scmp.eq.s32.totalorder %s14, 0
    %p53 = por %p51, %p52
    %s54 = ssub.s32 %s16, %s23
    %p55 = scmp.eq.s32.totalorder %s54, 0
    %s57 = sadd.s32 %s56, 1
    %s58 = scalar_select %p55, %s56, %s57
    %p61 = pneg %p55
    %p62 = scmp.eq.s32.totalorder %s8, 2
    %p63 = por %p61, %p62
    %p64 = scmp.ne.s32.totalorder %s56, %s59
    %p65 = scmp.eq.s32.totalorder %s8, 0
    %p66 = por %p64, %p65
    %p67 = scmp.ne.s32.totalorder %s56, %s59
    %p68 = scmp.eq.s32.totalorder %s13, 2
    %p69 = por %p67, %p68
    %p70 = scmp.ne.s32.totalorder %s59, %s60
    %p71 = scmp.eq.s32.totalorder %s13, 0
    %p72 = por %p70, %p71
    %p73 = scmp.ne.s32.totalorder %s59, %s60
    %p74 = scmp.eq.s32.totalorder %s14, 2
    %p75 = por %p73, %p74
    %p77 = scmp.ne.s32.totalorder %s60, %s76
    %p78 = scmp.eq.s32.totalorder %s14, 0
    %p79 = por %p77, %p78
    %s80 = ssub.s32 %s15, %s27
    %s81 = ssub.s32 %s16, %s23
    %s82 = sor.u32 %s80, %s81
    %p83 = scmp.eq.s32.totalorder %s82, 0
    %s85 = sadd.s32 %s84, 1
    %s86 = scalar_select %p83, %s84, %s85
    %p89 = pneg %p83
    %p90 = scmp.eq.s32.totalorder %s8, 2
    %p91 = por %p89, %p90
    %p92 = scmp.ne.s32.totalorder %s84, %s87
    %p93 = scmp.eq.s32.totalorder %s8, 0
    %p94 = por %p92, %p93
    %p95 = scmp.ne.s32.totalorder %s84, %s87
    %p96 = scmp.eq.s32.totalorder %s13, 2
    %p97 = por %p95, %p96
    %p98 = scmp.ne.s32.totalorder %s87, %s88
    %p99 = scmp.eq.s32.totalorder %s13, 0
    %p100 = por %p98, %p99
    %p101 = scmp.ne.s32.totalorder %s87, %s88
    %p102 = scmp.eq.s32.totalorder %s14, 2
    %p103 = por %p101, %p102
    %p105 = scmp.ne.s32.totalorder %s88, %s104
    %p106 = scmp.eq.s32.totalorder %s14, 0
    %p107 = por %p105, %p106
    %p108 = scmp.le.s32.totalorder 1, %s8
    %p109 = scmp.lt.s32.totalorder %s8, 4
    %p110 = pnand %p108, %p109
    %p111 = pneg %p110
    // Predicated region
    $region9: #{model_forward.14} parent=5 // pred_check
      _
    $region10: #{model_forward.14} parent=5 // pred_check_branch
      %113 = sbr.rel (%p110) target = $region12
    $region11: #{model_forward.14} parent=5 // pred_region
      %s114 = ssub.s32 %s8, 1
      // Predicated region
      $region13: #{model_forward.14} parent=11 // pred_check
        %p115 = pneg %p72
      $region14: #{model_forward.14} parent=11 // pred_check_branch
        %117 = sbr.rel (%p115) target = $region16
      $region15: #{model_forward.14} parent=11 // pred_region
        %p118 = scmp.lt.s32.totalorder %s18, 0
        %s119 = scalar_select %p118, %s18, 0
        %s120 = smul.addr %s119, 4
        %s121 = scalar_lea.vmem %s1, %s120
      $region16: #{model_forward.14} parent=11 // pred_fallthru
        _
    $region12: #{model_forward.14} parent=5 // pred_fallthru
      _
    %p122 = scmp.lt.s32.totalorder %s8, 3
    // Predicated region
    $region17: #{model_forward.14} parent=5 // pred_check
      %p123 = pneg %p122
    $region18: #{model_forward.14} parent=5 // pred_check_branch
      %125 = sbr.rel (%p123) target = $region20
    $region19: #{model_forward.14} parent=5 // pred_region
      // Predicated region
      $region21: #{model_forward.14} parent=19 // pred_check
        %p126 = pneg %p40
      $region22: #{model_forward.14} parent=19 // pred_check_branch
        %128 = sbr.rel (%p126) target = $region24
      $region23: #{model_forward.14} parent=19 // pred_region
        %s129 = smul.u32 32, %s15
        %p130 = scmp.lt.s32.totalorder %s129, 95
        %s131 = scalar_select %p130, %s129, 95
        %s132 = smul.addr %s131, 4
        %s133 = scalar_lea.vmem %s0, %s132
        %s134 = smul.u32 32, %s15
      $region24: #{model_forward.14} parent=19 // pred_fallthru
        _
    $region20: #{model_forward.14} parent=5 // pred_fallthru
      _
    %p135 = scmp.le.s32.totalorder 1, %s8
    %p136 = scmp.lt.s32.totalorder %s8, 4
    %p137 = pnand %p135, %p136
    %p138 = pneg %p137
    // Predicated region
    $region25: #{model_forward.14} parent=5 // pred_check
      _
    $region26: #{model_forward.14} parent=5 // pred_check_branch
      %140 = sbr.rel (%p137) target = $region28
    $region27: #{model_forward.14} parent=5 // pred_region
      %s141 = ssub.s32 %s8, 1
      %s142 = smul.u32 32, %s17
      %p143 = scmp.lt.s32.totalorder %s142, 95
      %s144 = scalar_select %p143, %s142, 95
      %s145 = smul.addr %s144, 4
      %s146 = scalar_lea.vmem %s0, %s145
      %p147 = pneg %p46
      %p148 = pneg %p43
      %p149 = scmp.lt.s32.totalorder %s18, 0
      %s150 = scalar_select %p149, %s18, 0
      %s151 = smul.addr %s150, 4
      %s152 = scalar_lea.vmem %s1, %s151
      %p153 = pneg %p72
      %p154 = pneg %p69
      %p155 = pneg %p100
      %p156 = pneg %p97
      %s157 = smul.u32 32, %s17
      %p158 = scmp.lt.s32.totalorder %s157, 95
      %s159 = scalar_select %p158, %s157, 95
      %p160 = scmp.lt.s32.totalorder %s18, 0
      %s161 = scalar_select %p160, %s18, 0
      %s162 = sadd.s32 %s161, %s159
      %s163 = smul.addr %s162, 4
      %s164 = scalar_lea.vmem %s2, %s163
      %s165 = smul.u32 32, %s17
      %p166 = scmp.lt.s32.totalorder %s165, 95
      %s167 = scalar_select %p166, %s165, 95
      %s168 = smul.addr %s167, 4
      %s169 = scalar_lea.vmem %s0, %s168
      %s170 = smul.u32 32, %s17
      %p171 = scmp.lt.s32.totalorder %s18, 0
      %s172 = scalar_select %p171, %s18, 0
      %s173 = smul.addr %s172, 4
      %s174 = scalar_lea.vmem %s1, %s173
      %s175 = smul.u32 32, %s17
      %p176 = scmp.lt.s32.totalorder %s175, 95
      %s177 = scalar_select %p176, %s175, 95
      %p178 = scmp.lt.s32.totalorder %s18, 0
      %s179 = scalar_select %p178, %s18, 0
      %s180 = sadd.s32 %s179, %s177
      %s181 = smul.addr %s180, 4
      %s182 = scalar_lea.vmem %s2, %s181
      %s183 = smul.u32 32, %s17
      %v184 = vld [vmem:[%s169] sm:$0xf]
      %v185 = vld [vmem:[%s169 + $0x4] sm:$0xf]
      %v186 = vld [vmem:[%s169 + $0x8] sm:$0xf]
      %v187 = vld [vmem:[%s169 + $0xc] sm:$0xf]
      %v188 = vld [vmem:[%s169 + $0x10] sm:$0xf]
      %v189 = vld [vmem:[%s169 + $0x14] sm:$0xf]
      %v190 = vld [vmem:[%s169 + $0x18] sm:$0xf]
      %v191 = vld [vmem:[%s169 + $0x1c] sm:$0xf]
      %v192 = vld [vmem:[%s169 + $0x20] sm:$0xf]
      %v193 = vld [vmem:[%s169 + $0x24] sm:$0xf]
      %v194 = vld [vmem:[%s169 + $0x28] sm:$0xf]
      %v195 = vld [vmem:[%s169 + $0x2c] sm:$0xf]
      %v196 = vld [vmem:[%s169 + $0x30] sm:$0xf]
      %v197 = vld [vmem:[%s169 + $0x34] sm:$0xf]
      %v198 = vld [vmem:[%s169 + $0x38] sm:$0xf]
      %v199 = vld [vmem:[%s169 + $0x3c] sm:$0xf]
      %v200 = vld [vmem:[%s169 + $0x40] sm:$0xf]
      %v201 = vld [vmem:[%s169 + $0x44] sm:$0xf]
      %v202 = vld [vmem:[%s169 + $0x48] sm:$0xf]
      %v203 = vld [vmem:[%s169 + $0x4c] sm:$0xf]
      %v204 = vld [vmem:[%s169 + $0x50] sm:$0xf]
      %v205 = vld [vmem:[%s169 + $0x54] sm:$0xf]
      %v206 = vld [vmem:[%s169 + $0x58] sm:$0xf]
      %v207 = vld [vmem:[%s169 + $0x5c] sm:$0xf]
      %v208 = vld [vmem:[%s169 + $0x60] sm:$0xf]
      %v209 = vld [vmem:[%s169 + $0x64] sm:$0xf]
      %v210 = vld [vmem:[%s169 + $0x68] sm:$0xf]
      %v211 = vld [vmem:[%s169 + $0x6c] sm:$0xf]
      %v212 = vld [vmem:[%s169 + $0x70] sm:$0xf]
      %v213 = vld [vmem:[%s169 + $0x74] sm:$0xf]
      %v214 = vld [vmem:[%s169 + $0x78] sm:$0xf]
      %v215 = vld [vmem:[%s169 + $0x7c] sm:$0xf]
      %v216 = vld [vmem:[%s174] sm:$0xf]
      %v217 = vld [vmem:[%s174 + $0x4] sm:$0xf]
      %v218 = vld [vmem:[%s174 + $0x8] sm:$0xf]
      %v219 = vld [vmem:[%s174 + $0xc] sm:$0xf]
      %v220 = vld [vmem:[%s174 + $0x10] sm:$0xf]
      %v221 = vld [vmem:[%s174 + $0x14] sm:$0xf]
      %v222 = vld [vmem:[%s174 + $0x18] sm:$0xf]
      %v223 = vld [vmem:[%s174 + $0x1c] sm:$0xf]
      %v224 = vld [vmem:[%s174 + $0x20] sm:$0xf]
      %v225 = vld [vmem:[%s174 + $0x24] sm:$0xf]
      %v226 = vld [vmem:[%s174 + $0x28] sm:$0xf]
      %v227 = vld [vmem:[%s174 + $0x2c] sm:$0xf]
      %v228 = vld [vmem:[%s174 + $0x30] sm:$0xf]
      %v229 = vld [vmem:[%s174 + $0x34] sm:$0xf]
      %v230 = vld [vmem:[%s174 + $0x38] sm:$0xf]
      %v231 = vld [vmem:[%s174 + $0x3c] sm:$0xf]
      %v264 = vunpack.c.l.b16 %v184
      %v265 = vunpack.c.l.b16 %v185
      %v266 = vunpack.c.l.b16 %v186
      %v267 = vunpack.c.l.b16 %v187
      %v268 = vunpack.c.l.b16 %v188
      %v269 = vunpack.c.l.b16 %v189
      %v270 = vunpack.c.l.b16 %v190
      %v271 = vunpack.c.l.b16 %v191
      %v272 = vunpack.c.l.b16 %v192
      %v273 = vunpack.c.l.b16 %v193
      %v274 = vunpack.c.l.b16 %v194
      %v275 = vunpack.c.l.b16 %v195
      %v276 = vunpack.c.l.b16 %v196
      %v277 = vunpack.c.l.b16 %v197
      %v278 = vunpack.c.l.b16 %v198
      %v279 = vunpack.c.l.b16 %v199
      %v280 = vunpack.c.l.b16 %v200
      %v281 = vunpack.c.l.b16 %v201
      %v282 = vunpack.c.l.b16 %v202
      %v283 = vunpack.c.l.b16 %v203
      %v284 = vunpack.c.l.b16 %v204
      %v285 = vunpack.c.l.b16 %v205
      %v286 = vunpack.c.l.b16 %v206
      %v287 = vunpack.c.l.b16 %v207
      %v288 = vunpack.c.l.b16 %v208
      %v289 = vunpack.c.l.b16 %v209
      %v290 = vunpack.c.l.b16 %v210
      %v291 = vunpack.c.l.b16 %v211
      %v292 = vunpack.c.l.b16 %v212
      %v293 = vunpack.c.l.b16 %v213
      %v294 = vunpack.c.l.b16 %v214
      %v295 = vunpack.c.l.b16 %v215
      %v296 = vpack.c.b16 %v265, %v264
      %v297 = vpack.c.b16 %v267, %v266
      %v298 = vpack.c.b16 %v269, %v268
      %v299 = vpack.c.b16 %v271, %v270
      %v300 = vpack.c.b16 %v273, %v272
      %v301 = vpack.c.b16 %v275, %v274
      %v302 = vpack.c.b16 %v277, %v276
      %v303 = vpack.c.b16 %v279, %v278
      %v304 = vpack.c.b16 %v281, %v280
      %v305 = vpack.c.b16 %v283, %v282
      %v306 = vpack.c.b16 %v285, %v284
      %v307 = vpack.c.b16 %v287, %v286
      %v308 = vpack.c.b16 %v289, %v288
      %v309 = vpack.c.b16 %v291, %v290
      %v310 = vpack.c.b16 %v293, %v292
      %v311 = vpack.c.b16 %v295, %v294
      %v344 = vunpack.c.l.b16 %v216
      %v345 = vunpack.c.l.b16 %v217
      %v346 = vunpack.c.l.b16 %v218
      %v347 = vunpack.c.l.b16 %v219
      %v348 = vunpack.c.l.b16 %v220
      %v349 = vunpack.c.l.b16 %v221
      %v350 = vunpack.c.l.b16 %v222
      %v351 = vunpack.c.l.b16 %v223
      %v352 = vunpack.c.l.b16 %v224
      %v353 = vunpack.c.l.b16 %v225
      %v354 = vunpack.c.l.b16 %v226
      %v355 = vunpack.c.l.b16 %v227
      %v356 = vunpack.c.l.b16 %v228
      %v357 = vunpack.c.l.b16 %v229
      %v358 = vunpack.c.l.b16 %v230
      %v359 = vunpack.c.l.b16 %v231
      %v360 = vpack.c.b16 %v345, %v344
      %v361 = vpack.c.b16 %v347, %v346
      %v362 = vpack.c.b16 %v349, %v348
      %v363 = vpack.c.b16 %v351, %v350
      %v364 = vpack.c.b16 %v353, %v352
      %v365 = vpack.c.b16 %v355, %v354
      %v366 = vpack.c.b16 %v357, %v356
      %v367 = vpack.c.b16 %v359, %v358
      %376 = vmatpush.bf16.msra.mxu0 %v367
      %377 = vmatpush.bf16.msra.mxu0 %v366
      %378 = vmatpush.bf16.msra.mxu0 %v365
      %379 = vmatpush.bf16.msra.mxu0 %v364
      %380 = vmatpush.bf16.msra.mxu0 %v363
      %381 = vmatpush.bf16.msra.mxu0 %v362
      %382 = vmatpush.bf16.msra.mxu0 %v361
      %383 = vmatpush.bf16.msra.mxu0 %v360
      %384 = vmatmul.bf16.gmra.mxu0 %v296
      %v385 = vpop.f32.mrf.mxu0
      %v386 = vadd.f32 0.0, %v385
      %v387 = vpop.f32.mrf.mxu0
      %v388 = vadd.f32 0.0, %v387
      %389 = vmatmul.bf16.gmra.mxu0 %v297
      %v390 = vpop.f32.mrf.mxu0
      %v391 = vadd.f32 0.0, %v390
      %v392 = vpop.f32.mrf.mxu0
      %v393 = vadd.f32 0.0, %v392
      %394 = vmatmul.bf16.gmra.mxu0 %v298
      %v395 = vpop.f32.mrf.mxu0
      %v396 = vadd.f32 0.0, %v395
      %v397 = vpop.f32.mrf.mxu0
      %v398 = vadd.f32 0.0, %v397
      %399 = vmatmul.bf16.gmra.mxu0 %v299
      %v400 = vpop.f32.mrf.mxu0
      %v401 = vadd.f32 0.0, %v400
      %v402 = vpop.f32.mrf.mxu0
      %v403 = vadd.f32 0.0, %v402
      %404 = vmatmul.bf16.gmra.mxu0 %v300
      %v405 = vpop.f32.mrf.mxu0
      %v406 = vadd.f32 0.0, %v405
      %v407 = vpop.f32.mrf.mxu0
      %v408 = vadd.f32 0.0, %v407
      %409 = vmatmul.bf16.gmra.mxu0 %v301
      %v410 = vpop.f32.mrf.mxu0
      %v411 = vadd.f32 0.0, %v410
      %v412 = vpop.f32.mrf.mxu0
      %v413 = vadd.f32 0.0, %v412
      %414 = vmatmul.bf16.gmra.mxu0 %v302
      %v415 = vpop.f32.mrf.mxu0
      %v416 = vadd.f32 0.0, %v415
      %v417 = vpop.f32.mrf.mxu0
      %v418 = vadd.f32 0.0, %v417
      %419 = vmatmul.bf16.gmra.mxu0 %v303
      %v420 = vpop.f32.mrf.mxu0
      %v421 = vadd.f32 0.0, %v420
      %v422 = vpop.f32.mrf.mxu0
      %v423 = vadd.f32 0.0, %v422
      %424 = vmatmul.bf16.gmra.mxu0 %v304
      %v425 = vpop.f32.mrf.mxu0
      %v426 = vadd.f32 0.0, %v425
      %v427 = vpop.f32.mrf.mxu0
      %v428 = vadd.f32 0.0, %v427
      %429 = vmatmul.bf16.gmra.mxu0 %v305
      %v430 = vpop.f32.mrf.mxu0
      %v431 = vadd.f32 0.0, %v430
      %v432 = vpop.f32.mrf.mxu0
      %v433 = vadd.f32 0.0, %v432
      %434 = vmatmul.bf16.gmra.mxu0 %v306
      %v435 = vpop.f32.mrf.mxu0
      %v436 = vadd.f32 0.0, %v435
      %v437 = vpop.f32.mrf.mxu0
      %v438 = vadd.f32 0.0, %v437
      %439 = vmatmul.bf16.gmra.mxu0 %v307
      %v440 = vpop.f32.mrf.mxu0
      %v441 = vadd.f32 0.0, %v440
      %v442 = vpop.f32.mrf.mxu0
      %v443 = vadd.f32 0.0, %v442
      %444 = vmatmul.bf16.gmra.mxu0 %v308
      %v445 = vpop.f32.mrf.mxu0
      %v446 = vadd.f32 0.0, %v445
      %v447 = vpop.f32.mrf.mxu0
      %v448 = vadd.f32 0.0, %v447
      %449 = vmatmul.bf16.gmra.mxu0 %v309
      %v450 = vpop.f32.mrf.mxu0
      %v451 = vadd.f32 0.0, %v450
      %v452 = vpop.f32.mrf.mxu0
      %v453 = vadd.f32 0.0, %v452
      %454 = vmatmul.bf16.gmra.mxu0 %v310
      %v455 = vpop.f32.mrf.mxu0
      %v456 = vadd.f32 0.0, %v455
      %v457 = vpop.f32.mrf.mxu0
      %v458 = vadd.f32 0.0, %v457
      %459 = vmatmul.bf16.gmra.mxu0 %v311
      %v460 = vpop.f32.mrf.mxu0
      %v461 = vadd.f32 0.0, %v460
      %v462 = vpop.f32.mrf.mxu0
      %v463 = vadd.f32 0.0, %v462
      %464 = vdwg.mxu0
      %v465 = vmax.f32 %v386, 0.0
      %v466 = vmax.f32 %v388, 0.0
      %v467 = vmax.f32 %v391, 0.0
      %v468 = vmax.f32 %v393, 0.0
      %v469 = vmax.f32 %v396, 0.0
      %v470 = vmax.f32 %v398, 0.0
      %v471 = vmax.f32 %v401, 0.0
      %v472 = vmax.f32 %v403, 0.0
      %v473 = vmax.f32 %v406, 0.0
      %v474 = vmax.f32 %v408, 0.0
      %v475 = vmax.f32 %v411, 0.0
      %v476 = vmax.f32 %v413, 0.0
      %v477 = vmax.f32 %v416, 0.0
      %v478 = vmax.f32 %v418, 0.0
      %v479 = vmax.f32 %v421, 0.0
      %v480 = vmax.f32 %v423, 0.0
      %v481 = vmax.f32 %v426, 0.0
      %v482 = vmax.f32 %v428, 0.0
      %v483 = vmax.f32 %v431, 0.0
      %v484 = vmax.f32 %v433, 0.0
      %v485 = vmax.f32 %v436, 0.0
      %v486 = vmax.f32 %v438, 0.0
      %v487 = vmax.f32 %v441, 0.0
      %v488 = vmax.f32 %v443, 0.0
      %v489 = vmax.f32 %v446, 0.0
      %v490 = vmax.f32 %v448, 0.0
      %v491 = vmax.f32 %v451, 0.0
      %v492 = vmax.f32 %v453, 0.0
      %v493 = vmax.f32 %v456, 0.0
      %v494 = vmax.f32 %v458, 0.0
      %v495 = vmax.f32 %v461, 0.0
      %v496 = vmax.f32 %v463, 0.0
      %v497 = vpack.c.bf16 %v465, %v465
      %v498 = vpack.c.bf16 %v466, %v466
      %v499 = vpack.c.bf16 %v467, %v467
      %v500 = vpack.c.bf16 %v468, %v468
      %v501 = vpack.c.bf16 %v469, %v469
      %v502 = vpack.c.bf16 %v470, %v470
      %v503 = vpack.c.bf16 %v471, %v471
      %v504 = vpack.c.bf16 %v472, %v472
      %v505 = vpack.c.bf16 %v473, %v473
      %v506 = vpack.c.bf16 %v474, %v474
      %v507 = vpack.c.bf16 %v475, %v475
      %v508 = vpack.c.bf16 %v476, %v476
      %v509 = vpack.c.bf16 %v477, %v477
      %v510 = vpack.c.bf16 %v478, %v478
      %v511 = vpack.c.bf16 %v479, %v479
      %v512 = vpack.c.bf16 %v480, %v480
      %v513 = vpack.c.bf16 %v481, %v481
      %v514 = vpack.c.bf16 %v482, %v482
      %v515 = vpack.c.bf16 %v483, %v483
      %v516 = vpack.c.bf16 %v484, %v484
      %v517 = vpack.c.bf16 %v485, %v485
      %v518 = vpack.c.bf16 %v486, %v486
      %v519 = vpack.c.bf16 %v487, %v487
      %v520 = vpack.c.bf16 %v488, %v488
      %v521 = vpack.c.bf16 %v489, %v489
      %v522 = vpack.c.bf16 %v490, %v490
      %v523 = vpack.c.bf16 %v491, %v491
      %v524 = vpack.c.bf16 %v492, %v492
      %v525 = vpack.c.bf16 %v493, %v493
      %v526 = vpack.c.bf16 %v494, %v494
      %v527 = vpack.c.bf16 %v495, %v495
      %v528 = vpack.c.bf16 %v496, %v496
      %529 = vst [vmem:[%s182] sm:$0xf] %v497
      %530 = vst [vmem:[%s182 + $0x4] sm:$0xf] %v498
      %531 = vst [vmem:[%s182 + $0x8] sm:$0xf] %v499
      %532 = vst [vmem:[%s182 + $0xc] sm:$0xf] %v500
      %533 = vst [vmem:[%s182 + $0x10] sm:$0xf] %v501
      %534 = vst [vmem:[%s182 + $0x14] sm:$0xf] %v502
      %535 = vst [vmem:[%s182 + $0x18] sm:$0xf] %v503
      %536 = vst [vmem:[%s182 + $0x1c] sm:$0xf] %v504
      %537 = vst [vmem:[%s182 + $0x20] sm:$0xf] %v505
      %538 = vst [vmem:[%s182 + $0x24] sm:$0xf] %v506
      %539 = vst [vmem:[%s182 + $0x28] sm:$0xf] %v507
      %540 = vst [vmem:[%s182 + $0x2c] sm:$0xf] %v508
      %541 = vst [vmem:[%s182 + $0x30] sm:$0xf] %v509
      %542 = vst [vmem:[%s182 + $0x34] sm:$0xf] %v510
      %543 = vst [vmem:[%s182 + $0x38] sm:$0xf] %v511
      %544 = vst [vmem:[%s182 + $0x3c] sm:$0xf] %v512
      %545 = vst [vmem:[%s182 + $0x40] sm:$0xf] %v513
      %546 = vst [vmem:[%s182 + $0x44] sm:$0xf] %v514
      %547 = vst [vmem:[%s182 + $0x48] sm:$0xf] %v515
      %548 = vst [vmem:[%s182 + $0x4c] sm:$0xf] %v516
      %549 = vst [vmem:[%s182 + $0x50] sm:$0xf] %v517
      %550 = vst [vmem:[%s182 + $0x54] sm:$0xf] %v518
      %551 = vst [vmem:[%s182 + $0x58] sm:$0xf] %v519
      %552 = vst [vmem:[%s182 + $0x5c] sm:$0xf] %v520
      %553 = vst [vmem:[%s182 + $0x60] sm:$0xf] %v521
      %554 = vst [vmem:[%s182 + $0x64] sm:$0xf] %v522
      %555 = vst [vmem:[%s182 + $0x68] sm:$0xf] %v523
      %556 = vst [vmem:[%s182 + $0x6c] sm:$0xf] %v524
      %557 = vst [vmem:[%s182 + $0x70] sm:$0xf] %v525
      %558 = vst [vmem:[%s182 + $0x74] sm:$0xf] %v526
      %559 = vst [vmem:[%s182 + $0x78] sm:$0xf] %v527
      %560 = vst [vmem:[%s182 + $0x7c] sm:$0xf] %v528
      %s561 = smul.u32 32, %s17
      %p562 = scmp.lt.s32.totalorder %s561, 95
      %s563 = scalar_select %p562, %s561, 95
      %p564 = scmp.lt.s32.totalorder %s18, 0
      %s565 = scalar_select %p564, %s18, 0
      %s566 = sadd.s32 %s565, %s563
      %s567 = smul.addr %s566, 4
      %s568 = scalar_lea.vmem %s2, %s567
      // Predicated region
      $region29: #{model_forward.14} parent=27 // pred_check
        %p569 = pneg %p97
      $region30: #{model_forward.14} parent=27 // pred_check_branch
        %571 = sbr.rel (%p569) target = $region32
      $region31: #{model_forward.14} parent=27 // pred_region
        %s572 = smul.u32 32, %s17
      $region32: #{model_forward.14} parent=27 // pred_fallthru
        _
    $region28: #{model_forward.14} parent=5 // pred_fallthru
      _
    %p573 = scmp.le.s32.totalorder 2, %s8
    // Predicated region
    $region33: #{model_forward.14} parent=5 // pred_check
      %p574 = pneg %p573
    $region34: #{model_forward.14} parent=5 // pred_check_branch
      %576 = sbr.rel (%p574) target = $region36
    $region35: #{model_forward.14} parent=5 // pred_region
      %s577 = ssub.s32 %s8, 2
      // Predicated region
      $region37: #{model_forward.14} parent=35 // pred_check
        %p578 = pneg %p103
      $region38: #{model_forward.14} parent=35 // pred_check_branch
        %580 = sbr.rel (%p578) target = $region40
      $region39: #{model_forward.14} parent=35 // pred_region
        %s581 = smul.u32 32, %s19
        %p582 = scmp.lt.s32.totalorder %s581, 95
        %s583 = scalar_select %p582, %s581, 95
        %p584 = scmp.lt.s32.totalorder %s20, 0
        %s585 = scalar_select %p584, %s20, 0
        %s586 = sadd.s32 %s585, %s583
        %s587 = smul.addr %s586, 4
        %s588 = scalar_lea.vmem %s2, %s587
      $region40: #{model_forward.14} parent=35 // pred_fallthru
        _
    $region36: #{model_forward.14} parent=5 // pred_fallthru
      _
  $region6: #{model_forward.14} parent=0 // loop_footer
    %s12 = sadd.s32 1, %s8
  $region7: #{model_forward.14} parent=0 // loop_footer_branch
    %7 = sbr.rel target = $region3
  $region8: #{model_forward.14} parent=0 // loop_exit
    _

// kernel: model_forward.15
$region0: #{model_forward.15}
  #allocation0 [shape = 'u32[]', space=smem, size = 0x4, offset = 0x4, fixed_abs, tag = 'smem constant byte address 0x4 - core index']
  #allocation1 [shape = 'u32[72,128]{1,0:T(1,128)}', space=vmem, size = 0x9000, scoped, tag = 'internal scratch']
  %s0 = inlined_call_operand.vmem [shape: bf16[768,640], index: 0, kind: input, shape index: {}]
  %s1 = inlined_call_operand.vmem [shape: bf16[640,128], index: 1, kind: input, shape index: {}]
  %s2 = inlined_call_operand.vmem [shape: bf16[768,128], index: 2, kind: output, shape index: {}]
  %s3 = sld [smem:[#allocation0]]
  $region41: #{model_forward.15} parent=0
    _
  %s5 = ssub.s32 1, %s3
  %s6 = scalar_select 0, %s5, %s3
  loop: start=0, step=1, limit=5
  $region2: #{model_forward.15} parent=0 // loop_pre_header
    _
  $region3: #{model_forward.15} parent=0 // loop_header
    %s8 = sphi 0, %s12
    %p9 = scmp.ge.s32.totalorder %s8, 5
    %s15 = sphi 0, %s27
    %s16 = sphi 0, %s23
    %s17 = sphi 0, %s15
    %s18 = sphi 0, %s16
    %s19 = sphi 0, %s17
    %s20 = sphi 0, %s18
    %s30 = sphi 0, %s32
    %s33 = sphi 0, %s30
    %s34 = sphi 0, %s33
    %s50 = sphi 0, %s34
    %s56 = sphi 0, %s58
    %s59 = sphi 0, %s56
    %s60 = sphi 0, %s59
    %s76 = sphi 0, %s60
    %s84 = sphi 0, %s86
    %s87 = sphi 0, %s84
    %s88 = sphi 0, %s87
    %s104 = sphi 0, %s88
  $region4: #{model_forward.15} parent=0 // loop_header_branch
    %11 = sbr.rel (%p9) target = $region8
  $region5: #{model_forward.15} parent=0 // loop_body
    %s13 = ssub.s32 %s8, 1
    %s14 = ssub.s32 %s8, 2
    %s21 = sadd.s32 1, %s16
    %p22 = scmp.ge.s32.totalorder %s21, 1
    %s23 = scalar_select %p22, 0, %s21
    %s24 = sadd.s32 1, %s15
    %s25 = scalar_select %p22, %s24, %s15
    %p26 = scmp.ge.s32.totalorder %s25, 3
    %s27 = scalar_select %p26, 0, %s25
    %s28 = ssub.s32 %s15, %s27
    %p29 = scmp.eq.s32.totalorder %s28, 0
    %s31 = sadd.s32 %s30, 1
    %s32 = scalar_select %p29, %s30, %s31
    %p35 = pneg %p29
    %p36 = scmp.eq.s32.totalorder %s8, 2
    %p37 = por %p35, %p36
    %p38 = scmp.ne.s32.totalorder %s30, %s33
    %p39 = scmp.eq.s32.totalorder %s8, 0
    %p40 = por %p38, %p39
    %p41 = scmp.ne.s32.totalorder %s30, %s33
    %p42 = scmp.eq.s32.totalorder %s13, 2
    %p43 = por %p41, %p42
    %p44 = scmp.ne.s32.totalorder %s33, %s34
    %p45 = scmp.eq.s32.totalorder %s13, 0
    %p46 = por %p44, %p45
    %p47 = scmp.ne.s32.totalorder %s33, %s34
    %p48 = scmp.eq.s32.totalorder %s14, 2
    %p49 = por %p47, %p48
    %p51 = scmp.ne.s32.totalorder %s34, %s50
    %p52 = scmp.eq.s32.totalorder %s14, 0
    %p53 = por %p51, %p52
    %s54 = ssub.s32 %s16, %s23
    %p55 = scmp.eq.s32.totalorder %s54, 0
    %s57 = sadd.s32 %s56, 1
    %s58 = scalar_select %p55, %s56, %s57
    %p61 = pneg %p55
    %p62 = scmp.eq.s32.totalorder %s8, 2
    %p63 = por %p61, %p62
    %p64 = scmp.ne.s32.totalorder %s56, %s59
    %p65 = scmp.eq.s32.totalorder %s8, 0
    %p66 = por %p64, %p65
    %p67 = scmp.ne.s32.totalorder %s56, %s59
    %p68 = scmp.eq.s32.totalorder %s13, 2
    %p69 = por %p67, %p68
    %p70 = scmp.ne.s32.totalorder %s59, %s60
    %p71 = scmp.eq.s32.totalorder %s13, 0
    %p72 = por %p70, %p71
    %p73 = scmp.ne.s32.totalorder %s59, %s60
    %p74 = scmp.eq.s32.totalorder %s14, 2
    %p75 = por %p73, %p74
    %p77 = scmp.ne.s32.totalorder %s60, %s76
    %p78 = scmp.eq.s32.totalorder %s14, 0
    %p79 = por %p77, %p78
    %s80 = ssub.s32 %s15, %s27
    %s81 = ssub.s32 %s16, %s23
    %s82 = sor.u32 %s80, %s81
    %p83 = scmp.eq.s32.totalorder %s82, 0
    %s85 = sadd.s32 %s84, 1
    %s86 = scalar_select %p83, %s84, %s85
    %p89 = pneg %p83
    %p90 = scmp.eq.s32.totalorder %s8, 2
    %p91 = por %p89, %p90
    %p92 = scmp.ne.s32.totalorder %s84, %s87
    %p93 = scmp.eq.s32.totalorder %s8, 0
    %p94 = por %p92, %p93
    %p95 = scmp.ne.s32.totalorder %s84, %s87
    %p96 = scmp.eq.s32.totalorder %s13, 2
    %p97 = por %p95, %p96
    %p98 = scmp.ne.s32.totalorder %s87, %s88
    %p99 = scmp.eq.s32.totalorder %s13, 0
    %p100 = por %p98, %p99
    %p101 = scmp.ne.s32.totalorder %s87, %s88
    %p102 = scmp.eq.s32.totalorder %s14, 2
    %p103 = por %p101, %p102
    %p105 = scmp.ne.s32.totalorder %s88, %s104
    %p106 = scmp.eq.s32.totalorder %s14, 0
    %p107 = por %p105, %p106
    %p108 = scmp.le.s32.totalorder 1, %s8
    %p109 = scmp.lt.s32.totalorder %s8, 4
    %p110 = pnand %p108, %p109
    %p111 = pneg %p110
    // Predicated region
    $region9: #{model_forward.15} parent=5 // pred_check
      _
    $region10: #{model_forward.15} parent=5 // pred_check_branch
      %113 = sbr.rel (%p110) target = $region12
    $region11: #{model_forward.15} parent=5 // pred_region
      %s114 = ssub.s32 %s8, 1
      // Predicated region
      $region13: #{model_forward.15} parent=11 // pred_check
        %p115 = pneg %p72
      $region14: #{model_forward.15} parent=11 // pred_check_branch
        %117 = sbr.rel (%p115) target = $region16
      $region15: #{model_forward.15} parent=11 // pred_region
        %p118 = scmp.lt.s32.totalorder %s18, 0
        %s119 = scalar_select %p118, %s18, 0
        %s120 = smul.addr %s119, 4
        %s121 = scalar_lea.vmem %s1, %s120
      $region16: #{model_forward.15} parent=11 // pred_fallthru
        _
    $region12: #{model_forward.15} parent=5 // pred_fallthru
      _
    %p122 = scmp.lt.s32.totalorder %s8, 3
    // Predicated region
    $region17: #{model_forward.15} parent=5 // pred_check
      %p123 = pneg %p122
    $region18: #{model_forward.15} parent=5 // pred_check_branch
      %125 = sbr.rel (%p123) target = $region20
    $region19: #{model_forward.15} parent=5 // pred_region
      // Predicated region
      $region21: #{model_forward.15} parent=19 // pred_check
        %p126 = pneg %p40
      $region22: #{model_forward.15} parent=19 // pred_check_branch
        %128 = sbr.rel (%p126) target = $region24
      $region23: #{model_forward.15} parent=19 // pred_region
        %s129 = smul.u32 32, %s15
        %p130 = scmp.lt.s32.totalorder %s129, 95
        %s131 = scalar_select %p130, %s129, 95
        %s132 = smul.addr %s131, 5
        %s133 = smul.addr %s132, 4
        %s134 = scalar_lea.vmem %s0, %s133
        %s135 = smul.u32 32, %s15
      $region24: #{model_forward.15} parent=19 // pred_fallthru
        _
    $region20: #{model_forward.15} parent=5 // pred_fallthru
      _
    %p136 = scmp.le.s32.totalorder 1, %s8
    %p137 = scmp.lt.s32.totalorder %s8, 4
    %p138 = pnand %p136, %p137
    %p139 = pneg %p138
    // Predicated region
    $region25: #{model_forward.15} parent=5 // pred_check
      _
    $region26: #{model_forward.15} parent=5 // pred_check_branch
      %141 = sbr.rel (%p138) target = $region28
    $region27: #{model_forward.15} parent=5 // pred_region
      %s142 = ssub.s32 %s8, 1
      %s143 = smul.u32 32, %s17
      %p144 = scmp.lt.s32.totalorder %s143, 95
      %s145 = scalar_select %p144, %s143, 95
      %s146 = smul.addr %s145, 5
      %s147 = smul.addr %s146, 4
      %s148 = scalar_lea.vmem %s0, %s147
      %p149 = pneg %p46
      %p150 = pneg %p43
      %p151 = scmp.lt.s32.totalorder %s18, 0
      %s152 = scalar_select %p151, %s18, 0
      %s153 = smul.addr %s152, 4
      %s154 = scalar_lea.vmem %s1, %s153
      %p155 = pneg %p72
      %p156 = pneg %p69
      %p157 = pneg %p100
      %p158 = pneg %p97
      %s159 = smul.u32 32, %s17
      %p160 = scmp.lt.s32.totalorder %s159, 95
      %s161 = scalar_select %p160, %s159, 95
      %p162 = scmp.lt.s32.totalorder %s18, 0
      %s163 = scalar_select %p162, %s18, 0
      %s164 = sadd.s32 %s163, %s161
      %s165 = smul.addr %s164, 4
      %s166 = scalar_lea.vmem %s2, %s165
      %s167 = smul.u32 32, %s17
      %p168 = scmp.lt.s32.totalorder %s167, 95
      %s169 = scalar_select %p168, %s167, 95
      %s170 = smul.addr %s169, 5
      %s171 = smul.addr %s170, 4
      %s172 = scalar_lea.vmem %s0, %s171
      %s173 = smul.u32 32, %s17
      %p174 = scmp.lt.s32.totalorder %s18, 0
      %s175 = scalar_select %p174, %s18, 0
      %s176 = smul.addr %s175, 4
      %s177 = scalar_lea.vmem %s1, %s176
      %s178 = smul.u32 32, %s17
      %p179 = scmp.lt.s32.totalorder %s178, 95
      %s180 = scalar_select %p179, %s178, 95
      %p181 = scmp.lt.s32.totalorder %s18, 0
      %s182 = scalar_select %p181, %s18, 0
      %s183 = sadd.s32 %s182, %s180
      %s184 = smul.addr %s183, 4
      %s185 = scalar_lea.vmem %s2, %s184
      %s186 = smul.u32 32, %s17
      %v187 = vld [vmem:[%s172] sm:$0xff]
      %v188 = vld [vmem:[%s172 + $0x8] sm:$0xff]
      %v189 = vld [vmem:[%s172 + $0x10] sm:$0xf]
      %v190 = vld [vmem:[%s172 + $0x14] sm:$0xff]
      %v191 = vld [vmem:[%s172 + $0x1c] sm:$0xff]
      %v192 = vld [vmem:[%s172 + $0x24] sm:$0xf]
      %v193 = vld [vmem:[%s172 + $0x28] sm:$0xff]
      %v194 = vld [vmem:[%s172 + $0x30] sm:$0xff]
      %v195 = vld [vmem:[%s172 + $0x38] sm:$0xf]
      %v196 = vld [vmem:[%s172 + $0x3c] sm:$0xff]
      %v197 = vld [vmem:[%s172 + $0x44] sm:$0xff]
      %v198 = vld [vmem:[%s172 + $0x4c] sm:$0xf]
      %v199 = vld [vmem:[%s172 + $0x50] sm:$0xff]
      %v200 = vld [vmem:[%s172 + $0x58] sm:$0xff]
      %v201 = vld [vmem:[%s172 + $0x60] sm:$0xf]
      %v202 = vld [vmem:[%s172 + $0x64] sm:$0xff]
      %v203 = vld [vmem:[%s172 + $0x6c] sm:$0xff]
      %v204 = vld [vmem:[%s172 + $0x74] sm:$0xf]
      %v205 = vld [vmem:[%s172 + $0x78] sm:$0xff]
      %v206 = vld [vmem:[%s172 + $0x80] sm:$0xff]
      %v207 = vld [vmem:[%s172 + $0x88] sm:$0xf]
      %v208 = vld [vmem:[%s172 + $0x8c] sm:$0xff]
      %v209 = vld [vmem:[%s172 + $0x94] sm:$0xff]
      %v210 = vld [vmem:[%s172 + $0x9c] sm:$0xf]
      %v211 = vld [vmem:[%s172 + $0xa0] sm:$0xff]
      %v212 = vld [vmem:[%s172 + $0xa8] sm:$0xff]
      %v213 = vld [vmem:[%s172 + $0xb0] sm:$0xf]
      %v214 = vld [vmem:[%s172 + $0xb4] sm:$0xff]
      %v215 = vld [vmem:[%s172 + $0xbc] sm:$0xff]
      %v216 = vld [vmem:[%s172 + $0xc4] sm:$0xf]
      %v217 = vld [vmem:[%s172 + $0xc8] sm:$0xff]
      %v218 = vld [vmem:[%s172 + $0xd0] sm:$0xff]
      %v219 = vld [vmem:[%s172 + $0xd8] sm:$0xf]
      %v220 = vld [vmem:[%s172 + $0xdc] sm:$0xff]
      %v221 = vld [vmem:[%s172 + $0xe4] sm:$0xff]
      %v222 = vld [vmem:[%s172 + $0xec] sm:$0xf]
      %v223 = vld [vmem:[%s172 + $0xf0] sm:$0xff]
      %v224 = vld [vmem:[%s172 + $0xf8] sm:$0xff]
      %v225 = vld [vmem:[%s172 + $0x100] sm:$0xf]
      %v226 = vld [vmem:[%s172 + $0x104] sm:$0xff]
      %v227 = vld [vmem:[%s172 + $0x10c] sm:$0xff]
      %v228 = vld [vmem:[%s172 + $0x114] sm:$0xf]
      %v229 = vld [vmem:[%s172 + $0x118] sm:$0xff]
      %v230 = vld [vmem:[%s172 + $0x120] sm:$0xff]
      %v231 = vld [vmem:[%s172 + $0x128] sm:$0xf]
      %v232 = vld [vmem:[%s172 + $0x12c] sm:$0xff]
      %v233 = vld [vmem:[%s172 + $0x134] sm:$0xff]
      %v234 = vld [vmem:[%s172 + $0x13c] sm:$0xf]
      %v235 = vld [vmem:[%s172 + $0x140] sm:$0xff]
      %v236 = vld [vmem:[%s172 + $0x148] sm:$0xff]
      %v237 = vld [vmem:[%s172 + $0x150] sm:$0xf]
      %v238 = vld [vmem:[%s172 + $0x154] sm:$0xff]
      %v239 = vld [vmem:[%s172 + $0x15c] sm:$0xff]
      %v240 = vld [vmem:[%s172 + $0x164] sm:$0xf]
      %v241 = vld [vmem:[%s172 + $0x168] sm:$0xff]
      %v242 = vld [vmem:[%s172 + $0x170] sm:$0xff]
      %v243 = vld [vmem:[%s172 + $0x178] sm:$0xf]
      %v244 = vld [vmem:[%s172 + $0x17c] sm:$0xff]
      %v245 = vld [vmem:[%s172 + $0x184] sm:$0xff]
      %v246 = vld [vmem:[%s172 + $0x18c] sm:$0xf]
      %v247 = vld [vmem:[%s172 + $0x190] sm:$0xff]
      %v248 = vld [vmem:[%s172 + $0x198] sm:$0xff]
      %v249 = vld [vmem:[%s172 + $0x1a0] sm:$0xf]
      %v250 = vld [vmem:[%s172 + $0x1a4] sm:$0xff]
      %v251 = vld [vmem:[%s172 + $0x1ac] sm:$0xff]
      %v252 = vld [vmem:[%s172 + $0x1b4] sm:$0xf]
      %v253 = vld [vmem:[%s172 + $0x1b8] sm:$0xff]
      %v254 = vld [vmem:[%s172 + $0x1c0] sm:$0xff]
      %v255 = vld [vmem:[%s172 + $0x1c8] sm:$0xf]
      %v256 = vld [vmem:[%s172 + $0x1cc] sm:$0xff]
      %v257 = vld [vmem:[%s172 + $0x1d4] sm:$0xff]
      %v258 = vld [vmem:[%s172 + $0x1dc] sm:$0xf]
      %v259 = vld [vmem:[%s172 + $0x1e0] sm:$0xff]
      %v260 = vld [vmem:[%s172 + $0x1e8] sm:$0xff]
      %v261 = vld [vmem:[%s172 + $0x1f0] sm:$0xf]
      %v262 = vld [vmem:[%s172 + $0x1f4] sm:$0xff]
      %v263 = vld [vmem:[%s172 + $0x1fc] sm:$0xff]
      %v264 = vld [vmem:[%s172 + $0x204] sm:$0xf]
      %v265 = vld [vmem:[%s172 + $0x208] sm:$0xff]
      %v266 = vld [vmem:[%s172 + $0x210] sm:$0xff]
      %v267 = vld [vmem:[%s172 + $0x218] sm:$0xf]
      %v268 = vld [vmem:[%s172 + $0x21c] sm:$0xff]
      %v269 = vld [vmem:[%s172 + $0x224] sm:$0xff]
      %v270 = vld [vmem:[%s172 + $0x22c] sm:$0xf]
      %v271 = vld [vmem:[%s172 + $0x230] sm:$0xff]
      %v272 = vld [vmem:[%s172 + $0x238] sm:$0xff]
      %v273 = vld [vmem:[%s172 + $0x240] sm:$0xf]
      %v274 = vld [vmem:[%s172 + $0x244] sm:$0xff]
      %v275 = vld [vmem:[%s172 + $0x24c] sm:$0xff]
      %v276 = vld [vmem:[%s172 + $0x254] sm:$0xf]
      %v277 = vld [vmem:[%s172 + $0x258] sm:$0xff]
      %v278 = vld [vmem:[%s172 + $0x260] sm:$0xff]
      %v279 = vld [vmem:[%s172 + $0x268] sm:$0xf]
      %v280 = vld [vmem:[%s172 + $0x26c] sm:$0xff]
      %v281 = vld [vmem:[%s172 + $0x274] sm:$0xff]
      %v282 = vld [vmem:[%s172 + $0x27c] sm:$0xf]
      %v283 = vld [vmem:[%s177] sm:$0xf]
      %v284 = vld [vmem:[%s177 + $0x4] sm:$0xf]
      %v285 = vld [vmem:[%s177 + $0x8] sm:$0xf]
      %v286 = vld [vmem:[%s177 + $0xc] sm:$0xf]
      %v287 = vld [vmem:[%s177 + $0x10] sm:$0xf]
      %v288 = vld [vmem:[%s177 + $0x14] sm:$0xf]
      %v289 = vld [vmem:[%s177 + $0x18] sm:$0xf]
      %v290 = vld [vmem:[%s177 + $0x1c] sm:$0xf]
      %v291 = vld [vmem:[%s177 + $0x20] sm:$0xf]
      %v292 = vld [vmem:[%s177 + $0x24] sm:$0xf]
      %v293 = vld [vmem:[%s177 + $0x28] sm:$0xf]
      %v294 = vld [vmem:[%s177 + $0x2c] sm:$0xf]
      %v295 = vld [vmem:[%s177 + $0x30] sm:$0xf]
      %v296 = vld [vmem:[%s177 + $0x34] sm:$0xf]
      %v297 = vld [vmem:[%s177 + $0x38] sm:$0xf]
      %v298 = vld [vmem:[%s177 + $0x3c] sm:$0xf]
      %v299 = vld [vmem:[%s177 + $0x40] sm:$0xf]
      %v300 = vld [vmem:[%s177 + $0x44] sm:$0xf]
      %v301 = vld [vmem:[%s177 + $0x48] sm:$0xf]
      %v302 = vld [vmem:[%s177 + $0x4c] sm:$0xf]
      %v303 = vld [vmem:[%s177 + $0x50] sm:$0xf]
      %v304 = vld [vmem:[%s177 + $0x54] sm:$0xf]
      %v305 = vld [vmem:[%s177 + $0x58] sm:$0xf]
      %v306 = vld [vmem:[%s177 + $0x5c] sm:$0xf]
      %v307 = vld [vmem:[%s177 + $0x60] sm:$0xf]
      %v308 = vld [vmem:[%s177 + $0x64] sm:$0xf]
      %v309 = vld [vmem:[%s177 + $0x68] sm:$0xf]
      %v310 = vld [vmem:[%s177 + $0x6c] sm:$0xf]
      %v311 = vld [vmem:[%s177 + $0x70] sm:$0xf]
      %v312 = vld [vmem:[%s177 + $0x74] sm:$0xf]
      %v313 = vld [vmem:[%s177 + $0x78] sm:$0xf]
      %v314 = vld [vmem:[%s177 + $0x7c] sm:$0xf]
      %v315 = vld [vmem:[%s177 + $0x80] sm:$0xf]
      %v316 = vld [vmem:[%s177 + $0x84] sm:$0xf]
      %v317 = vld [vmem:[%s177 + $0x88] sm:$0xf]
      %v318 = vld [vmem:[%s177 + $0x8c] sm:$0xf]
      %v319 = vld [vmem:[%s177 + $0x90] sm:$0xf]
      %v320 = vld [vmem:[%s177 + $0x94] sm:$0xf]
      %v321 = vld [vmem:[%s177 + $0x98] sm:$0xf]
      %v322 = vld [vmem:[%s177 + $0x9c] sm:$0xf]
      %v323 = vld [vmem:[%s177 + $0xa0] sm:$0xf]
      %v324 = vld [vmem:[%s177 + $0xa4] sm:$0xf]
      %v325 = vld [vmem:[%s177 + $0xa8] sm:$0xf]
      %v326 = vld [vmem:[%s177 + $0xac] sm:$0xf]
      %v327 = vld [vmem:[%s177 + $0xb0] sm:$0xf]
      %v328 = vld [vmem:[%s177 + $0xb4] sm:$0xf]
      %v329 = vld [vmem:[%s177 + $0xb8] sm:$0xf]
      %v330 = vld [vmem:[%s177 + $0xbc] sm:$0xf]
      %v331 = vld [vmem:[%s177 + $0xc0] sm:$0xf]
      %v332 = vld [vmem:[%s177 + $0xc4] sm:$0xf]
      %v333 = vld [vmem:[%s177 + $0xc8] sm:$0xf]
      %v334 = vld [vmem:[%s177 + $0xcc] sm:$0xf]
      %v335 = vld [vmem:[%s177 + $0xd0] sm:$0xf]
      %v336 = vld [vmem:[%s177 + $0xd4] sm:$0xf]
      %v337 = vld [vmem:[%s177 + $0xd8] sm:$0xf]
      %v338 = vld [vmem:[%s177 + $0xdc] sm:$0xf]
      %v339 = vld [vmem:[%s177 + $0xe0] sm:$0xf]
      %v340 = vld [vmem:[%s177 + $0xe4] sm:$0xf]
      %v341 = vld [vmem:[%s177 + $0xe8] sm:$0xf]
      %v342 = vld [vmem:[%s177 + $0xec] sm:$0xf]
      %v343 = vld [vmem:[%s177 + $0xf0] sm:$0xf]
      %v344 = vld [vmem:[%s177 + $0xf4] sm:$0xf]
      %v345 = vld [vmem:[%s177 + $0xf8] sm:$0xf]
      %v346 = vld [vmem:[%s177 + $0xfc] sm:$0xf]
      %v347 = vld [vmem:[%s177 + $0x100] sm:$0xf]
      %v348 = vld [vmem:[%s177 + $0x104] sm:$0xf]
      %v349 = vld [vmem:[%s177 + $0x108] sm:$0xf]
      %v350 = vld [vmem:[%s177 + $0x10c] sm:$0xf]
      %v351 = vld [vmem:[%s177 + $0x110] sm:$0xf]
      %v352 = vld [vmem:[%s177 + $0x114] sm:$0xf]
      %v353 = vld [vmem:[%s177 + $0x118] sm:$0xf]
      %v354 = vld [vmem:[%s177 + $0x11c] sm:$0xf]
      %v355 = vld [vmem:[%s177 + $0x120] sm:$0xf]
      %v356 = vld [vmem:[%s177 + $0x124] sm:$0xf]
      %v357 = vld [vmem:[%s177 + $0x128] sm:$0xf]
      %v358 = vld [vmem:[%s177 + $0x12c] sm:$0xf]
      %v359 = vld [vmem:[%s177 + $0x130] sm:$0xf]
      %v360 = vld [vmem:[%s177 + $0x134] sm:$0xf]
      %v361 = vld [vmem:[%s177 + $0x138] sm:$0xf]
      %v362 = vld [vmem:[%s177 + $0x13c] sm:$0xf]
      %v459 = vunpack.c.l.b16 %v187
      %v460 = vunpack.c.h.b16 %v187
      %v461 = vunpack.c.l.b16 %v188
      %v462 = vunpack.c.h.b16 %v188
      %v463 = vunpack.c.l.b16 %v189
      %v464 = vunpack.c.l.b16 %v190
      %v465 = vunpack.c.h.b16 %v190
      %v466 = vunpack.c.l.b16 %v191
      %v467 = vunpack.c.h.b16 %v191
      %v468 = vunpack.c.l.b16 %v192
      %v469 = vunpack.c.l.b16 %v193
      %v470 = vunpack.c.h.b16 %v193
      %v471 = vunpack.c.l.b16 %v194
      %v472 = vunpack.c.h.b16 %v194
      %v473 = vunpack.c.l.b16 %v195
      %v474 = vunpack.c.l.b16 %v196
      %v475 = vunpack.c.h.b16 %v196
      %v476 = vunpack.c.l.b16 %v197
      %v477 = vunpack.c.h.b16 %v197
      %v478 = vunpack.c.l.b16 %v198
      %v479 = vunpack.c.l.b16 %v199
      %v480 = vunpack.c.h.b16 %v199
      %v481 = vunpack.c.l.b16 %v200
      %v482 = vunpack.c.h.b16 %v200
      %v483 = vunpack.c.l.b16 %v201
      %v484 = vunpack.c.l.b16 %v202
      %v485 = vunpack.c.h.b16 %v202
      %v486 = vunpack.c.l.b16 %v203
      %v487 = vunpack.c.h.b16 %v203
      %v488 = vunpack.c.l.b16 %v204
      %v489 = vunpack.c.l.b16 %v205
      %v490 = vunpack.c.h.b16 %v205
      %v491 = vunpack.c.l.b16 %v206
      %v492 = vunpack.c.h.b16 %v206
      %v493 = vunpack.c.l.b16 %v207
      %v494 = vunpack.c.l.b16 %v208
      %v495 = vunpack.c.h.b16 %v208
      %v496 = vunpack.c.l.b16 %v209
      %v497 = vunpack.c.h.b16 %v209
      %v498 = vunpack.c.l.b16 %v210
      %v499 = vunpack.c.l.b16 %v211
      %v500 = vunpack.c.h.b16 %v211
      %v501 = vunpack.c.l.b16 %v212
      %v502 = vunpack.c.h.b16 %v212
      %v503 = vunpack.c.l.b16 %v213
      %v504 = vunpack.c.l.b16 %v214
      %v505 = vunpack.c.h.b16 %v214
      %v506 = vunpack.c.l.b16 %v215
      %v507 = vunpack.c.h.b16 %v215
      %v508 = vunpack.c.l.b16 %v216
      %v509 = vunpack.c.l.b16 %v217
      %v510 = vunpack.c.h.b16 %v217
      %v511 = vunpack.c.l.b16 %v218
      %v512 = vunpack.c.h.b16 %v218
      %v513 = vunpack.c.l.b16 %v219
      %v514 = vunpack.c.l.b16 %v220
      %v515 = vunpack.c.h.b16 %v220
      %v516 = vunpack.c.l.b16 %v221
      %v517 = vunpack.c.h.b16 %v221
      %v518 = vunpack.c.l.b16 %v222
      %v519 = vunpack.c.l.b16 %v223
      %v520 = vunpack.c.h.b16 %v223
      %v521 = vunpack.c.l.b16 %v224
      %v522 = vunpack.c.h.b16 %v224
      %v523 = vunpack.c.l.b16 %v225
      %v524 = vunpack.c.l.b16 %v226
      %v525 = vunpack.c.h.b16 %v226
      %v526 = vunpack.c.l.b16 %v227
      %v527 = vunpack.c.h.b16 %v227
      %v528 = vunpack.c.l.b16 %v228
      %v529 = vunpack.c.l.b16 %v229
      %v530 = vunpack.c.h.b16 %v229
      %v531 = vunpack.c.l.b16 %v230
      %v532 = vunpack.c.h.b16 %v230
      %v533 = vunpack.c.l.b16 %v231
      %v534 = vunpack.c.l.b16 %v232
      %v535 = vunpack.c.h.b16 %v232
      %v536 = vunpack.c.l.b16 %v233
      %v537 = vunpack.c.h.b16 %v233
      %v538 = vunpack.c.l.b16 %v234
      %v539 = vunpack.c.l.b16 %v235
      %v540 = vunpack.c.h.b16 %v235
      %v541 = vunpack.c.l.b16 %v236
      %v542 = vunpack.c.h.b16 %v236
      %v543 = vunpack.c.l.b16 %v237
      %v544 = vunpack.c.l.b16 %v238
      %v545 = vunpack.c.h.b16 %v238
      %v546 = vunpack.c.l.b16 %v239
      %v547 = vunpack.c.h.b16 %v239
      %v548 = vunpack.c.l.b16 %v240
      %v549 = vunpack.c.l.b16 %v241
      %v550 = vunpack.c.h.b16 %v241
      %v551 = vunpack.c.l.b16 %v242
      %v552 = vunpack.c.h.b16 %v242
      %v553 = vunpack.c.l.b16 %v243
      %v554 = vunpack.c.l.b16 %v244
      %v555 = vunpack.c.h.b16 %v244
      %v556 = vunpack.c.l.b16 %v245
      %v557 = vunpack.c.h.b16 %v245
      %v558 = vunpack.c.l.b16 %v246
      %v559 = vunpack.c.l.b16 %v247
      %v560 = vunpack.c.h.b16 %v247
      %v561 = vunpack.c.l.b16 %v248
      %v562 = vunpack.c.h.b16 %v248
      %v563 = vunpack.c.l.b16 %v249
      %v564 = vunpack.c.l.b16 %v250
      %v565 = vunpack.c.h.b16 %v250
      %v566 = vunpack.c.l.b16 %v251
      %v567 = vunpack.c.h.b16 %v251
      %v568 = vunpack.c.l.b16 %v252
      %v569 = vunpack.c.l.b16 %v253
      %v570 = vunpack.c.h.b16 %v253
      %v571 = vunpack.c.l.b16 %v254
      %v572 = vunpack.c.h.b16 %v254
      %v573 = vunpack.c.l.b16 %v255
      %v574 = vunpack.c.l.b16 %v256
      %v575 = vunpack.c.h.b16 %v256
      %v576 = vunpack.c.l.b16 %v257
      %v577 = vunpack.c.h.b16 %v257
      %v578 = vunpack.c.l.b16 %v258
      %v579 = vunpack.c.l.b16 %v259
      %v580 = vunpack.c.h.b16 %v259
      %v581 = vunpack.c.l.b16 %v260
      %v582 = vunpack.c.h.b16 %v260
      %v583 = vunpack.c.l.b16 %v261
      %v584 = vunpack.c.l.b16 %v262
      %v585 = vunpack.c.h.b16 %v262
      %v586 = vunpack.c.l.b16 %v263
      %v587 = vunpack.c.h.b16 %v263
      %v588 = vunpack.c.l.b16 %v264
      %v589 = vunpack.c.l.b16 %v265
      %v590 = vunpack.c.h.b16 %v265
      %v591 = vunpack.c.l.b16 %v266
      %v592 = vunpack.c.h.b16 %v266
      %v593 = vunpack.c.l.b16 %v267
      %v594 = vunpack.c.l.b16 %v268
      %v595 = vunpack.c.h.b16 %v268
      %v596 = vunpack.c.l.b16 %v269
      %v597 = vunpack.c.h.b16 %v269
      %v598 = vunpack.c.l.b16 %v270
      %v599 = vunpack.c.l.b16 %v271
      %v600 = vunpack.c.h.b16 %v271
      %v601 = vunpack.c.l.b16 %v272
      %v602 = vunpack.c.h.b16 %v272
      %v603 = vunpack.c.l.b16 %v273
      %v604 = vunpack.c.l.b16 %v274
      %v605 = vunpack.c.h.b16 %v274
      %v606 = vunpack.c.l.b16 %v275
      %v607 = vunpack.c.h.b16 %v275
      %v608 = vunpack.c.l.b16 %v276
      %v609 = vunpack.c.l.b16 %v277
      %v610 = vunpack.c.h.b16 %v277
      %v611 = vunpack.c.l.b16 %v278
      %v612 = vunpack.c.h.b16 %v278
      %v613 = vunpack.c.l.b16 %v279
      %v614 = vunpack.c.l.b16 %v280
      %v615 = vunpack.c.h.b16 %v280
      %v616 = vunpack.c.l.b16 %v281
      %v617 = vunpack.c.h.b16 %v281
      %v618 = vunpack.c.l.b16 %v282
      %v619 = vpack.c.b16 %v464, %v459
      %v620 = vpack.c.b16 %v465, %v460
      %v621 = vpack.c.b16 %v466, %v461
      %v622 = vpack.c.b16 %v467, %v462
      %v623 = vpack.c.b16 %v468, %v463
      %v624 = vpack.c.b16 %v474, %v469
      %v625 = vpack.c.b16 %v475, %v470
      %v626 = vpack.c.b16 %v476, %v471
      %v627 = vpack.c.b16 %v477, %v472
      %v628 = vpack.c.b16 %v478, %v473
      %v629 = vpack.c.b16 %v484, %v479
      %v630 = vpack.c.b16 %v485, %v480
      %v631 = vpack.c.b16 %v486, %v481
      %v632 = vpack.c.b16 %v487, %v482
      %v633 = vpack.c.b16 %v488, %v483
      %v634 = vpack.c.b16 %v494, %v489
      %v635 = vpack.c.b16 %v495, %v490
      %v636 = vpack.c.b16 %v496, %v491
      %v637 = vpack.c.b16 %v497, %v492
      %v638 = vpack.c.b16 %v498, %v493
      %v639 = vpack.c.b16 %v504, %v499
      %v640 = vpack.c.b16 %v505, %v500
      %v641 = vpack.c.b16 %v506, %v501
      %v642 = vpack.c.b16 %v507, %v502
      %v643 = vpack.c.b16 %v508, %v503
      %v644 = vpack.c.b16 %v514, %v509
      %v645 = vpack.c.b16 %v515, %v510
      %v646 = vpack.c.b16 %v516, %v511
      %v647 = vpack.c.b16 %v517, %v512
      %v648 = vpack.c.b16 %v518, %v513
      %v649 = vpack.c.b16 %v524, %v519
      %v650 = vpack.c.b16 %v525, %v520
      %v651 = vpack.c.b16 %v526, %v521
      %v652 = vpack.c.b16 %v527, %v522
      %v653 = vpack.c.b16 %v528, %v523
      %v654 = vpack.c.b16 %v534, %v529
      %v655 = vpack.c.b16 %v535, %v530
      %v656 = vpack.c.b16 %v536, %v531
      %v657 = vpack.c.b16 %v537, %v532
      %v658 = vpack.c.b16 %v538, %v533
      %v659 = vpack.c.b16 %v544, %v539
      %v660 = vpack.c.b16 %v545, %v540
      %v661 = vpack.c.b16 %v546, %v541
      %v662 = vpack.c.b16 %v547, %v542
      %v663 = vpack.c.b16 %v548, %v543
      %v664 = vpack.c.b16 %v554, %v549
      %v665 = vpack.c.b16 %v555, %v550
      %v666 = vpack.c.b16 %v556, %v551
      %v667 = vpack.c.b16 %v557, %v552
      %v668 = vpack.c.b16 %v558, %v553
      %v669 = vpack.c.b16 %v564, %v559
      %v670 = vpack.c.b16 %v565, %v560
      %v671 = vpack.c.b16 %v566, %v561
      %v672 = vpack.c.b16 %v567, %v562
      %v673 = vpack.c.b16 %v568, %v563
      %v674 = vpack.c.b16 %v574, %v569
      %v675 = vpack.c.b16 %v575, %v570
      %v676 = vpack.c.b16 %v576, %v571
      %v677 = vpack.c.b16 %v577, %v572
      %v678 = vpack.c.b16 %v578, %v573
      %v679 = vpack.c.b16 %v584, %v579
      %v680 = vpack.c.b16 %v585, %v580
      %v681 = vpack.c.b16 %v586, %v581
      %v682 = vpack.c.b16 %v587, %v582
      %v683 = vpack.c.b16 %v588, %v583
      %v684 = vpack.c.b16 %v594, %v589
      %v685 = vpack.c.b16 %v595, %v590
      %v686 = vpack.c.b16 %v596, %v591
      %v687 = vpack.c.b16 %v597, %v592
      %v688 = vpack.c.b16 %v598, %v593
      %v689 = vpack.c.b16 %v604, %v599
      %v690 = vpack.c.b16 %v605, %v600
      %v691 = vpack.c.b16 %v606, %v601
      %v692 = vpack.c.b16 %v607, %v602
      %v693 = vpack.c.b16 %v608, %v603
      %v694 = vpack.c.b16 %v614, %v609
      %v695 = vpack.c.b16 %v615, %v610
      %v696 = vpack.c.b16 %v616, %v611
      %v697 = vpack.c.b16 %v617, %v612
      %v698 = vpack.c.b16 %v618, %v613
      %v859 = vunpack.c.l.b16 %v283
      %v860 = vunpack.c.l.b16 %v284
      %v861 = vunpack.c.l.b16 %v285
      %v862 = vunpack.c.l.b16 %v286
      %v863 = vunpack.c.l.b16 %v287
      %v864 = vunpack.c.l.b16 %v288
      %v865 = vunpack.c.l.b16 %v289
      %v866 = vunpack.c.l.b16 %v290
      %v867 = vunpack.c.l.b16 %v291
      %v868 = vunpack.c.l.b16 %v292
      %v869 = vunpack.c.l.b16 %v293
      %v870 = vunpack.c.l.b16 %v294
      %v871 = vunpack.c.l.b16 %v295
      %v872 = vunpack.c.l.b16 %v296
      %v873 = vunpack.c.l.b16 %v297
      %v874 = vunpack.c.l.b16 %v298
      %v875 = vunpack.c.l.b16 %v299
      %v876 = vunpack.c.l.b16 %v300
      %v877 = vunpack.c.l.b16 %v301
      %v878 = vunpack.c.l.b16 %v302
      %v879 = vunpack.c.l.b16 %v303
      %v880 = vunpack.c.l.b16 %v304
      %v881 = vunpack.c.l.b16 %v305
      %v882 = vunpack.c.l.b16 %v306
      %v883 = vunpack.c.l.b16 %v307
      %v884 = vunpack.c.l.b16 %v308
      %v885 = vunpack.c.l.b16 %v309
      %v886 = vunpack.c.l.b16 %v310
      %v887 = vunpack.c.l.b16 %v311
      %v888 = vunpack.c.l.b16 %v312
      %v889 = vunpack.c.l.b16 %v313
      %v890 = vunpack.c.l.b16 %v314
      %v891 = vunpack.c.l.b16 %v315
      %v892 = vunpack.c.l.b16 %v316
      %v893 = vunpack.c.l.b16 %v317
      %v894 = vunpack.c.l.b16 %v318
      %v895 = vunpack.c.l.b16 %v319
      %v896 = vunpack.c.l.b16 %v320
      %v897 = vunpack.c.l.b16 %v321
      %v898 = vunpack.c.l.b16 %v322
      %v899 = vunpack.c.l.b16 %v323
      %v900 = vunpack.c.l.b16 %v324
      %v901 = vunpack.c.l.b16 %v325
      %v902 = vunpack.c.l.b16 %v326
      %v903 = vunpack.c.l.b16 %v327
      %v904 = vunpack.c.l.b16 %v328
      %v905 = vunpack.c.l.b16 %v329
      %v906 = vunpack.c.l.b16 %v330
      %v907 = vunpack.c.l.b16 %v331
      %v908 = vunpack.c.l.b16 %v332
      %v909 = vunpack.c.l.b16 %v333
      %v910 = vunpack.c.l.b16 %v334
      %v911 = vunpack.c.l.b16 %v335
      %v912 = vunpack.c.l.b16 %v336
      %v913 = vunpack.c.l.b16 %v337
      %v914 = vunpack.c.l.b16 %v338
      %v915 = vunpack.c.l.b16 %v339
      %v916 = vunpack.c.l.b16 %v340
      %v917 = vunpack.c.l.b16 %v341
      %v918 = vunpack.c.l.b16 %v342
      %v919 = vunpack.c.l.b16 %v343
      %v920 = vunpack.c.l.b16 %v344
      %v921 = vunpack.c.l.b16 %v345
      %v922 = vunpack.c.l.b16 %v346
      %v923 = vunpack.c.l.b16 %v347
      %v924 = vunpack.c.l.b16 %v348
      %v925 = vunpack.c.l.b16 %v349
      %v926 = vunpack.c.l.b16 %v350
      %v927 = vunpack.c.l.b16 %v351
      %v928 = vunpack.c.l.b16 %v352
      %v929 = vunpack.c.l.b16 %v353
      %v930 = vunpack.c.l.b16 %v354
      %v931 = vunpack.c.l.b16 %v355
      %v932 = vunpack.c.l.b16 %v356
      %v933 = vunpack.c.l.b16 %v357
      %v934 = vunpack.c.l.b16 %v358
      %v935 = vunpack.c.l.b16 %v359
      %v936 = vunpack.c.l.b16 %v360
      %v937 = vunpack.c.l.b16 %v361
      %v938 = vunpack.c.l.b16 %v362
      %v939 = vpack.c.b16 %v860, %v859
      %v940 = vpack.c.b16 %v862, %v861
      %v941 = vpack.c.b16 %v864, %v863
      %v942 = vpack.c.b16 %v866, %v865
      %v943 = vpack.c.b16 %v868, %v867
      %v944 = vpack.c.b16 %v870, %v869
      %v945 = vpack.c.b16 %v872, %v871
      %v946 = vpack.c.b16 %v874, %v873
      %v947 = vpack.c.b16 %v876, %v875
      %v948 = vpack.c.b16 %v878, %v877
      %v949 = vpack.c.b16 %v880, %v879
      %v950 = vpack.c.b16 %v882, %v881
      %v951 = vpack.c.b16 %v884, %v883
      %v952 = vpack.c.b16 %v886, %v885
      %v953 = vpack.c.b16 %v888, %v887
      %v954 = vpack.c.b16 %v890, %v889
      %v955 = vpack.c.b16 %v892, %v891
      %v956 = vpack.c.b16 %v894, %v893
      %v957 = vpack.c.b16 %v896, %v895
      %v958 = vpack.c.b16 %v898, %v897
      %v959 = vpack.c.b16 %v900, %v899
      %v960 = vpack.c.b16 %v902, %v901
      %v961 = vpack.c.b16 %v904, %v903
      %v962 = vpack.c.b16 %v906, %v905
      %v963 = vpack.c.b16 %v908, %v907
      %v964 = vpack.c.b16 %v910, %v909
      %v965 = vpack.c.b16 %v912, %v911
      %v966 = vpack.c.b16 %v914, %v913
      %v967 = vpack.c.b16 %v916, %v915
      %v968 = vpack.c.b16 %v918, %v917
      %v969 = vpack.c.b16 %v920, %v919
      %v970 = vpack.c.b16 %v922, %v921
      %v971 = vpack.c.b16 %v924, %v923
      %v972 = vpack.c.b16 %v926, %v925
      %v973 = vpack.c.b16 %v928, %v927
      %v974 = vpack.c.b16 %v930, %v929
      %v975 = vpack.c.b16 %v932, %v931
      %v976 = vpack.c.b16 %v934, %v933
      %v977 = vpack.c.b16 %v936, %v935
      %v978 = vpack.c.b16 %v938, %v937
      %1019 = vmatpush.bf16.msra.mxu0 %v946
      %1020 = vmatpush.bf16.msra.mxu0 %v945
      %1021 = vmatpush.bf16.msra.mxu0 %v944
      %1022 = vmatpush.bf16.msra.mxu0 %v943
      %1023 = vmatpush.bf16.msra.mxu0 %v942
      %1024 = vmatpush.bf16.msra.mxu0 %v941
      %1025 = vmatpush.bf16.msra.mxu0 %v940
      %1026 = vmatpush.bf16.msra.mxu0 %v939
      %1027 = vmatmul.bf16.gmra.mxu0 %v619
      %v1028 = vpop.f32.mrf.mxu0
      %v1029 = vadd.f32 0.0, %v1028
      %v1030 = vpop.f32.mrf.mxu0
      %v1031 = vadd.f32 0.0, %v1030
      %1032 = vmatmul.bf16.gmra.mxu0 %v624
      %v1033 = vpop.f32.mrf.mxu0
      %v1034 = vadd.f32 0.0, %v1033
      %v1035 = vpop.f32.mrf.mxu0
      %v1036 = vadd.f32 0.0, %v1035
      %1037 = vmatmul.bf16.gmra.mxu0 %v629
      %v1038 = vpop.f32.mrf.mxu0
      %v1039 = vadd.f32 0.0, %v1038
      %v1040 = vpop.f32.mrf.mxu0
      %v1041 = vadd.f32 0.0, %v1040
      %1042 = vmatmul.bf16.gmra.mxu0 %v634
      %v1043 = vpop.f32.mrf.mxu0
      %v1044 = vadd.f32 0.0, %v1043
      %v1045 = vpop.f32.mrf.mxu0
      %v1046 = vadd.f32 0.0, %v1045
      %1047 = vmatmul.bf16.gmra.mxu0 %v639
      %v1048 = vpop.f32.mrf.mxu0
      %v1049 = vadd.f32 0.0, %v1048
      %v1050 = vpop.f32.mrf.mxu0
      %v1051 = vadd.f32 0.0, %v1050
      %1052 = vmatmul.bf16.gmra.mxu0 %v644
      %v1053 = vpop.f32.mrf.mxu0
      %v1054 = vadd.f32 0.0, %v1053
      %v1055 = vpop.f32.mrf.mxu0
      %v1056 = vadd.f32 0.0, %v1055
      %1057 = vmatmul.bf16.gmra.mxu0 %v649
      %v1058 = vpop.f32.mrf.mxu0
      %v1059 = vadd.f32 0.0, %v1058
      %v1060 = vpop.f32.mrf.mxu0
      %v1061 = vadd.f32 0.0, %v1060
      %1062 = vmatmul.bf16.gmra.mxu0 %v654
      %v1063 = vpop.f32.mrf.mxu0
      %v1064 = vadd.f32 0.0, %v1063
      %v1065 = vpop.f32.mrf.mxu0
      %v1066 = vadd.f32 0.0, %v1065
      %1067 = vmatmul.bf16.gmra.mxu0 %v659
      %v1068 = vpop.f32.mrf.mxu0
      %v1069 = vadd.f32 0.0, %v1068
      %v1070 = vpop.f32.mrf.mxu0
      %v1071 = vadd.f32 0.0, %v1070
      %1072 = vmatmul.bf16.gmra.mxu0 %v664
      %v1073 = vpop.f32.mrf.mxu0
      %v1074 = vadd.f32 0.0, %v1073
      %v1075 = vpop.f32.mrf.mxu0
      %v1076 = vadd.f32 0.0, %v1075
      %1077 = vmatmul.bf16.gmra.mxu0 %v669
      %v1078 = vpop.f32.mrf.mxu0
      %v1079 = vadd.f32 0.0, %v1078
      %v1080 = vpop.f32.mrf.mxu0
      %v1081 = vadd.f32 0.0, %v1080
      %1082 = vmatmul.bf16.gmra.mxu0 %v674
      %v1083 = vpop.f32.mrf.mxu0
      %v1084 = vadd.f32 0.0, %v1083
      %v1085 = vpop.f32.mrf.mxu0
      %v1086 = vadd.f32 0.0, %v1085
      %1087 = vmatmul.bf16.gmra.mxu0 %v679
      %v1088 = vpop.f32.mrf.mxu0
      %v1089 = vadd.f32 0.0, %v1088
      %v1090 = vpop.f32.mrf.mxu0
      %v1091 = vadd.f32 0.0, %v1090
      %1092 = vmatmul.bf16.gmra.mxu0 %v684
      %v1093 = vpop.f32.mrf.mxu0
      %v1094 = vadd.f32 0.0, %v1093
      %v1095 = vpop.f32.mrf.mxu0
      %v1096 = vadd.f32 0.0, %v1095
      %1097 = vmatmul.bf16.gmra.mxu0 %v689
      %v1098 = vpop.f32.mrf.mxu0
      %v1099 = vadd.f32 0.0, %v1098
      %v1100 = vpop.f32.mrf.mxu0
      %v1101 = vadd.f32 0.0, %v1100
      %1102 = vmatmul.bf16.gmra.mxu0 %v694
      %v1103 = vpop.f32.mrf.mxu0
      %v1104 = vadd.f32 0.0, %v1103
      %v1105 = vpop.f32.mrf.mxu0
      %v1106 = vadd.f32 0.0, %v1105
      %1107 = vdwg.mxu0
      %1108 = vmatpush.bf16.msra.mxu0 %v954
      %1109 = vmatpush.bf16.msra.mxu0 %v953
      %1110 = vmatpush.bf16.msra.mxu0 %v952
      %1111 = vmatpush.bf16.msra.mxu0 %v951
      %1112 = vmatpush.bf16.msra.mxu0 %v950
      %1113 = vmatpush.bf16.msra.mxu0 %v949
      %1114 = vmatpush.bf16.msra.mxu0 %v948
      %1115 = vmatpush.bf16.msra.mxu0 %v947
      %1116 = vmatmul.bf16.gmra.mxu0 %v620
      %v1117 = vpop.f32.mrf.mxu0
      %v1118 = vadd.f32 %v1029, %v1117
      %v1119 = vpop.f32.mrf.mxu0
      %v1120 = vadd.f32 %v1031, %v1119
      %1121 = vmatmul.bf16.gmra.mxu0 %v625
      %v1122 = vpop.f32.mrf.mxu0
      %v1123 = vadd.f32 %v1034, %v1122
      %v1124 = vpop.f32.mrf.mxu0
      %v1125 = vadd.f32 %v1036, %v1124
      %1126 = vmatmul.bf16.gmra.mxu0 %v630
      %v1127 = vpop.f32.mrf.mxu0
      %v1128 = vadd.f32 %v1039, %v1127
      %v1129 = vpop.f32.mrf.mxu0
      %v1130 = vadd.f32 %v1041, %v1129
      %1131 = vmatmul.bf16.gmra.mxu0 %v635
      %v1132 = vpop.f32.mrf.mxu0
      %v1133 = vadd.f32 %v1044, %v1132
      %v1134 = vpop.f32.mrf.mxu0
      %v1135 = vadd.f32 %v1046, %v1134
      %1136 = vmatmul.bf16.gmra.mxu0 %v640
      %v1137 = vpop.f32.mrf.mxu0
      %v1138 = vadd.f32 %v1049, %v1137
      %v1139 = vpop.f32.mrf.mxu0
      %v1140 = vadd.f32 %v1051, %v1139
      %1141 = vmatmul.bf16.gmra.mxu0 %v645
      %v1142 = vpop.f32.mrf.mxu0
      %v1143 = vadd.f32 %v1054, %v1142
      %v1144 = vpop.f32.mrf.mxu0
      %v1145 = vadd.f32 %v1056, %v1144
      %1146 = vmatmul.bf16.gmra.mxu0 %v650
      %v1147 = vpop.f32.mrf.mxu0
      %v1148 = vadd.f32 %v1059, %v1147
      %v1149 = vpop.f32.mrf.mxu0
      %v1150 = vadd.f32 %v1061, %v1149
      %1151 = vmatmul.bf16.gmra.mxu0 %v655
      %v1152 = vpop.f32.mrf.mxu0
      %v1153 = vadd.f32 %v1064, %v1152
      %v1154 = vpop.f32.mrf.mxu0
      %v1155 = vadd.f32 %v1066, %v1154
      %1156 = vmatmul.bf16.gmra.mxu0 %v660
      %v1157 = vpop.f32.mrf.mxu0
      %v1158 = vadd.f32 %v1069, %v1157
      %v1159 = vpop.f32.mrf.mxu0
      %v1160 = vadd.f32 %v1071, %v1159
      %1161 = vmatmul.bf16.gmra.mxu0 %v665
      %v1162 = vpop.f32.mrf.mxu0
      %v1163 = vadd.f32 %v1074, %v1162
      %v1164 = vpop.f32.mrf.mxu0
      %v1165 = vadd.f32 %v1076, %v1164
      %1166 = vmatmul.bf16.gmra.mxu0 %v670
      %v1167 = vpop.f32.mrf.mxu0
      %v1168 = vadd.f32 %v1079, %v1167
      %v1169 = vpop.f32.mrf.mxu0
      %v1170 = vadd.f32 %v1081, %v1169
      %1171 = vmatmul.bf16.gmra.mxu0 %v675
      %v1172 = vpop.f32.mrf.mxu0
      %v1173 = vadd.f32 %v1084, %v1172
      %v1174 = vpop.f32.mrf.mxu0
      %v1175 = vadd.f32 %v1086, %v1174
      %1176 = vmatmul.bf16.gmra.mxu0 %v680
      %v1177 = vpop.f32.mrf.mxu0
      %v1178 = vadd.f32 %v1089, %v1177
      %v1179 = vpop.f32.mrf.mxu0
      %v1180 = vadd.f32 %v1091, %v1179
      %1181 = vmatmul.bf16.gmra.mxu0 %v685
      %v1182 = vpop.f32.mrf.mxu0
      %v1183 = vadd.f32 %v1094, %v1182
      %v1184 = vpop.f32.mrf.mxu0
      %v1185 = vadd.f32 %v1096, %v1184
      %1186 = vmatmul.bf16.gmra.mxu0 %v690
      %v1187 = vpop.f32.mrf.mxu0
      %v1188 = vadd.f32 %v1099, %v1187
      %v1189 = vpop.f32.mrf.mxu0
      %v1190 = vadd.f32 %v1101, %v1189
      %1191 = vmatmul.bf16.gmra.mxu0 %v695
      %v1192 = vpop.f32.mrf.mxu0
      %v1193 = vadd.f32 %v1104, %v1192
      %v1194 = vpop.f32.mrf.mxu0
      %v1195 = vadd.f32 %v1106, %v1194
      %1196 = vdwg.mxu0
      %1197 = vmatpush.bf16.msra.mxu0 %v962
      %1198 = vmatpush.bf16.msra.mxu0 %v961
      %1199 = vmatpush.bf16.msra.mxu0 %v960
      %1200 = vmatpush.bf16.msra.mxu0 %v959
      %1201 = vmatpush.bf16.msra.mxu0 %v958
      %1202 = vmatpush.bf16.msra.mxu0 %v957
      %1203 = vmatpush.bf16.msra.mxu0 %v956
      %1204 = vmatpush.bf16.msra.mxu0 %v955
      %1205 = vmatmul.bf16.gmra.mxu0 %v621
      %v1206 = vpop.f32.mrf.mxu0
      %v1207 = vadd.f32 %v1118, %v1206
      %v1208 = vpop.f32.mrf.mxu0
      %v1209 = vadd.f32 %v1120, %v1208
      %1210 = vmatmul.bf16.gmra.mxu0 %v626
      %v1211 = vpop.f32.mrf.mxu0
      %v1212 = vadd.f32 %v1123, %v1211
      %v1213 = vpop.f32.mrf.mxu0
      %v1214 = vadd.f32 %v1125, %v1213
      %1215 = vmatmul.bf16.gmra.mxu0 %v631
      %v1216 = vpop.f32.mrf.mxu0
      %v1217 = vadd.f32 %v1128, %v1216
      %v1218 = vpop.f32.mrf.mxu0
      %v1219 = vadd.f32 %v1130, %v1218
      %1220 = vmatmul.bf16.gmra.mxu0 %v636
      %v1221 = vpop.f32.mrf.mxu0
      %v1222 = vadd.f32 %v1133, %v1221
      %v1223 = vpop.f32.mrf.mxu0
      %v1224 = vadd.f32 %v1135, %v1223
      %1225 = vmatmul.bf16.gmra.mxu0 %v641
      %v1226 = vpop.f32.mrf.mxu0
      %v1227 = vadd.f32 %v1138, %v1226
      %v1228 = vpop.f32.mrf.mxu0
      %v1229 = vadd.f32 %v1140, %v1228
      %1230 = vmatmul.bf16.gmra.mxu0 %v646
      %v1231 = vpop.f32.mrf.mxu0
      %v1232 = vadd.f32 %v1143, %v1231
      %v1233 = vpop.f32.mrf.mxu0
      %v1234 = vadd.f32 %v1145, %v1233
      %1235 = vmatmul.bf16.gmra.mxu0 %v651
      %v1236 = vpop.f32.mrf.mxu0
      %v1237 = vadd.f32 %v1148, %v1236
      %v1238 = vpop.f32.mrf.mxu0
      %v1239 = vadd.f32 %v1150, %v1238
      %1240 = vmatmul.bf16.gmra.mxu0 %v656
      %v1241 = vpop.f32.mrf.mxu0
      %v1242 = vadd.f32 %v1153, %v1241
      %v1243 = vpop.f32.mrf.mxu0
      %v1244 = vadd.f32 %v1155, %v1243
      %1245 = vmatmul.bf16.gmra.mxu0 %v661
      %v1246 = vpop.f32.mrf.mxu0
      %v1247 = vadd.f32 %v1158, %v1246
      %v1248 = vpop.f32.mrf.mxu0
      %v1249 = vadd.f32 %v1160, %v1248
      %1250 = vmatmul.bf16.gmra.mxu0 %v666
      %v1251 = vpop.f32.mrf.mxu0
      %v1252 = vadd.f32 %v1163, %v1251
      %v1253 = vpop.f32.mrf.mxu0
      %v1254 = vadd.f32 %v1165, %v1253
      %1255 = vmatmul.bf16.gmra.mxu0 %v671
      %v1256 = vpop.f32.mrf.mxu0
      %v1257 = vadd.f32 %v1168, %v1256
      %v1258 = vpop.f32.mrf.mxu0
      %v1259 = vadd.f32 %v1170, %v1258
      %1260 = vmatmul.bf16.gmra.mxu0 %v676
      %v1261 = vpop.f32.mrf.mxu0
      %v1262 = vadd.f32 %v1173, %v1261
      %v1263 = vpop.f32.mrf.mxu0
      %v1264 = vadd.f32 %v1175, %v1263
      %1265 = vmatmul.bf16.gmra.mxu0 %v681
      %v1266 = vpop.f32.mrf.mxu0
      %v1267 = vadd.f32 %v1178, %v1266
      %v1268 = vpop.f32.mrf.mxu0
      %v1269 = vadd.f32 %v1180, %v1268
      %1270 = vmatmul.bf16.gmra.mxu0 %v686
      %v1271 = vpop.f32.mrf.mxu0
      %v1272 = vadd.f32 %v1183, %v1271
      %v1273 = vpop.f32.mrf.mxu0
      %v1274 = vadd.f32 %v1185, %v1273
      %1275 = vmatmul.bf16.gmra.mxu0 %v691
      %v1276 = vpop.f32.mrf.mxu0
      %v1277 = vadd.f32 %v1188, %v1276
      %v1278 = vpop.f32.mrf.mxu0
      %v1279 = vadd.f32 %v1190, %v1278
      %1280 = vmatmul.bf16.gmra.mxu0 %v696
      %v1281 = vpop.f32.mrf.mxu0
      %v1282 = vadd.f32 %v1193, %v1281
      %v1283 = vpop.f32.mrf.mxu0
      %v1284 = vadd.f32 %v1195, %v1283
      %1285 = vdwg.mxu0
      %1286 = vmatpush.bf16.msra.mxu0 %v970
      %1287 = vmatpush.bf16.msra.mxu0 %v969
      %1288 = vmatpush.bf16.msra.mxu0 %v968
      %1289 = vmatpush.bf16.msra.mxu0 %v967
      %1290 = vmatpush.bf16.msra.mxu0 %v966
      %1291 = vmatpush.bf16.msra.mxu0 %v965
      %1292 = vmatpush.bf16.msra.mxu0 %v964
      %1293 = vmatpush.bf16.msra.mxu0 %v963
      %1294 = vmatmul.bf16.gmra.mxu0 %v622
      %v1295 = vpop.f32.mrf.mxu0
      %v1296 = vadd.f32 %v1207, %v1295
      %v1297 = vpop.f32.mrf.mxu0
      %v1298 = vadd.f32 %v1209, %v1297
      %1299 = vmatmul.bf16.gmra.mxu0 %v627
      %v1300 = vpop.f32.mrf.mxu0
      %v1301 = vadd.f32 %v1212, %v1300
      %v1302 = vpop.f32.mrf.mxu0
      %v1303 = vadd.f32 %v1214, %v1302
      %1304 = vmatmul.bf16.gmra.mxu0 %v632
      %v1305 = vpop.f32.mrf.mxu0
      %v1306 = vadd.f32 %v1217, %v1305
      %v1307 = vpop.f32.mrf.mxu0
      %v1308 = vadd.f32 %v1219, %v1307
      %1309 = vmatmul.bf16.gmra.mxu0 %v637
      %v1310 = vpop.f32.mrf.mxu0
      %v1311 = vadd.f32 %v1222, %v1310
      %v1312 = vpop.f32.mrf.mxu0
      %v1313 = vadd.f32 %v1224, %v1312
      %1314 = vmatmul.bf16.gmra.mxu0 %v642
      %v1315 = vpop.f32.mrf.mxu0
      %v1316 = vadd.f32 %v1227, %v1315
      %v1317 = vpop.f32.mrf.mxu0
      %v1318 = vadd.f32 %v1229, %v1317
      %1319 = vmatmul.bf16.gmra.mxu0 %v647
      %v1320 = vpop.f32.mrf.mxu0
      %v1321 = vadd.f32 %v1232, %v1320
      %v1322 = vpop.f32.mrf.mxu0
      %v1323 = vadd.f32 %v1234, %v1322
      %1324 = vmatmul.bf16.gmra.mxu0 %v652
      %v1325 = vpop.f32.mrf.mxu0
      %v1326 = vadd.f32 %v1237, %v1325
      %v1327 = vpop.f32.mrf.mxu0
      %v1328 = vadd.f32 %v1239, %v1327
      %1329 = vmatmul.bf16.gmra.mxu0 %v657
      %v1330 = vpop.f32.mrf.mxu0
      %v1331 = vadd.f32 %v1242, %v1330
      %v1332 = vpop.f32.mrf.mxu0
      %v1333 = vadd.f32 %v1244, %v1332
      %1334 = vmatmul.bf16.gmra.mxu0 %v662
      %v1335 = vpop.f32.mrf.mxu0
      %v1336 = vadd.f32 %v1247, %v1335
      %v1337 = vpop.f32.mrf.mxu0
      %v1338 = vadd.f32 %v1249, %v1337
      %1339 = vmatmul.bf16.gmra.mxu0 %v667
      %v1340 = vpop.f32.mrf.mxu0
      %v1341 = vadd.f32 %v1252, %v1340
      %v1342 = vpop.f32.mrf.mxu0
      %v1343 = vadd.f32 %v1254, %v1342
      %1344 = vmatmul.bf16.gmra.mxu0 %v672
      %v1345 = vpop.f32.mrf.mxu0
      %v1346 = vadd.f32 %v1257, %v1345
      %v1347 = vpop.f32.mrf.mxu0
      %v1348 = vadd.f32 %v1259, %v1347
      %1349 = vmatmul.bf16.gmra.mxu0 %v677
      %v1350 = vpop.f32.mrf.mxu0
      %v1351 = vadd.f32 %v1262, %v1350
      %v1352 = vpop.f32.mrf.mxu0
      %v1353 = vadd.f32 %v1264, %v1352
      %1354 = vmatmul.bf16.gmra.mxu0 %v682
      %v1355 = vpop.f32.mrf.mxu0
      %v1356 = vadd.f32 %v1267, %v1355
      %v1357 = vpop.f32.mrf.mxu0
      %v1358 = vadd.f32 %v1269, %v1357
      %1359 = vmatmul.bf16.gmra.mxu0 %v687
      %v1360 = vpop.f32.mrf.mxu0
      %v1361 = vadd.f32 %v1272, %v1360
      %v1362 = vpop.f32.mrf.mxu0
      %v1363 = vadd.f32 %v1274, %v1362
      %1364 = vmatmul.bf16.gmra.mxu0 %v692
      %v1365 = vpop.f32.mrf.mxu0
      %v1366 = vadd.f32 %v1277, %v1365
      %v1367 = vpop.f32.mrf.mxu0
      %v1368 = vadd.f32 %v1279, %v1367
      %1369 = vmatmul.bf16.gmra.mxu0 %v697
      %v1370 = vpop.f32.mrf.mxu0
      %v1371 = vadd.f32 %v1282, %v1370
      %v1372 = vpop.f32.mrf.mxu0
      %v1373 = vadd.f32 %v1284, %v1372
      %1374 = vdwg.mxu0
      %1375 = vmatpush.bf16.msra.mxu0 %v978
      %1376 = vmatpush.bf16.msra.mxu0 %v977
      %1377 = vmatpush.bf16.msra.mxu0 %v976
      %1378 = vmatpush.bf16.msra.mxu0 %v975
      %1379 = vmatpush.bf16.msra.mxu0 %v974
      %1380 = vmatpush.bf16.msra.mxu0 %v973
      %1381 = vmatpush.bf16.msra.mxu0 %v972
      %1382 = vmatpush.bf16.msra.mxu0 %v971
      %1383 = vmatmul.bf16.gmra.mxu0 %v623
      %v1384 = vpop.f32.mrf.mxu0
      %v1385 = vadd.f32 %v1296, %v1384
      %v1386 = vpop.f32.mrf.mxu0
      %v1387 = vadd.f32 %v1298, %v1386
      %1388 = vmatmul.bf16.gmra.mxu0 %v628
      %v1389 = vpop.f32.mrf.mxu0
      %v1390 = vadd.f32 %v1301, %v1389
      %v1391 = vpop.f32.mrf.mxu0
      %v1392 = vadd.f32 %v1303, %v1391
      %1393 = vmatmul.bf16.gmra.mxu0 %v633
      %v1394 = vpop.f32.mrf.mxu0
      %v1395 = vadd.f32 %v1306, %v1394
      %v1396 = vpop.f32.mrf.mxu0
      %v1397 = vadd.f32 %v1308, %v1396
      %1398 = vmatmul.bf16.gmra.mxu0 %v638
      %v1399 = vpop.f32.mrf.mxu0
      %v1400 = vadd.f32 %v1311, %v1399
      %v1401 = vpop.f32.mrf.mxu0
      %v1402 = vadd.f32 %v1313, %v1401
      %1403 = vmatmul.bf16.gmra.mxu0 %v643
      %v1404 = vpop.f32.mrf.mxu0
      %v1405 = vadd.f32 %v1316, %v1404
      %v1406 = vpop.f32.mrf.mxu0
      %v1407 = vadd.f32 %v1318, %v1406
      %1408 = vmatmul.bf16.gmra.mxu0 %v648
      %v1409 = vpop.f32.mrf.mxu0
      %v1410 = vadd.f32 %v1321, %v1409
      %v1411 = vpop.f32.mrf.mxu0
      %v1412 = vadd.f32 %v1323, %v1411
      %1413 = vmatmul.bf16.gmra.mxu0 %v653
      %v1414 = vpop.f32.mrf.mxu0
      %v1415 = vadd.f32 %v1326, %v1414
      %v1416 = vpop.f32.mrf.mxu0
      %v1417 = vadd.f32 %v1328, %v1416
      %1418 = vmatmul.bf16.gmra.mxu0 %v658
      %v1419 = vpop.f32.mrf.mxu0
      %v1420 = vadd.f32 %v1331, %v1419
      %v1421 = vpop.f32.mrf.mxu0
      %v1422 = vadd.f32 %v1333, %v1421
      %1423 = vmatmul.bf16.gmra.mxu0 %v663
      %v1424 = vpop.f32.mrf.mxu0
      %v1425 = vadd.f32 %v1336, %v1424
      %v1426 = vpop.f32.mrf.mxu0
      %v1427 = vadd.f32 %v1338, %v1426
      %1428 = vmatmul.bf16.gmra.mxu0 %v668
      %v1429 = vpop.f32.mrf.mxu0
      %v1430 = vadd.f32 %v1341, %v1429
      %v1431 = vpop.f32.mrf.mxu0
      %v1432 = vadd.f32 %v1343, %v1431
      %1433 = vmatmul.bf16.gmra.mxu0 %v673
      %v1434 = vpop.f32.mrf.mxu0
      %v1435 = vadd.f32 %v1346, %v1434
      %v1436 = vpop.f32.mrf.mxu0
      %v1437 = vadd.f32 %v1348, %v1436
      %1438 = vmatmul.bf16.gmra.mxu0 %v678
      %v1439 = vpop.f32.mrf.mxu0
      %v1440 = vadd.f32 %v1351, %v1439
      %v1441 = vpop.f32.mrf.mxu0
      %v1442 = vadd.f32 %v1353, %v1441
      %1443 = vmatmul.bf16.gmra.mxu0 %v683
      %v1444 = vpop.f32.mrf.mxu0
      %v1445 = vadd.f32 %v1356, %v1444
      %v1446 = vpop.f32.mrf.mxu0
      %v1447 = vadd.f32 %v1358, %v1446
      %1448 = vmatmul.bf16.gmra.mxu0 %v688
      %v1449 = vpop.f32.mrf.mxu0
      %v1450 = vadd.f32 %v1361, %v1449
      %v1451 = vpop.f32.mrf.mxu0
      %v1452 = vadd.f32 %v1363, %v1451
      %1453 = vmatmul.bf16.gmra.mxu0 %v693
      %v1454 = vpop.f32.mrf.mxu0
      %v1455 = vadd.f32 %v1366, %v1454
      %v1456 = vpop.f32.mrf.mxu0
      %v1457 = vadd.f32 %v1368, %v1456
      %1458 = vmatmul.bf16.gmra.mxu0 %v698
      %v1459 = vpop.f32.mrf.mxu0
      %v1460 = vadd.f32 %v1371, %v1459
      %v1461 = vpop.f32.mrf.mxu0
      %v1462 = vadd.f32 %v1373, %v1461
      %1463 = vdwg.mxu0
      %v1464 = vmax.f32 %v1385, 0.0
      %v1465 = vmax.f32 %v1387, 0.0
      %v1466 = vmax.f32 %v1390, 0.0
      %v1467 = vmax.f32 %v1392, 0.0
      %v1468 = vmax.f32 %v1395, 0.0
      %v1469 = vmax.f32 %v1397, 0.0
      %v1470 = vmax.f32 %v1400, 0.0
      %v1471 = vmax.f32 %v1402, 0.0
      %v1472 = vmax.f32 %v1405, 0.0
      %v1473 = vmax.f32 %v1407, 0.0
      %v1474 = vmax.f32 %v1410, 0.0
      %v1475 = vmax.f32 %v1412, 0.0
      %v1476 = vmax.f32 %v1415, 0.0
      %v1477 = vmax.f32 %v1417, 0.0
      %v1478 = vmax.f32 %v1420, 0.0
      %v1479 = vmax.f32 %v1422, 0.0
      %v1480 = vmax.f32 %v1425, 0.0
      %v1481 = vmax.f32 %v1427, 0.0
      %v1482 = vmax.f32 %v1430, 0.0
      %v1483 = vmax.f32 %v1432, 0.0
      %v1484 = vmax.f32 %v1435, 0.0
      %v1485 = vmax.f32 %v1437, 0.0
      %v1486 = vmax.f32 %v1440, 0.0
      %v1487 = vmax.f32 %v1442, 0.0
      %v1488 = vmax.f32 %v1445, 0.0
      %v1489 = vmax.f32 %v1447, 0.0
      %v1490 = vmax.f32 %v1450, 0.0
      %v1491 = vmax.f32 %v1452, 0.0
      %v1492 = vmax.f32 %v1455, 0.0
      %v1493 = vmax.f32 %v1457, 0.0
      %v1494 = vmax.f32 %v1460, 0.0
      %v1495 = vmax.f32 %v1462, 0.0
      %v1496 = vpack.c.bf16 %v1464, %v1464
      %v1497 = vpack.c.bf16 %v1465, %v1465
      %v1498 = vpack.c.bf16 %v1466, %v1466
      %v1499 = vpack.c.bf16 %v1467, %v1467
      %v1500 = vpack.c.bf16 %v1468, %v1468
      %v1501 = vpack.c.bf16 %v1469, %v1469
      %v1502 = vpack.c.bf16 %v1470, %v1470
      %v1503 = vpack.c.bf16 %v1471, %v1471
      %v1504 = vpack.c.bf16 %v1472, %v1472
      %v1505 = vpack.c.bf16 %v1473, %v1473
      %v1506 = vpack.c.bf16 %v1474, %v1474
      %v1507 = vpack.c.bf16 %v1475, %v1475
      %v1508 = vpack.c.bf16 %v1476, %v1476
      %v1509 = vpack.c.bf16 %v1477, %v1477
      %v1510 = vpack.c.bf16 %v1478, %v1478
      %v1511 = vpack.c.bf16 %v1479, %v1479
      %v1512 = vpack.c.bf16 %v1480, %v1480
      %v1513 = vpack.c.bf16 %v1481, %v1481
      %v1514 = vpack.c.bf16 %v1482, %v1482
      %v1515 = vpack.c.bf16 %v1483, %v1483
      %v1516 = vpack.c.bf16 %v1484, %v1484
      %v1517 = vpack.c.bf16 %v1485, %v1485
      %v1518 = vpack.c.bf16 %v1486, %v1486
      %v1519 = vpack.c.bf16 %v1487, %v1487
      %v1520 = vpack.c.bf16 %v1488, %v1488
      %v1521 = vpack.c.bf16 %v1489, %v1489
      %v1522 = vpack.c.bf16 %v1490, %v1490
      %v1523 = vpack.c.bf16 %v1491, %v1491
      %v1524 = vpack.c.bf16 %v1492, %v1492
      %v1525 = vpack.c.bf16 %v1493, %v1493
      %v1526 = vpack.c.bf16 %v1494, %v1494
      %v1527 = vpack.c.bf16 %v1495, %v1495
      %1528 = vst [vmem:[%s185] sm:$0xf] %v1496
      %1529 = vst [vmem:[%s185 + $0x4] sm:$0xf] %v1497
      %1530 = vst [vmem:[%s185 + $0x8] sm:$0xf] %v1498
      %1531 = vst [vmem:[%s185 + $0xc] sm:$0xf] %v1499
      %1532 = vst [vmem:[%s185 + $0x10] sm:$0xf] %v1500
      %1533 = vst [vmem:[%s185 + $0x14] sm:$0xf] %v1501
      %1534 = vst [vmem:[%s185 + $0x18] sm:$0xf] %v1502
      %1535 = vst [vmem:[%s185 + $0x1c] sm:$0xf] %v1503
      %1536 = vst [vmem:[%s185 + $0x20] sm:$0xf] %v1504
      %1537 = vst [vmem:[%s185 + $0x24] sm:$0xf] %v1505
      %1538 = vst [vmem:[%s185 + $0x28] sm:$0xf] %v1506
      %1539 = vst [vmem:[%s185 + $0x2c] sm:$0xf] %v1507
      %1540 = vst [vmem:[%s185 + $0x30] sm:$0xf] %v1508
      %1541 = vst [vmem:[%s185 + $0x34] sm:$0xf] %v1509
      %1542 = vst [vmem:[%s185 + $0x38] sm:$0xf] %v1510
      %1543 = vst [vmem:[%s185 + $0x3c] sm:$0xf] %v1511
      %1544 = vst [vmem:[%s185 + $0x40] sm:$0xf] %v1512
      %1545 = vst [vmem:[%s185 + $0x44] sm:$0xf] %v1513
      %1546 = vst [vmem:[%s185 + $0x48] sm:$0xf] %v1514
      %1547 = vst [vmem:[%s185 + $0x4c] sm:$0xf] %v1515
      %1548 = vst [vmem:[%s185 + $0x50] sm:$0xf] %v1516
      %1549 = vst [vmem:[%s185 + $0x54] sm:$0xf] %v1517
      %1550 = vst [vmem:[%s185 + $0x58] sm:$0xf] %v1518
      %1551 = vst [vmem:[%s185 + $0x5c] sm:$0xf] %v1519
      %1552 = vst [vmem:[%s185 + $0x60] sm:$0xf] %v1520
      %1553 = vst [vmem:[%s185 + $0x64] sm:$0xf] %v1521
      %1554 = vst [vmem:[%s185 + $0x68] sm:$0xf] %v1522
      %1555 = vst [vmem:[%s185 + $0x6c] sm:$0xf] %v1523
      %1556 = vst [vmem:[%s185 + $0x70] sm:$0xf] %v1524
      %1557 = vst [vmem:[%s185 + $0x74] sm:$0xf] %v1525
      %1558 = vst [vmem:[%s185 + $0x78] sm:$0xf] %v1526
      %1559 = vst [vmem:[%s185 + $0x7c] sm:$0xf] %v1527
      %s1560 = smul.u32 32, %s17
      %p1561 = scmp.lt.s32.totalorder %s1560, 95
      %s1562 = scalar_select %p1561, %s1560, 95
      %p1563 = scmp.lt.s32.totalorder %s18, 0
      %s1564 = scalar_select %p1563, %s18, 0
      %s1565 = sadd.s32 %s1564, %s1562
      %s1566 = smul.addr %s1565, 4
      %s1567 = scalar_lea.vmem %s2, %s1566
      // Predicated region
      $region29: #{model_forward.15} parent=27 // pred_check
        %p1568 = pneg %p97
      $region30: #{model_forward.15} parent=27 // pred_check_branch
        %1570 = sbr.rel (%p1568) target = $region32
      $region31: #{model_forward.15} parent=27 // pred_region
        %s1571 = smul.u32 32, %s17
      $region32: #{model_forward.15} parent=27 // pred_fallthru
        _
    $region28: #{model_forward.15} parent=5 // pred_fallthru
      _
    %p1572 = scmp.le.s32.totalorder 2, %s8
    // Predicated region
    $region33: #{model_forward.15} parent=5 // pred_check
      %p1573 = pneg %p1572
    $region34: #{model_forward.15} parent=5 // pred_check_branch
      %1575 = sbr.rel (%p1573) target = $region36
    $region35: #{model_forward.15} parent=5 // pred_region
      %s1576 = ssub.s32 %s8, 2
      // Predicated region
      $region37: #{model_forward.15} parent=35 // pred_check
        %p1577 = pneg %p103
      $region38: #{model_forward.15} parent=35 // pred_check_branch
        %1579 = sbr.rel (%p1577) target = $region40
      $region39: #{model_forward.15} parent=35 // pred_region
        %s1580 = smul.u32 32, %s19
        %p1581 = scmp.lt.s32.totalorder %s1580, 95
        %s1582 = scalar_select %p1581, %s1580, 95
        %p1583 = scmp.lt.s32.totalorder %s20, 0
        %s1584 = scalar_select %p1583, %s20, 0
        %s1585 = sadd.s32 %s1584, %s1582
        %s1586 = smul.addr %s1585, 4
        %s1587 = scalar_lea.vmem %s2, %s1586
      $region40: #{model_forward.15} parent=35 // pred_fallthru
        _
    $region36: #{model_forward.15} parent=5 // pred_fallthru
      _
  $region6: #{model_forward.15} parent=0 // loop_footer
    %s12 = sadd.s32 1, %s8
  $region7: #{model_forward.15} parent=0 // loop_footer_branch
    %7 = sbr.rel target = $region3
  $region8: #{model_forward.15} parent=0 // loop_exit
    _

// kernel: model_forward.17
$region0: #{model_forward.17}
  #allocation0 [shape = 'u32[]', space=smem, size = 0x4, offset = 0x4, fixed_abs, tag = 'smem constant byte address 0x4 - core index']
  #allocation1 [shape = 'u32[72,128]{1,0:T(1,128)}', space=vmem, size = 0x9000, scoped, tag = 'internal scratch']
  %s0 = inlined_call_operand.vmem [shape: bf16[176,128], index: 0, kind: input, shape index: {}]
  %s1 = inlined_call_operand.vmem [shape: bf16[128,128], index: 1, kind: input, shape index: {}]
  %s2 = inlined_call_operand.vmem [shape: bf16[176,128], index: 2, kind: output, shape index: {}]
  %s3 = sld [smem:[#allocation0]]
  $region18: #{model_forward.17} parent=0
    _
  %s5 = ssub.s32 1, %s3
  %s6 = scalar_select 0, %s5, %s3
  // Predicated region
  $region2: #{model_forward.17} parent=0 // pred_check
    _
  $region3: #{model_forward.17} parent=0 // pred_check_branch
    %8 = sbr.rel (0) target = $region5
  $region4: #{model_forward.17} parent=0 // pred_region
    _
  $region5: #{model_forward.17} parent=0 // pred_fallthru
    _
  // Predicated region
  $region6: #{model_forward.17} parent=0 // pred_check
    _
  $region7: #{model_forward.17} parent=0 // pred_check_branch
    %10 = sbr.rel (0) target = $region9
  $region8: #{model_forward.17} parent=0 // pred_region
    _
  $region9: #{model_forward.17} parent=0 // pred_fallthru
    _
  %v11 = vld [vmem:[%s0] sm:$0xf]
  %v12 = vld [vmem:[%s0 + $0x4] sm:$0xf]
  %v13 = vld [vmem:[%s0 + $0x8] sm:$0xf]
  %v14 = vld [vmem:[%s0 + $0xc] sm:$0xf]
  %v15 = vld [vmem:[%s0 + $0x10] sm:$0xf]
  %v16 = vld [vmem:[%s0 + $0x14] sm:$0xf]
  %v17 = vld [vmem:[%s0 + $0x18] sm:$0xf]
  %v18 = vld [vmem:[%s0 + $0x1c] sm:$0xf]
  %v19 = vld [vmem:[%s0 + $0x20] sm:$0xf]
  %v20 = vld [vmem:[%s0 + $0x24] sm:$0xf]
  %v21 = vld [vmem:[%s0 + $0x28] sm:$0xf]
  %v22 = vld [vmem:[%s0 + $0x2c] sm:$0xf]
  %v23 = vld [vmem:[%s0 + $0x30] sm:$0xf]
  %v24 = vld [vmem:[%s0 + $0x34] sm:$0xf]
  %v25 = vld [vmem:[%s0 + $0x38] sm:$0xf]
  %v26 = vld [vmem:[%s0 + $0x3c] sm:$0xf]
  %v27 = vld [vmem:[%s0 + $0x40] sm:$0xf]
  %v28 = vld [vmem:[%s0 + $0x44] sm:$0xf]
  %v29 = vld [vmem:[%s0 + $0x48] sm:$0xf]
  %v30 = vld [vmem:[%s0 + $0x4c] sm:$0xf]
  %v31 = vld [vmem:[%s0 + $0x50] sm:$0xf]
  %v32 = vld [vmem:[%s0 + $0x54] sm:$0xf]
  %v33 = vld [vmem:[%s1] sm:$0xf]
  %v34 = vld [vmem:[%s1 + $0x4] sm:$0xf]
  %v35 = vld [vmem:[%s1 + $0x8] sm:$0xf]
  %v36 = vld [vmem:[%s1 + $0xc] sm:$0xf]
  %v37 = vld [vmem:[%s1 + $0x10] sm:$0xf]
  %v38 = vld [vmem:[%s1 + $0x14] sm:$0xf]
  %v39 = vld [vmem:[%s1 + $0x18] sm:$0xf]
  %v40 = vld [vmem:[%s1 + $0x1c] sm:$0xf]
  %v41 = vld [vmem:[%s1 + $0x20] sm:$0xf]
  %v42 = vld [vmem:[%s1 + $0x24] sm:$0xf]
  %v43 = vld [vmem:[%s1 + $0x28] sm:$0xf]
  %v44 = vld [vmem:[%s1 + $0x2c] sm:$0xf]
  %v45 = vld [vmem:[%s1 + $0x30] sm:$0xf]
  %v46 = vld [vmem:[%s1 + $0x34] sm:$0xf]
  %v47 = vld [vmem:[%s1 + $0x38] sm:$0xf]
  %v48 = vld [vmem:[%s1 + $0x3c] sm:$0xf]
  %v71 = vunpack.c.l.b16 %v11
  %v72 = vunpack.c.l.b16 %v12
  %v73 = vunpack.c.l.b16 %v13
  %v74 = vunpack.c.l.b16 %v14
  %v75 = vunpack.c.l.b16 %v15
  %v76 = vunpack.c.l.b16 %v16
  %v77 = vunpack.c.l.b16 %v17
  %v78 = vunpack.c.l.b16 %v18
  %v79 = vunpack.c.l.b16 %v19
  %v80 = vunpack.c.l.b16 %v20
  %v81 = vunpack.c.l.b16 %v21
  %v82 = vunpack.c.l.b16 %v22
  %v83 = vunpack.c.l.b16 %v23
  %v84 = vunpack.c.l.b16 %v24
  %v85 = vunpack.c.l.b16 %v25
  %v86 = vunpack.c.l.b16 %v26
  %v87 = vunpack.c.l.b16 %v27
  %v88 = vunpack.c.l.b16 %v28
  %v89 = vunpack.c.l.b16 %v29
  %v90 = vunpack.c.l.b16 %v30
  %v91 = vunpack.c.l.b16 %v31
  %v92 = vunpack.c.l.b16 %v32
  %v93 = vpack.c.b16 %v72, %v71
  %v94 = vpack.c.b16 %v74, %v73
  %v95 = vpack.c.b16 %v76, %v75
  %v96 = vpack.c.b16 %v78, %v77
  %v97 = vpack.c.b16 %v80, %v79
  %v98 = vpack.c.b16 %v82, %v81
  %v99 = vpack.c.b16 %v84, %v83
  %v100 = vpack.c.b16 %v86, %v85
  %v101 = vpack.c.b16 %v88, %v87
  %v102 = vpack.c.b16 %v90, %v89
  %v103 = vpack.c.b16 %v92, %v91
  %v131 = vunpack.c.l.b16 %v33
  %v132 = vunpack.c.l.b16 %v34
  %v133 = vunpack.c.l.b16 %v35
  %v134 = vunpack.c.l.b16 %v36
  %v135 = vunpack.c.l.b16 %v37
  %v136 = vunpack.c.l.b16 %v38
  %v137 = vunpack.c.l.b16 %v39
  %v138 = vunpack.c.l.b16 %v40
  %v139 = vunpack.c.l.b16 %v41
  %v140 = vunpack.c.l.b16 %v42
  %v141 = vunpack.c.l.b16 %v43
  %v142 = vunpack.c.l.b16 %v44
  %v143 = vunpack.c.l.b16 %v45
  %v144 = vunpack.c.l.b16 %v46
  %v145 = vunpack.c.l.b16 %v47
  %v146 = vunpack.c.l.b16 %v48
  %v147 = vpack.c.b16 %v132, %v131
  %v148 = vpack.c.b16 %v134, %v133
  %v149 = vpack.c.b16 %v136, %v135
  %v150 = vpack.c.b16 %v138, %v137
  %v151 = vpack.c.b16 %v140, %v139
  %v152 = vpack.c.b16 %v142, %v141
  %v153 = vpack.c.b16 %v144, %v143
  %v154 = vpack.c.b16 %v146, %v145
  %163 = vmatpush.bf16.msra.mxu0 %v154
  %164 = vmatpush.bf16.msra.mxu0 %v153
  %165 = vmatpush.bf16.msra.mxu0 %v152
  %166 = vmatpush.bf16.msra.mxu0 %v151
  %167 = vmatpush.bf16.msra.mxu0 %v150
  %168 = vmatpush.bf16.msra.mxu0 %v149
  %169 = vmatpush.bf16.msra.mxu0 %v148
  %170 = vmatpush.bf16.msra.mxu0 %v147
  %171 = vmatmul.bf16.gmra.mxu0 %v93
  %v172 = vpop.f32.mrf.mxu0
  %v173 = vadd.f32 0.0, %v172
  %v174 = vpop.f32.mrf.mxu0
  %v175 = vadd.f32 0.0, %v174
  %176 = vmatmul.bf16.gmra.mxu0 %v94
  %v177 = vpop.f32.mrf.mxu0
  %v178 = vadd.f32 0.0, %v177
  %v179 = vpop.f32.mrf.mxu0
  %v180 = vadd.f32 0.0, %v179
  %181 = vmatmul.bf16.gmra.mxu0 %v95
  %v182 = vpop.f32.mrf.mxu0
  %v183 = vadd.f32 0.0, %v182
  %v184 = vpop.f32.mrf.mxu0
  %v185 = vadd.f32 0.0, %v184
  %186 = vmatmul.bf16.gmra.mxu0 %v96
  %v187 = vpop.f32.mrf.mxu0
  %v188 = vadd.f32 0.0, %v187
  %v189 = vpop.f32.mrf.mxu0
  %v190 = vadd.f32 0.0, %v189
  %191 = vmatmul.bf16.gmra.mxu0 %v97
  %v192 = vpop.f32.mrf.mxu0
  %v193 = vadd.f32 0.0, %v192
  %v194 = vpop.f32.mrf.mxu0
  %v195 = vadd.f32 0.0, %v194
  %196 = vmatmul.bf16.gmra.mxu0 %v98
  %v197 = vpop.f32.mrf.mxu0
  %v198 = vadd.f32 0.0, %v197
  %v199 = vpop.f32.mrf.mxu0
  %v200 = vadd.f32 0.0, %v199
  %201 = vmatmul.bf16.gmra.mxu0 %v99
  %v202 = vpop.f32.mrf.mxu0
  %v203 = vadd.f32 0.0, %v202
  %v204 = vpop.f32.mrf.mxu0
  %v205 = vadd.f32 0.0, %v204
  %206 = vmatmul.bf16.gmra.mxu0 %v100
  %v207 = vpop.f32.mrf.mxu0
  %v208 = vadd.f32 0.0, %v207
  %v209 = vpop.f32.mrf.mxu0
  %v210 = vadd.f32 0.0, %v209
  %211 = vmatmul.bf16.gmra.mxu0 %v101
  %v212 = vpop.f32.mrf.mxu0
  %v213 = vadd.f32 0.0, %v212
  %v214 = vpop.f32.mrf.mxu0
  %v215 = vadd.f32 0.0, %v214
  %216 = vmatmul.bf16.gmra.mxu0 %v102
  %v217 = vpop.f32.mrf.mxu0
  %v218 = vadd.f32 0.0, %v217
  %v219 = vpop.f32.mrf.mxu0
  %v220 = vadd.f32 0.0, %v219
  %221 = vmatmul.bf16.gmra.mxu0 %v103
  %v222 = vpop.f32.mrf.mxu0
  %v223 = vadd.f32 0.0, %v222
  %v224 = vpop.f32.mrf.mxu0
  %v225 = vadd.f32 0.0, %v224
  %226 = vdwg.mxu0
  %v227 = vmax.f32 %v173, 0.0
  %v228 = vmax.f32 %v175, 0.0
  %v229 = vmax.f32 %v178, 0.0
  %v230 = vmax.f32 %v180, 0.0
  %v231 = vmax.f32 %v183, 0.0
  %v232 = vmax.f32 %v185, 0.0
  %v233 = vmax.f32 %v188, 0.0
  %v234 = vmax.f32 %v190, 0.0
  %v235 = vmax.f32 %v193, 0.0
  %v236 = vmax.f32 %v195, 0.0
  %v237 = vmax.f32 %v198, 0.0
  %v238 = vmax.f32 %v200, 0.0
  %v239 = vmax.f32 %v203, 0.0
  %v240 = vmax.f32 %v205, 0.0
  %v241 = vmax.f32 %v208, 0.0
  %v242 = vmax.f32 %v210, 0.0
  %v243 = vmax.f32 %v213, 0.0
  %v244 = vmax.f32 %v215, 0.0
  %v245 = vmax.f32 %v218, 0.0
  %v246 = vmax.f32 %v220, 0.0
  %v247 = vmax.f32 %v223, 0.0
  %v248 = vmax.f32 %v225, 0.0
  %v249 = vpack.c.bf16 %v227, %v227
  %v250 = vpack.c.bf16 %v228, %v228
  %v251 = vpack.c.bf16 %v229, %v229
  %v252 = vpack.c.bf16 %v230, %v230
  %v253 = vpack.c.bf16 %v231, %v231
  %v254 = vpack.c.bf16 %v232, %v232
  %v255 = vpack.c.bf16 %v233, %v233
  %v256 = vpack.c.bf16 %v234, %v234
  %v257 = vpack.c.bf16 %v235, %v235
  %v258 = vpack.c.bf16 %v236, %v236
  %v259 = vpack.c.bf16 %v237, %v237
  %v260 = vpack.c.bf16 %v238, %v238
  %v261 = vpack.c.bf16 %v239, %v239
  %v262 = vpack.c.bf16 %v240, %v240
  %v263 = vpack.c.bf16 %v241, %v241
  %v264 = vpack.c.bf16 %v242, %v242
  %v265 = vpack.c.bf16 %v243, %v243
  %v266 = vpack.c.bf16 %v244, %v244
  %v267 = vpack.c.bf16 %v245, %v245
  %v268 = vpack.c.bf16 %v246, %v246
  %v269 = vpack.c.bf16 %v247, %v247
  %v270 = vpack.c.bf16 %v248, %v248
  %271 = vst [vmem:[%s2] sm:$0xf] %v249
  %272 = vst [vmem:[%s2 + $0x4] sm:$0xf] %v250
  %273 = vst [vmem:[%s2 + $0x8] sm:$0xf] %v251
  %274 = vst [vmem:[%s2 + $0xc] sm:$0xf] %v252
  %275 = vst [vmem:[%s2 + $0x10] sm:$0xf] %v253
  %276 = vst [vmem:[%s2 + $0x14] sm:$0xf] %v254
  %277 = vst [vmem:[%s2 + $0x18] sm:$0xf] %v255
  %278 = vst [vmem:[%s2 + $0x1c] sm:$0xf] %v256
  %279 = vst [vmem:[%s2 + $0x20] sm:$0xf] %v257
  %280 = vst [vmem:[%s2 + $0x24] sm:$0xf] %v258
  %281 = vst [vmem:[%s2 + $0x28] sm:$0xf] %v259
  %282 = vst [vmem:[%s2 + $0x2c] sm:$0xf] %v260
  %283 = vst [vmem:[%s2 + $0x30] sm:$0xf] %v261
  %284 = vst [vmem:[%s2 + $0x34] sm:$0xf] %v262
  %285 = vst [vmem:[%s2 + $0x38] sm:$0xf] %v263
  %286 = vst [vmem:[%s2 + $0x3c] sm:$0xf] %v264
  %287 = vst [vmem:[%s2 + $0x40] sm:$0xf] %v265
  %288 = vst [vmem:[%s2 + $0x44] sm:$0xf] %v266
  %289 = vst [vmem:[%s2 + $0x48] sm:$0xf] %v267
  %290 = vst [vmem:[%s2 + $0x4c] sm:$0xf] %v268
  %291 = vst [vmem:[%s2 + $0x50] sm:$0xf] %v269
  %292 = vst [vmem:[%s2 + $0x54] sm:$0xf] %v270
  // Predicated region
  $region10: #{model_forward.17} parent=0 // pred_check
    _
  $region11: #{model_forward.17} parent=0 // pred_check_branch
    %294 = sbr.rel (0) target = $region13
  $region12: #{model_forward.17} parent=0 // pred_region
    _
  $region13: #{model_forward.17} parent=0 // pred_fallthru
    _
  // Predicated region
  $region14: #{model_forward.17} parent=0 // pred_check
    _
  $region15: #{model_forward.17} parent=0 // pred_check_branch
    %296 = sbr.rel (0) target = $region17
  $region16: #{model_forward.17} parent=0 // pred_region
    _
  $region17: #{model_forward.17} parent=0 // pred_fallthru
    _

// kernel: model_forward.18
$region0: #{model_forward.18}
  #allocation0 [shape = 'u32[]', space=smem, size = 0x4, offset = 0x4, fixed_abs, tag = 'smem constant byte address 0x4 - core index']
  #allocation1 [shape = 'u32[72,128]{1,0:T(1,128)}', space=vmem, size = 0x9000, scoped, tag = 'internal scratch']
  %s0 = inlined_call_operand.vmem [shape: bf16[176,640], index: 0, kind: input, shape index: {}]
  %s1 = inlined_call_operand.vmem [shape: bf16[640,128], index: 1, kind: input, shape index: {}]
  %s2 = inlined_call_operand.vmem [shape: bf16[176,128], index: 2, kind: output, shape index: {}]
  %s3 = sld [smem:[#allocation0]]
  $region18: #{model_forward.18} parent=0
    _
  %s5 = ssub.s32 1, %s3
  %s6 = scalar_select 0, %s5, %s3
  // Predicated region
  $region2: #{model_forward.18} parent=0 // pred_check
    _
  $region3: #{model_forward.18} parent=0 // pred_check_branch
    %8 = sbr.rel (0) target = $region5
  $region4: #{model_forward.18} parent=0 // pred_region
    _
  $region5: #{model_forward.18} parent=0 // pred_fallthru
    _
  // Predicated region
  $region6: #{model_forward.18} parent=0 // pred_check
    _
  $region7: #{model_forward.18} parent=0 // pred_check_branch
    %10 = sbr.rel (0) target = $region9
  $region8: #{model_forward.18} parent=0 // pred_region
    _
  $region9: #{model_forward.18} parent=0 // pred_fallthru
    _
  %v11 = vld [vmem:[%s0] sm:$0xff]
  %v12 = vld [vmem:[%s0 + $0x8] sm:$0xff]
  %v13 = vld [vmem:[%s0 + $0x10] sm:$0xf]
  %v14 = vld [vmem:[%s0 + $0x14] sm:$0xff]
  %v15 = vld [vmem:[%s0 + $0x1c] sm:$0xff]
  %v16 = vld [vmem:[%s0 + $0x24] sm:$0xf]
  %v17 = vld [vmem:[%s0 + $0x28] sm:$0xff]
  %v18 = vld [vmem:[%s0 + $0x30] sm:$0xff]
  %v19 = vld [vmem:[%s0 + $0x38] sm:$0xf]
  %v20 = vld [vmem:[%s0 + $0x3c] sm:$0xff]
  %v21 = vld [vmem:[%s0 + $0x44] sm:$0xff]
  %v22 = vld [vmem:[%s0 + $0x4c] sm:$0xf]
  %v23 = vld [vmem:[%s0 + $0x50] sm:$0xff]
  %v24 = vld [vmem:[%s0 + $0x58] sm:$0xff]
  %v25 = vld [vmem:[%s0 + $0x60] sm:$0xf]
  %v26 = vld [vmem:[%s0 + $0x64] sm:$0xff]
  %v27 = vld [vmem:[%s0 + $0x6c] sm:$0xff]
  %v28 = vld [vmem:[%s0 + $0x74] sm:$0xf]
  %v29 = vld [vmem:[%s0 + $0x78] sm:$0xff]
  %v30 = vld [vmem:[%s0 + $0x80] sm:$0xff]
  %v31 = vld [vmem:[%s0 + $0x88] sm:$0xf]
  %v32 = vld [vmem:[%s0 + $0x8c] sm:$0xff]
  %v33 = vld [vmem:[%s0 + $0x94] sm:$0xff]
  %v34 = vld [vmem:[%s0 + $0x9c] sm:$0xf]
  %v35 = vld [vmem:[%s0 + $0xa0] sm:$0xff]
  %v36 = vld [vmem:[%s0 + $0xa8] sm:$0xff]
  %v37 = vld [vmem:[%s0 + $0xb0] sm:$0xf]
  %v38 = vld [vmem:[%s0 + $0xb4] sm:$0xff]
  %v39 = vld [vmem:[%s0 + $0xbc] sm:$0xff]
  %v40 = vld [vmem:[%s0 + $0xc4] sm:$0xf]
  %v41 = vld [vmem:[%s0 + $0xc8] sm:$0xff]
  %v42 = vld [vmem:[%s0 + $0xd0] sm:$0xff]
  %v43 = vld [vmem:[%s0 + $0xd8] sm:$0xf]
  %v44 = vld [vmem:[%s0 + $0xdc] sm:$0xff]
  %v45 = vld [vmem:[%s0 + $0xe4] sm:$0xff]
  %v46 = vld [vmem:[%s0 + $0xec] sm:$0xf]
  %v47 = vld [vmem:[%s0 + $0xf0] sm:$0xff]
  %v48 = vld [vmem:[%s0 + $0xf8] sm:$0xff]
  %v49 = vld [vmem:[%s0 + $0x100] sm:$0xf]
  %v50 = vld [vmem:[%s0 + $0x104] sm:$0xff]
  %v51 = vld [vmem:[%s0 + $0x10c] sm:$0xff]
  %v52 = vld [vmem:[%s0 + $0x114] sm:$0xf]
  %v53 = vld [vmem:[%s0 + $0x118] sm:$0xff]
  %v54 = vld [vmem:[%s0 + $0x120] sm:$0xff]
  %v55 = vld [vmem:[%s0 + $0x128] sm:$0xf]
  %v56 = vld [vmem:[%s0 + $0x12c] sm:$0xff]
  %v57 = vld [vmem:[%s0 + $0x134] sm:$0xff]
  %v58 = vld [vmem:[%s0 + $0x13c] sm:$0xf]
  %v59 = vld [vmem:[%s0 + $0x140] sm:$0xff]
  %v60 = vld [vmem:[%s0 + $0x148] sm:$0xff]
  %v61 = vld [vmem:[%s0 + $0x150] sm:$0xf]
  %v62 = vld [vmem:[%s0 + $0x154] sm:$0xff]
  %v63 = vld [vmem:[%s0 + $0x15c] sm:$0xff]
  %v64 = vld [vmem:[%s0 + $0x164] sm:$0xf]
  %v65 = vld [vmem:[%s0 + $0x168] sm:$0xff]
  %v66 = vld [vmem:[%s0 + $0x170] sm:$0xff]
  %v67 = vld [vmem:[%s0 + $0x178] sm:$0xf]
  %v68 = vld [vmem:[%s0 + $0x17c] sm:$0xff]
  %v69 = vld [vmem:[%s0 + $0x184] sm:$0xff]
  %v70 = vld [vmem:[%s0 + $0x18c] sm:$0xf]
  %v71 = vld [vmem:[%s0 + $0x190] sm:$0xff]
  %v72 = vld [vmem:[%s0 + $0x198] sm:$0xff]
  %v73 = vld [vmem:[%s0 + $0x1a0] sm:$0xf]
  %v74 = vld [vmem:[%s0 + $0x1a4] sm:$0xff]
  %v75 = vld [vmem:[%s0 + $0x1ac] sm:$0xff]
  %v76 = vld [vmem:[%s0 + $0x1b4] sm:$0xf]
  %v77 = vld [vmem:[%s1] sm:$0xf]
  %v78 = vld [vmem:[%s1 + $0x4] sm:$0xf]
  %v79 = vld [vmem:[%s1 + $0x8] sm:$0xf]
  %v80 = vld [vmem:[%s1 + $0xc] sm:$0xf]
  %v81 = vld [vmem:[%s1 + $0x10] sm:$0xf]
  %v82 = vld [vmem:[%s1 + $0x14] sm:$0xf]
  %v83 = vld [vmem:[%s1 + $0x18] sm:$0xf]
  %v84 = vld [vmem:[%s1 + $0x1c] sm:$0xf]
  %v85 = vld [vmem:[%s1 + $0x20] sm:$0xf]
  %v86 = vld [vmem:[%s1 + $0x24] sm:$0xf]
  %v87 = vld [vmem:[%s1 + $0x28] sm:$0xf]
  %v88 = vld [vmem:[%s1 + $0x2c] sm:$0xf]
  %v89 = vld [vmem:[%s1 + $0x30] sm:$0xf]
  %v90 = vld [vmem:[%s1 + $0x34] sm:$0xf]
  %v91 = vld [vmem:[%s1 + $0x38] sm:$0xf]
  %v92 = vld [vmem:[%s1 + $0x3c] sm:$0xf]
  %v93 = vld [vmem:[%s1 + $0x40] sm:$0xf]
  %v94 = vld [vmem:[%s1 + $0x44] sm:$0xf]
  %v95 = vld [vmem:[%s1 + $0x48] sm:$0xf]
  %v96 = vld [vmem:[%s1 + $0x4c] sm:$0xf]
  %v97 = vld [vmem:[%s1 + $0x50] sm:$0xf]
  %v98 = vld [vmem:[%s1 + $0x54] sm:$0xf]
  %v99 = vld [vmem:[%s1 + $0x58] sm:$0xf]
  %v100 = vld [vmem:[%s1 + $0x5c] sm:$0xf]
  %v101 = vld [vmem:[%s1 + $0x60] sm:$0xf]
  %v102 = vld [vmem:[%s1 + $0x64] sm:$0xf]
  %v103 = vld [vmem:[%s1 + $0x68] sm:$0xf]
  %v104 = vld [vmem:[%s1 + $0x6c] sm:$0xf]
  %v105 = vld [vmem:[%s1 + $0x70] sm:$0xf]
  %v106 = vld [vmem:[%s1 + $0x74] sm:$0xf]
  %v107 = vld [vmem:[%s1 + $0x78] sm:$0xf]
  %v108 = vld [vmem:[%s1 + $0x7c] sm:$0xf]
  %v109 = vld [vmem:[%s1 + $0x80] sm:$0xf]
  %v110 = vld [vmem:[%s1 + $0x84] sm:$0xf]
  %v111 = vld [vmem:[%s1 + $0x88] sm:$0xf]
  %v112 = vld [vmem:[%s1 + $0x8c] sm:$0xf]
  %v113 = vld [vmem:[%s1 + $0x90] sm:$0xf]
  %v114 = vld [vmem:[%s1 + $0x94] sm:$0xf]
  %v115 = vld [vmem:[%s1 + $0x98] sm:$0xf]
  %v116 = vld [vmem:[%s1 + $0x9c] sm:$0xf]
  %v117 = vld [vmem:[%s1 + $0xa0] sm:$0xf]
  %v118 = vld [vmem:[%s1 + $0xa4] sm:$0xf]
  %v119 = vld [vmem:[%s1 + $0xa8] sm:$0xf]
  %v120 = vld [vmem:[%s1 + $0xac] sm:$0xf]
  %v121 = vld [vmem:[%s1 + $0xb0] sm:$0xf]
  %v122 = vld [vmem:[%s1 + $0xb4] sm:$0xf]
  %v123 = vld [vmem:[%s1 + $0xb8] sm:$0xf]
  %v124 = vld [vmem:[%s1 + $0xbc] sm:$0xf]
  %v125 = vld [vmem:[%s1 + $0xc0] sm:$0xf]
  %v126 = vld [vmem:[%s1 + $0xc4] sm:$0xf]
  %v127 = vld [vmem:[%s1 + $0xc8] sm:$0xf]
  %v128 = vld [vmem:[%s1 + $0xcc] sm:$0xf]
  %v129 = vld [vmem:[%s1 + $0xd0] sm:$0xf]
  %v130 = vld [vmem:[%s1 + $0xd4] sm:$0xf]
  %v131 = vld [vmem:[%s1 + $0xd8] sm:$0xf]
  %v132 = vld [vmem:[%s1 + $0xdc] sm:$0xf]
  %v133 = vld [vmem:[%s1 + $0xe0] sm:$0xf]
  %v134 = vld [vmem:[%s1 + $0xe4] sm:$0xf]
  %v135 = vld [vmem:[%s1 + $0xe8] sm:$0xf]
  %v136 = vld [vmem:[%s1 + $0xec] sm:$0xf]
  %v137 = vld [vmem:[%s1 + $0xf0] sm:$0xf]
  %v138 = vld [vmem:[%s1 + $0xf4] sm:$0xf]
  %v139 = vld [vmem:[%s1 + $0xf8] sm:$0xf]
  %v140 = vld [vmem:[%s1 + $0xfc] sm:$0xf]
  %v141 = vld [vmem:[%s1 + $0x100] sm:$0xf]
  %v142 = vld [vmem:[%s1 + $0x104] sm:$0xf]
  %v143 = vld [vmem:[%s1 + $0x108] sm:$0xf]
  %v144 = vld [vmem:[%s1 + $0x10c] sm:$0xf]
  %v145 = vld [vmem:[%s1 + $0x110] sm:$0xf]
  %v146 = vld [vmem:[%s1 + $0x114] sm:$0xf]
  %v147 = vld [vmem:[%s1 + $0x118] sm:$0xf]
  %v148 = vld [vmem:[%s1 + $0x11c] sm:$0xf]
  %v149 = vld [vmem:[%s1 + $0x120] sm:$0xf]
  %v150 = vld [vmem:[%s1 + $0x124] sm:$0xf]
  %v151 = vld [vmem:[%s1 + $0x128] sm:$0xf]
  %v152 = vld [vmem:[%s1 + $0x12c] sm:$0xf]
  %v153 = vld [vmem:[%s1 + $0x130] sm:$0xf]
  %v154 = vld [vmem:[%s1 + $0x134] sm:$0xf]
  %v155 = vld [vmem:[%s1 + $0x138] sm:$0xf]
  %v156 = vld [vmem:[%s1 + $0x13c] sm:$0xf]
  %v223 = vunpack.c.l.b16 %v11
  %v224 = vunpack.c.h.b16 %v11
  %v225 = vunpack.c.l.b16 %v12
  %v226 = vunpack.c.h.b16 %v12
  %v227 = vunpack.c.l.b16 %v13
  %v228 = vunpack.c.l.b16 %v14
  %v229 = vunpack.c.h.b16 %v14
  %v230 = vunpack.c.l.b16 %v15
  %v231 = vunpack.c.h.b16 %v15
  %v232 = vunpack.c.l.b16 %v16
  %v233 = vunpack.c.l.b16 %v17
  %v234 = vunpack.c.h.b16 %v17
  %v235 = vunpack.c.l.b16 %v18
  %v236 = vunpack.c.h.b16 %v18
  %v237 = vunpack.c.l.b16 %v19
  %v238 = vunpack.c.l.b16 %v20
  %v239 = vunpack.c.h.b16 %v20
  %v240 = vunpack.c.l.b16 %v21
  %v241 = vunpack.c.h.b16 %v21
  %v242 = vunpack.c.l.b16 %v22
  %v243 = vunpack.c.l.b16 %v23
  %v244 = vunpack.c.h.b16 %v23
  %v245 = vunpack.c.l.b16 %v24
  %v246 = vunpack.c.h.b16 %v24
  %v247 = vunpack.c.l.b16 %v25
  %v248 = vunpack.c.l.b16 %v26
  %v249 = vunpack.c.h.b16 %v26
  %v250 = vunpack.c.l.b16 %v27
  %v251 = vunpack.c.h.b16 %v27
  %v252 = vunpack.c.l.b16 %v28
  %v253 = vunpack.c.l.b16 %v29
  %v254 = vunpack.c.h.b16 %v29
  %v255 = vunpack.c.l.b16 %v30
  %v256 = vunpack.c.h.b16 %v30
  %v257 = vunpack.c.l.b16 %v31
  %v258 = vunpack.c.l.b16 %v32
  %v259 = vunpack.c.h.b16 %v32
  %v260 = vunpack.c.l.b16 %v33
  %v261 = vunpack.c.h.b16 %v33
  %v262 = vunpack.c.l.b16 %v34
  %v263 = vunpack.c.l.b16 %v35
  %v264 = vunpack.c.h.b16 %v35
  %v265 = vunpack.c.l.b16 %v36
  %v266 = vunpack.c.h.b16 %v36
  %v267 = vunpack.c.l.b16 %v37
  %v268 = vunpack.c.l.b16 %v38
  %v269 = vunpack.c.h.b16 %v38
  %v270 = vunpack.c.l.b16 %v39
  %v271 = vunpack.c.h.b16 %v39
  %v272 = vunpack.c.l.b16 %v40
  %v273 = vunpack.c.l.b16 %v41
  %v274 = vunpack.c.h.b16 %v41
  %v275 = vunpack.c.l.b16 %v42
  %v276 = vunpack.c.h.b16 %v42
  %v277 = vunpack.c.l.b16 %v43
  %v278 = vunpack.c.l.b16 %v44
  %v279 = vunpack.c.h.b16 %v44
  %v280 = vunpack.c.l.b16 %v45
  %v281 = vunpack.c.h.b16 %v45
  %v282 = vunpack.c.l.b16 %v46
  %v283 = vunpack.c.l.b16 %v47
  %v284 = vunpack.c.h.b16 %v47
  %v285 = vunpack.c.l.b16 %v48
  %v286 = vunpack.c.h.b16 %v48
  %v287 = vunpack.c.l.b16 %v49
  %v288 = vunpack.c.l.b16 %v50
  %v289 = vunpack.c.h.b16 %v50
  %v290 = vunpack.c.l.b16 %v51
  %v291 = vunpack.c.h.b16 %v51
  %v292 = vunpack.c.l.b16 %v52
  %v293 = vunpack.c.l.b16 %v53
  %v294 = vunpack.c.h.b16 %v53
  %v295 = vunpack.c.l.b16 %v54
  %v296 = vunpack.c.h.b16 %v54
  %v297 = vunpack.c.l.b16 %v55
  %v298 = vunpack.c.l.b16 %v56
  %v299 = vunpack.c.h.b16 %v56
  %v300 = vunpack.c.l.b16 %v57
  %v301 = vunpack.c.h.b16 %v57
  %v302 = vunpack.c.l.b16 %v58
  %v303 = vunpack.c.l.b16 %v59
  %v304 = vunpack.c.h.b16 %v59
  %v305 = vunpack.c.l.b16 %v60
  %v306 = vunpack.c.h.b16 %v60
  %v307 = vunpack.c.l.b16 %v61
  %v308 = vunpack.c.l.b16 %v62
  %v309 = vunpack.c.h.b16 %v62
  %v310 = vunpack.c.l.b16 %v63
  %v311 = vunpack.c.h.b16 %v63
  %v312 = vunpack.c.l.b16 %v64
  %v313 = vunpack.c.l.b16 %v65
  %v314 = vunpack.c.h.b16 %v65
  %v315 = vunpack.c.l.b16 %v66
  %v316 = vunpack.c.h.b16 %v66
  %v317 = vunpack.c.l.b16 %v67
  %v318 = vunpack.c.l.b16 %v68
  %v319 = vunpack.c.h.b16 %v68
  %v320 = vunpack.c.l.b16 %v69
  %v321 = vunpack.c.h.b16 %v69
  %v322 = vunpack.c.l.b16 %v70
  %v323 = vunpack.c.l.b16 %v71
  %v324 = vunpack.c.h.b16 %v71
  %v325 = vunpack.c.l.b16 %v72
  %v326 = vunpack.c.h.b16 %v72
  %v327 = vunpack.c.l.b16 %v73
  %v328 = vunpack.c.l.b16 %v74
  %v329 = vunpack.c.h.b16 %v74
  %v330 = vunpack.c.l.b16 %v75
  %v331 = vunpack.c.h.b16 %v75
  %v332 = vunpack.c.l.b16 %v76
  %v333 = vpack.c.b16 %v228, %v223
  %v334 = vpack.c.b16 %v229, %v224
  %v335 = vpack.c.b16 %v230, %v225
  %v336 = vpack.c.b16 %v231, %v226
  %v337 = vpack.c.b16 %v232, %v227
  %v338 = vpack.c.b16 %v238, %v233
  %v339 = vpack.c.b16 %v239, %v234
  %v340 = vpack.c.b16 %v240, %v235
  %v341 = vpack.c.b16 %v241, %v236
  %v342 = vpack.c.b16 %v242, %v237
  %v343 = vpack.c.b16 %v248, %v243
  %v344 = vpack.c.b16 %v249, %v244
  %v345 = vpack.c.b16 %v250, %v245
  %v346 = vpack.c.b16 %v251, %v246
  %v347 = vpack.c.b16 %v252, %v247
  %v348 = vpack.c.b16 %v258, %v253
  %v349 = vpack.c.b16 %v259, %v254
  %v350 = vpack.c.b16 %v260, %v255
  %v351 = vpack.c.b16 %v261, %v256
  %v352 = vpack.c.b16 %v262, %v257
  %v353 = vpack.c.b16 %v268, %v263
  %v354 = vpack.c.b16 %v269, %v264
  %v355 = vpack.c.b16 %v270, %v265
  %v356 = vpack.c.b16 %v271, %v266
  %v357 = vpack.c.b16 %v272, %v267
  %v358 = vpack.c.b16 %v278, %v273
  %v359 = vpack.c.b16 %v279, %v274
  %v360 = vpack.c.b16 %v280, %v275
  %v361 = vpack.c.b16 %v281, %v276
  %v362 = vpack.c.b16 %v282, %v277
  %v363 = vpack.c.b16 %v288, %v283
  %v364 = vpack.c.b16 %v289, %v284
  %v365 = vpack.c.b16 %v290, %v285
  %v366 = vpack.c.b16 %v291, %v286
  %v367 = vpack.c.b16 %v292, %v287
  %v368 = vpack.c.b16 %v298, %v293
  %v369 = vpack.c.b16 %v299, %v294
  %v370 = vpack.c.b16 %v300, %v295
  %v371 = vpack.c.b16 %v301, %v296
  %v372 = vpack.c.b16 %v302, %v297
  %v373 = vpack.c.b16 %v308, %v303
  %v374 = vpack.c.b16 %v309, %v304
  %v375 = vpack.c.b16 %v310, %v305
  %v376 = vpack.c.b16 %v311, %v306
  %v377 = vpack.c.b16 %v312, %v307
  %v378 = vpack.c.b16 %v318, %v313
  %v379 = vpack.c.b16 %v319, %v314
  %v380 = vpack.c.b16 %v320, %v315
  %v381 = vpack.c.b16 %v321, %v316
  %v382 = vpack.c.b16 %v322, %v317
  %v383 = vpack.c.b16 %v328, %v323
  %v384 = vpack.c.b16 %v329, %v324
  %v385 = vpack.c.b16 %v330, %v325
  %v386 = vpack.c.b16 %v331, %v326
  %v387 = vpack.c.b16 %v332, %v327
  %v523 = vunpack.c.l.b16 %v77
  %v524 = vunpack.c.l.b16 %v78
  %v525 = vunpack.c.l.b16 %v79
  %v526 = vunpack.c.l.b16 %v80
  %v527 = vunpack.c.l.b16 %v81
  %v528 = vunpack.c.l.b16 %v82
  %v529 = vunpack.c.l.b16 %v83
  %v530 = vunpack.c.l.b16 %v84
  %v531 = vunpack.c.l.b16 %v85
  %v532 = vunpack.c.l.b16 %v86
  %v533 = vunpack.c.l.b16 %v87
  %v534 = vunpack.c.l.b16 %v88
  %v535 = vunpack.c.l.b16 %v89
  %v536 = vunpack.c.l.b16 %v90
  %v537 = vunpack.c.l.b16 %v91
  %v538 = vunpack.c.l.b16 %v92
  %v539 = vunpack.c.l.b16 %v93
  %v540 = vunpack.c.l.b16 %v94
  %v541 = vunpack.c.l.b16 %v95
  %v542 = vunpack.c.l.b16 %v96
  %v543 = vunpack.c.l.b16 %v97
  %v544 = vunpack.c.l.b16 %v98
  %v545 = vunpack.c.l.b16 %v99
  %v546 = vunpack.c.l.b16 %v100
  %v547 = vunpack.c.l.b16 %v101
  %v548 = vunpack.c.l.b16 %v102
  %v549 = vunpack.c.l.b16 %v103
  %v550 = vunpack.c.l.b16 %v104
  %v551 = vunpack.c.l.b16 %v105
  %v552 = vunpack.c.l.b16 %v106
  %v553 = vunpack.c.l.b16 %v107
  %v554 = vunpack.c.l.b16 %v108
  %v555 = vunpack.c.l.b16 %v109
  %v556 = vunpack.c.l.b16 %v110
  %v557 = vunpack.c.l.b16 %v111
  %v558 = vunpack.c.l.b16 %v112
  %v559 = vunpack.c.l.b16 %v113
  %v560 = vunpack.c.l.b16 %v114
  %v561 = vunpack.c.l.b16 %v115
  %v562 = vunpack.c.l.b16 %v116
  %v563 = vunpack.c.l.b16 %v117
  %v564 = vunpack.c.l.b16 %v118
  %v565 = vunpack.c.l.b16 %v119
  %v566 = vunpack.c.l.b16 %v120
  %v567 = vunpack.c.l.b16 %v121
  %v568 = vunpack.c.l.b16 %v122
  %v569 = vunpack.c.l.b16 %v123
  %v570 = vunpack.c.l.b16 %v124
  %v571 = vunpack.c.l.b16 %v125
  %v572 = vunpack.c.l.b16 %v126
  %v573 = vunpack.c.l.b16 %v127
  %v574 = vunpack.c.l.b16 %v128
  %v575 = vunpack.c.l.b16 %v129
  %v576 = vunpack.c.l.b16 %v130
  %v577 = vunpack.c.l.b16 %v131
  %v578 = vunpack.c.l.b16 %v132
  %v579 = vunpack.c.l.b16 %v133
  %v580 = vunpack.c.l.b16 %v134
  %v581 = vunpack.c.l.b16 %v135
  %v582 = vunpack.c.l.b16 %v136
  %v583 = vunpack.c.l.b16 %v137
  %v584 = vunpack.c.l.b16 %v138
  %v585 = vunpack.c.l.b16 %v139
  %v586 = vunpack.c.l.b16 %v140
  %v587 = vunpack.c.l.b16 %v141
  %v588 = vunpack.c.l.b16 %v142
  %v589 = vunpack.c.l.b16 %v143
  %v590 = vunpack.c.l.b16 %v144
  %v591 = vunpack.c.l.b16 %v145
  %v592 = vunpack.c.l.b16 %v146
  %v593 = vunpack.c.l.b16 %v147
  %v594 = vunpack.c.l.b16 %v148
  %v595 = vunpack.c.l.b16 %v149
  %v596 = vunpack.c.l.b16 %v150
  %v597 = vunpack.c.l.b16 %v151
  %v598 = vunpack.c.l.b16 %v152
  %v599 = vunpack.c.l.b16 %v153
  %v600 = vunpack.c.l.b16 %v154
  %v601 = vunpack.c.l.b16 %v155
  %v602 = vunpack.c.l.b16 %v156
  %v603 = vpack.c.b16 %v524, %v523
  %v604 = vpack.c.b16 %v526, %v525
  %v605 = vpack.c.b16 %v528, %v527
  %v606 = vpack.c.b16 %v530, %v529
  %v607 = vpack.c.b16 %v532, %v531
  %v608 = vpack.c.b16 %v534, %v533
  %v609 = vpack.c.b16 %v536, %v535
  %v610 = vpack.c.b16 %v538, %v537
  %v611 = vpack.c.b16 %v540, %v539
  %v612 = vpack.c.b16 %v542, %v541
  %v613 = vpack.c.b16 %v544, %v543
  %v614 = vpack.c.b16 %v546, %v545
  %v615 = vpack.c.b16 %v548, %v547
  %v616 = vpack.c.b16 %v550, %v549
  %v617 = vpack.c.b16 %v552, %v551
  %v618 = vpack.c.b16 %v554, %v553
  %v619 = vpack.c.b16 %v556, %v555
  %v620 = vpack.c.b16 %v558, %v557
  %v621 = vpack.c.b16 %v560, %v559
  %v622 = vpack.c.b16 %v562, %v561
  %v623 = vpack.c.b16 %v564, %v563
  %v624 = vpack.c.b16 %v566, %v565
  %v625 = vpack.c.b16 %v568, %v567
  %v626 = vpack.c.b16 %v570, %v569
  %v627 = vpack.c.b16 %v572, %v571
  %v628 = vpack.c.b16 %v574, %v573
  %v629 = vpack.c.b16 %v576, %v575
  %v630 = vpack.c.b16 %v578, %v577
  %v631 = vpack.c.b16 %v580, %v579
  %v632 = vpack.c.b16 %v582, %v581
  %v633 = vpack.c.b16 %v584, %v583
  %v634 = vpack.c.b16 %v586, %v585
  %v635 = vpack.c.b16 %v588, %v587
  %v636 = vpack.c.b16 %v590, %v589
  %v637 = vpack.c.b16 %v592, %v591
  %v638 = vpack.c.b16 %v594, %v593
  %v639 = vpack.c.b16 %v596, %v595
  %v640 = vpack.c.b16 %v598, %v597
  %v641 = vpack.c.b16 %v600, %v599
  %v642 = vpack.c.b16 %v602, %v601
  %683 = vmatpush.bf16.msra.mxu0 %v610
  %684 = vmatpush.bf16.msra.mxu0 %v609
  %685 = vmatpush.bf16.msra.mxu0 %v608
  %686 = vmatpush.bf16.msra.mxu0 %v607
  %687 = vmatpush.bf16.msra.mxu0 %v606
  %688 = vmatpush.bf16.msra.mxu0 %v605
  %689 = vmatpush.bf16.msra.mxu0 %v604
  %690 = vmatpush.bf16.msra.mxu0 %v603
  %691 = vmatmul.bf16.gmra.mxu0 %v333
  %v692 = vpop.f32.mrf.mxu0
  %v693 = vadd.f32 0.0, %v692
  %v694 = vpop.f32.mrf.mxu0
  %v695 = vadd.f32 0.0, %v694
  %696 = vmatmul.bf16.gmra.mxu0 %v338
  %v697 = vpop.f32.mrf.mxu0
  %v698 = vadd.f32 0.0, %v697
  %v699 = vpop.f32.mrf.mxu0
  %v700 = vadd.f32 0.0, %v699
  %701 = vmatmul.bf16.gmra.mxu0 %v343
  %v702 = vpop.f32.mrf.mxu0
  %v703 = vadd.f32 0.0, %v702
  %v704 = vpop.f32.mrf.mxu0
  %v705 = vadd.f32 0.0, %v704
  %706 = vmatmul.bf16.gmra.mxu0 %v348
  %v707 = vpop.f32.mrf.mxu0
  %v708 = vadd.f32 0.0, %v707
  %v709 = vpop.f32.mrf.mxu0
  %v710 = vadd.f32 0.0, %v709
  %711 = vmatmul.bf16.gmra.mxu0 %v353
  %v712 = vpop.f32.mrf.mxu0
  %v713 = vadd.f32 0.0, %v712
  %v714 = vpop.f32.mrf.mxu0
  %v715 = vadd.f32 0.0, %v714
  %716 = vmatmul.bf16.gmra.mxu0 %v358
  %v717 = vpop.f32.mrf.mxu0
  %v718 = vadd.f32 0.0, %v717
  %v719 = vpop.f32.mrf.mxu0
  %v720 = vadd.f32 0.0, %v719
  %721 = vmatmul.bf16.gmra.mxu0 %v363
  %v722 = vpop.f32.mrf.mxu0
  %v723 = vadd.f32 0.0, %v722
  %v724 = vpop.f32.mrf.mxu0
  %v725 = vadd.f32 0.0, %v724
  %726 = vmatmul.bf16.gmra.mxu0 %v368
  %v727 = vpop.f32.mrf.mxu0
  %v728 = vadd.f32 0.0, %v727
  %v729 = vpop.f32.mrf.mxu0
  %v730 = vadd.f32 0.0, %v729
  %731 = vmatmul.bf16.gmra.mxu0 %v373
  %v732 = vpop.f32.mrf.mxu0
  %v733 = vadd.f32 0.0, %v732
  %v734 = vpop.f32.mrf.mxu0
  %v735 = vadd.f32 0.0, %v734
  %736 = vmatmul.bf16.gmra.mxu0 %v378
  %v737 = vpop.f32.mrf.mxu0
  %v738 = vadd.f32 0.0, %v737
  %v739 = vpop.f32.mrf.mxu0
  %v740 = vadd.f32 0.0, %v739
  %741 = vmatmul.bf16.gmra.mxu0 %v383
  %v742 = vpop.f32.mrf.mxu0
  %v743 = vadd.f32 0.0, %v742
  %v744 = vpop.f32.mrf.mxu0
  %v745 = vadd.f32 0.0, %v744
  %746 = vdwg.mxu0
  %747 = vmatpush.bf16.msra.mxu0 %v618
  %748 = vmatpush.bf16.msra.mxu0 %v617
  %749 = vmatpush.bf16.msra.mxu0 %v616
  %750 = vmatpush.bf16.msra.mxu0 %v615
  %751 = vmatpush.bf16.msra.mxu0 %v614
  %752 = vmatpush.bf16.msra.mxu0 %v613
  %753 = vmatpush.bf16.msra.mxu0 %v612
  %754 = vmatpush.bf16.msra.mxu0 %v611
  %755 = vmatmul.bf16.gmra.mxu0 %v334
  %v756 = vpop.f32.mrf.mxu0
  %v757 = vadd.f32 %v693, %v756
  %v758 = vpop.f32.mrf.mxu0
  %v759 = vadd.f32 %v695, %v758
  %760 = vmatmul.bf16.gmra.mxu0 %v339
  %v761 = vpop.f32.mrf.mxu0
  %v762 = vadd.f32 %v698, %v761
  %v763 = vpop.f32.mrf.mxu0
  %v764 = vadd.f32 %v700, %v763
  %765 = vmatmul.bf16.gmra.mxu0 %v344
  %v766 = vpop.f32.mrf.mxu0
  %v767 = vadd.f32 %v703, %v766
  %v768 = vpop.f32.mrf.mxu0
  %v769 = vadd.f32 %v705, %v768
  %770 = vmatmul.bf16.gmra.mxu0 %v349
  %v771 = vpop.f32.mrf.mxu0
  %v772 = vadd.f32 %v708, %v771
  %v773 = vpop.f32.mrf.mxu0
  %v774 = vadd.f32 %v710, %v773
  %775 = vmatmul.bf16.gmra.mxu0 %v354
  %v776 = vpop.f32.mrf.mxu0
  %v777 = vadd.f32 %v713, %v776
  %v778 = vpop.f32.mrf.mxu0
  %v779 = vadd.f32 %v715, %v778
  %780 = vmatmul.bf16.gmra.mxu0 %v359
  %v781 = vpop.f32.mrf.mxu0
  %v782 = vadd.f32 %v718, %v781
  %v783 = vpop.f32.mrf.mxu0
  %v784 = vadd.f32 %v720, %v783
  %785 = vmatmul.bf16.gmra.mxu0 %v364
  %v786 = vpop.f32.mrf.mxu0
  %v787 = vadd.f32 %v723, %v786
  %v788 = vpop.f32.mrf.mxu0
  %v789 = vadd.f32 %v725, %v788
  %790 = vmatmul.bf16.gmra.mxu0 %v369
  %v791 = vpop.f32.mrf.mxu0
  %v792 = vadd.f32 %v728, %v791
  %v793 = vpop.f32.mrf.mxu0
  %v794 = vadd.f32 %v730, %v793
  %795 = vmatmul.bf16.gmra.mxu0 %v374
  %v796 = vpop.f32.mrf.mxu0
  %v797 = vadd.f32 %v733, %v796
  %v798 = vpop.f32.mrf.mxu0
  %v799 = vadd.f32 %v735, %v798
  %800 = vmatmul.bf16.gmra.mxu0 %v379
  %v801 = vpop.f32.mrf.mxu0
  %v802 = vadd.f32 %v738, %v801
  %v803 = vpop.f32.mrf.mxu0
  %v804 = vadd.f32 %v740, %v803
  %805 = vmatmul.bf16.gmra.mxu0 %v384
  %v806 = vpop.f32.mrf.mxu0
  %v807 = vadd.f32 %v743, %v806
  %v808 = vpop.f32.mrf.mxu0
  %v809 = vadd.f32 %v745, %v808
  %810 = vdwg.mxu0
  %811 = vmatpush.bf16.msra.mxu0 %v626
  %812 = vmatpush.bf16.msra.mxu0 %v625
  %813 = vmatpush.bf16.msra.mxu0 %v624
  %814 = vmatpush.bf16.msra.mxu0 %v623
  %815 = vmatpush.bf16.msra.mxu0 %v622
  %816 = vmatpush.bf16.msra.mxu0 %v621
  %817 = vmatpush.bf16.msra.mxu0 %v620
  %818 = vmatpush.bf16.msra.mxu0 %v619
  %819 = vmatmul.bf16.gmra.mxu0 %v335
  %v820 = vpop.f32.mrf.mxu0
  %v821 = vadd.f32 %v757, %v820
  %v822 = vpop.f32.mrf.mxu0
  %v823 = vadd.f32 %v759, %v822
  %824 = vmatmul.bf16.gmra.mxu0 %v340
  %v825 = vpop.f32.mrf.mxu0
  %v826 = vadd.f32 %v762, %v825
  %v827 = vpop.f32.mrf.mxu0
  %v828 = vadd.f32 %v764, %v827
  %829 = vmatmul.bf16.gmra.mxu0 %v345
  %v830 = vpop.f32.mrf.mxu0
  %v831 = vadd.f32 %v767, %v830
  %v832 = vpop.f32.mrf.mxu0
  %v833 = vadd.f32 %v769, %v832
  %834 = vmatmul.bf16.gmra.mxu0 %v350
  %v835 = vpop.f32.mrf.mxu0
  %v836 = vadd.f32 %v772, %v835
  %v837 = vpop.f32.mrf.mxu0
  %v838 = vadd.f32 %v774, %v837
  %839 = vmatmul.bf16.gmra.mxu0 %v355
  %v840 = vpop.f32.mrf.mxu0
  %v841 = vadd.f32 %v777, %v840
  %v842 = vpop.f32.mrf.mxu0
  %v843 = vadd.f32 %v779, %v842
  %844 = vmatmul.bf16.gmra.mxu0 %v360
  %v845 = vpop.f32.mrf.mxu0
  %v846 = vadd.f32 %v782, %v845
  %v847 = vpop.f32.mrf.mxu0
  %v848 = vadd.f32 %v784, %v847
  %849 = vmatmul.bf16.gmra.mxu0 %v365
  %v850 = vpop.f32.mrf.mxu0
  %v851 = vadd.f32 %v787, %v850
  %v852 = vpop.f32.mrf.mxu0
  %v853 = vadd.f32 %v789, %v852
  %854 = vmatmul.bf16.gmra.mxu0 %v370
  %v855 = vpop.f32.mrf.mxu0
  %v856 = vadd.f32 %v792, %v855
  %v857 = vpop.f32.mrf.mxu0
  %v858 = vadd.f32 %v794, %v857
  %859 = vmatmul.bf16.gmra.mxu0 %v375
  %v860 = vpop.f32.mrf.mxu0
  %v861 = vadd.f32 %v797, %v860
  %v862 = vpop.f32.mrf.mxu0
  %v863 = vadd.f32 %v799, %v862
  %864 = vmatmul.bf16.gmra.mxu0 %v380
  %v865 = vpop.f32.mrf.mxu0
  %v866 = vadd.f32 %v802, %v865
  %v867 = vpop.f32.mrf.mxu0
  %v868 = vadd.f32 %v804, %v867
  %869 = vmatmul.bf16.gmra.mxu0 %v385
  %v870 = vpop.f32.mrf.mxu0
  %v871 = vadd.f32 %v807, %v870
  %v872 = vpop.f32.mrf.mxu0
  %v873 = vadd.f32 %v809, %v872
  %874 = vdwg.mxu0
  %875 = vmatpush.bf16.msra.mxu0 %v634
  %876 = vmatpush.bf16.msra.mxu0 %v633
  %877 = vmatpush.bf16.msra.mxu0 %v632
  %878 = vmatpush.bf16.msra.mxu0 %v631
  %879 = vmatpush.bf16.msra.mxu0 %v630
  %880 = vmatpush.bf16.msra.mxu0 %v629
  %881 = vmatpush.bf16.msra.mxu0 %v628
  %882 = vmatpush.bf16.msra.mxu0 %v627
  %883 = vmatmul.bf16.gmra.mxu0 %v336
  %v884 = vpop.f32.mrf.mxu0
  %v885 = vadd.f32 %v821, %v884
  %v886 = vpop.f32.mrf.mxu0
  %v887 = vadd.f32 %v823, %v886
  %888 = vmatmul.bf16.gmra.mxu0 %v341
  %v889 = vpop.f32.mrf.mxu0
  %v890 = vadd.f32 %v826, %v889
  %v891 = vpop.f32.mrf.mxu0
  %v892 = vadd.f32 %v828, %v891
  %893 = vmatmul.bf16.gmra.mxu0 %v346
  %v894 = vpop.f32.mrf.mxu0
  %v895 = vadd.f32 %v831, %v894
  %v896 = vpop.f32.mrf.mxu0
  %v897 = vadd.f32 %v833, %v896
  %898 = vmatmul.bf16.gmra.mxu0 %v351
  %v899 = vpop.f32.mrf.mxu0
  %v900 = vadd.f32 %v836, %v899
  %v901 = vpop.f32.mrf.mxu0
  %v902 = vadd.f32 %v838, %v901
  %903 = vmatmul.bf16.gmra.mxu0 %v356
  %v904 = vpop.f32.mrf.mxu0
  %v905 = vadd.f32 %v841, %v904
  %v906 = vpop.f32.mrf.mxu0
  %v907 = vadd.f32 %v843, %v906
  %908 = vmatmul.bf16.gmra.mxu0 %v361
  %v909 = vpop.f32.mrf.mxu0
  %v910 = vadd.f32 %v846, %v909
  %v911 = vpop.f32.mrf.mxu0
  %v912 = vadd.f32 %v848, %v911
  %913 = vmatmul.bf16.gmra.mxu0 %v366
  %v914 = vpop.f32.mrf.mxu0
  %v915 = vadd.f32 %v851, %v914
  %v916 = vpop.f32.mrf.mxu0
  %v917 = vadd.f32 %v853, %v916
  %918 = vmatmul.bf16.gmra.mxu0 %v371
  %v919 = vpop.f32.mrf.mxu0
  %v920 = vadd.f32 %v856, %v919
  %v921 = vpop.f32.mrf.mxu0
  %v922 = vadd.f32 %v858, %v921
  %923 = vmatmul.bf16.gmra.mxu0 %v376
  %v924 = vpop.f32.mrf.mxu0
  %v925 = vadd.f32 %v861, %v924
  %v926 = vpop.f32.mrf.mxu0
  %v927 = vadd.f32 %v863, %v926
  %928 = vmatmul.bf16.gmra.mxu0 %v381
  %v929 = vpop.f32.mrf.mxu0
  %v930 = vadd.f32 %v866, %v929
  %v931 = vpop.f32.mrf.mxu0
  %v932 = vadd.f32 %v868, %v931
  %933 = vmatmul.bf16.gmra.mxu0 %v386
  %v934 = vpop.f32.mrf.mxu0
  %v935 = vadd.f32 %v871, %v934
  %v936 = vpop.f32.mrf.mxu0
  %v937 = vadd.f32 %v873, %v936
  %938 = vdwg.mxu0
  %939 = vmatpush.bf16.msra.mxu0 %v642
  %940 = vmatpush.bf16.msra.mxu0 %v641
  %941 = vmatpush.bf16.msra.mxu0 %v640
  %942 = vmatpush.bf16.msra.mxu0 %v639
  %943 = vmatpush.bf16.msra.mxu0 %v638
  %944 = vmatpush.bf16.msra.mxu0 %v637
  %945 = vmatpush.bf16.msra.mxu0 %v636
  %946 = vmatpush.bf16.msra.mxu0 %v635
  %947 = vmatmul.bf16.gmra.mxu0 %v337
  %v948 = vpop.f32.mrf.mxu0
  %v949 = vadd.f32 %v885, %v948
  %v950 = vpop.f32.mrf.mxu0
  %v951 = vadd.f32 %v887, %v950
  %952 = vmatmul.bf16.gmra.mxu0 %v342
  %v953 = vpop.f32.mrf.mxu0
  %v954 = vadd.f32 %v890, %v953
  %v955 = vpop.f32.mrf.mxu0
  %v956 = vadd.f32 %v892, %v955
  %957 = vmatmul.bf16.gmra.mxu0 %v347
  %v958 = vpop.f32.mrf.mxu0
  %v959 = vadd.f32 %v895, %v958
  %v960 = vpop.f32.mrf.mxu0
  %v961 = vadd.f32 %v897, %v960
  %962 = vmatmul.bf16.gmra.mxu0 %v352
  %v963 = vpop.f32.mrf.mxu0
  %v964 = vadd.f32 %v900, %v963
  %v965 = vpop.f32.mrf.mxu0
  %v966 = vadd.f32 %v902, %v965
  %967 = vmatmul.bf16.gmra.mxu0 %v357
  %v968 = vpop.f32.mrf.mxu0
  %v969 = vadd.f32 %v905, %v968
  %v970 = vpop.f32.mrf.mxu0
  %v971 = vadd.f32 %v907, %v970
  %972 = vmatmul.bf16.gmra.mxu0 %v362
  %v973 = vpop.f32.mrf.mxu0
  %v974 = vadd.f32 %v910, %v973
  %v975 = vpop.f32.mrf.mxu0
  %v976 = vadd.f32 %v912, %v975
  %977 = vmatmul.bf16.gmra.mxu0 %v367
  %v978 = vpop.f32.mrf.mxu0
  %v979 = vadd.f32 %v915, %v978
  %v980 = vpop.f32.mrf.mxu0
  %v981 = vadd.f32 %v917, %v980
  %982 = vmatmul.bf16.gmra.mxu0 %v372
  %v983 = vpop.f32.mrf.mxu0
  %v984 = vadd.f32 %v920, %v983
  %v985 = vpop.f32.mrf.mxu0
  %v986 = vadd.f32 %v922, %v985
  %987 = vmatmul.bf16.gmra.mxu0 %v377
  %v988 = vpop.f32.mrf.mxu0
  %v989 = vadd.f32 %v925, %v988
  %v990 = vpop.f32.mrf.mxu0
  %v991 = vadd.f32 %v927, %v990
  %992 = vmatmul.bf16.gmra.mxu0 %v382
  %v993 = vpop.f32.mrf.mxu0
  %v994 = vadd.f32 %v930, %v993
  %v995 = vpop.f32.mrf.mxu0
  %v996 = vadd.f32 %v932, %v995
  %997 = vmatmul.bf16.gmra.mxu0 %v387
  %v998 = vpop.f32.mrf.mxu0
  %v999 = vadd.f32 %v935, %v998
  %v1000 = vpop.f32.mrf.mxu0
  %v1001 = vadd.f32 %v937, %v1000
  %1002 = vdwg.mxu0
  %v1003 = vmax.f32 %v949, 0.0
  %v1004 = vmax.f32 %v951, 0.0
  %v1005 = vmax.f32 %v954, 0.0
  %v1006 = vmax.f32 %v956, 0.0
  %v1007 = vmax.f32 %v959, 0.0
  %v1008 = vmax.f32 %v961, 0.0
  %v1009 = vmax.f32 %v964, 0.0
  %v1010 = vmax.f32 %v966, 0.0
  %v1011 = vmax.f32 %v969, 0.0
  %v1012 = vmax.f32 %v971, 0.0
  %v1013 = vmax.f32 %v974, 0.0
  %v1014 = vmax.f32 %v976, 0.0
  %v1015 = vmax.f32 %v979, 0.0
  %v1016 = vmax.f32 %v981, 0.0
  %v1017 = vmax.f32 %v984, 0.0
  %v1018 = vmax.f32 %v986, 0.0
  %v1019 = vmax.f32 %v989, 0.0
  %v1020 = vmax.f32 %v991, 0.0
  %v1021 = vmax.f32 %v994, 0.0
  %v1022 = vmax.f32 %v996, 0.0
  %v1023 = vmax.f32 %v999, 0.0
  %v1024 = vmax.f32 %v1001, 0.0
  %v1025 = vpack.c.bf16 %v1003, %v1003
  %v1026 = vpack.c.bf16 %v1004, %v1004
  %v1027 = vpack.c.bf16 %v1005, %v1005
  %v1028 = vpack.c.bf16 %v1006, %v1006
  %v1029 = vpack.c.bf16 %v1007, %v1007
  %v1030 = vpack.c.bf16 %v1008, %v1008
  %v1031 = vpack.c.bf16 %v1009, %v1009
  %v1032 = vpack.c.bf16 %v1010, %v1010
  %v1033 = vpack.c.bf16 %v1011, %v1011
  %v1034 = vpack.c.bf16 %v1012, %v1012
  %v1035 = vpack.c.bf16 %v1013, %v1013
  %v1036 = vpack.c.bf16 %v1014, %v1014
  %v1037 = vpack.c.bf16 %v1015, %v1015
  %v1038 = vpack.c.bf16 %v1016, %v1016
  %v1039 = vpack.c.bf16 %v1017, %v1017
  %v1040 = vpack.c.bf16 %v1018, %v1018
  %v1041 = vpack.c.bf16 %v1019, %v1019
  %v1042 = vpack.c.bf16 %v1020, %v1020
  %v1043 = vpack.c.bf16 %v1021, %v1021
  %v1044 = vpack.c.bf16 %v1022, %v1022
  %v1045 = vpack.c.bf16 %v1023, %v1023
  %v1046 = vpack.c.bf16 %v1024, %v1024
  %1047 = vst [vmem:[%s2] sm:$0xf] %v1025
  %1048 = vst [vmem:[%s2 + $0x4] sm:$0xf] %v1026
  %1049 = vst [vmem:[%s2 + $0x8] sm:$0xf] %v1027
  %1050 = vst [vmem:[%s2 + $0xc] sm:$0xf] %v1028
  %1051 = vst [vmem:[%s2 + $0x10] sm:$0xf] %v1029
  %1052 = vst [vmem:[%s2 + $0x14] sm:$0xf] %v1030
  %1053 = vst [vmem:[%s2 + $0x18] sm:$0xf] %v1031
  %1054 = vst [vmem:[%s2 + $0x1c] sm:$0xf] %v1032
  %1055 = vst [vmem:[%s2 + $0x20] sm:$0xf] %v1033
  %1056 = vst [vmem:[%s2 + $0x24] sm:$0xf] %v1034
  %1057 = vst [vmem:[%s2 + $0x28] sm:$0xf] %v1035
  %1058 = vst [vmem:[%s2 + $0x2c] sm:$0xf] %v1036
  %1059 = vst [vmem:[%s2 + $0x30] sm:$0xf] %v1037
  %1060 = vst [vmem:[%s2 + $0x34] sm:$0xf] %v1038
  %1061 = vst [vmem:[%s2 + $0x38] sm:$0xf] %v1039
  %1062 = vst [vmem:[%s2 + $0x3c] sm:$0xf] %v1040
  %1063 = vst [vmem:[%s2 + $0x40] sm:$0xf] %v1041
  %1064 = vst [vmem:[%s2 + $0x44] sm:$0xf] %v1042
  %1065 = vst [vmem:[%s2 + $0x48] sm:$0xf] %v1043
  %1066 = vst [vmem:[%s2 + $0x4c] sm:$0xf] %v1044
  %1067 = vst [vmem:[%s2 + $0x50] sm:$0xf] %v1045
  %1068 = vst [vmem:[%s2 + $0x54] sm:$0xf] %v1046
  // Predicated region
  $region10: #{model_forward.18} parent=0 // pred_check
    _
  $region11: #{model_forward.18} parent=0 // pred_check_branch
    %1070 = sbr.rel (0) target = $region13
  $region12: #{model_forward.18} parent=0 // pred_region
    _
  $region13: #{model_forward.18} parent=0 // pred_fallthru
    _
  // Predicated region
  $region14: #{model_forward.18} parent=0 // pred_check
    _
  $region15: #{model_forward.18} parent=0 // pred_check_branch
    %1072 = sbr.rel (0) target = $region17
  $region16: #{model_forward.18} parent=0 // pred_region
    _
  $region17: #{model_forward.18} parent=0 // pred_fallthru
    _

// kernel: model_forward.19
$region0: #{model_forward.19}
  #allocation0 [shape = 'u32[]', space=smem, size = 0x4, offset = 0x4, fixed_abs, tag = 'smem constant byte address 0x4 - core index']
  #allocation1 [shape = 'u32[72,128]{1,0:T(1,128)}', space=vmem, size = 0x9000, scoped, tag = 'internal scratch']
  %s0 = inlined_call_operand.vmem [shape: bf16[176,128], index: 0, kind: input, shape index: {}]
  %s1 = inlined_call_operand.vmem [shape: bf16[128,256], index: 1, kind: input, shape index: {}]
  %s2 = inlined_call_operand.vmem [shape: bf16[176,256], index: 2, kind: output, shape index: {}]
  %s3 = sld [smem:[#allocation0]]
  $region119: #{model_forward.19} parent=0
    _
  %s5 = ssub.s32 1, %s3
  %s6 = scalar_select 0, %s5, %s3
  $region1: #{model_forward.19} parent=0
    #allocation2 [shape = 'u8[65536]{0}', space=vmem, size = 0x10000, scoped, tag = 'input window, operand 1']
    #allocation3 [shape = 'u8[90112]{0}', space=vmem, size = 0x16000, scoped, tag = 'output window, operand 0']
    loop: start=0, step=1, limit=4
    $region2: #{model_forward.19} parent=1 // loop_pre_header
      _
    $region3: #{model_forward.19} parent=1 // loop_header
      %s8 = sphi 0, %s12
      %p9 = scmp.ge.s32.totalorder %s8, 4
      %s15 = sphi 0, %s27
      %s16 = sphi 0, %s23
      %s17 = sphi 0, %s15
      %s18 = sphi 0, %s16
      %s19 = sphi 0, %s17
      %s20 = sphi 0, %s18
      %s30 = sphi 0, %s32
      %s33 = sphi 0, %s30
      %s34 = sphi 0, %s33
      %s50 = sphi 0, %s34
      %s56 = sphi 0, %s58
      %s59 = sphi 0, %s56
      %s60 = sphi 0, %s59
      %s76 = sphi 0, %s60
      %s84 = sphi 0, %s86
      %s87 = sphi 0, %s84
      %s88 = sphi 0, %s87
      %s104 = sphi 0, %s88
    $region4: #{model_forward.19} parent=1 // loop_header_branch
      %11 = sbr.rel (%p9) target = $region8
    $region5: #{model_forward.19} parent=1 // loop_body
      %s13 = ssub.s32 %s8, 1
      %s14 = ssub.s32 %s8, 2
      %s21 = sadd.s32 1, %s16
      %p22 = scmp.ge.s32.totalorder %s21, 2
      %s23 = scalar_select %p22, 0, %s21
      %s24 = sadd.s32 1, %s15
      %s25 = scalar_select %p22, %s24, %s15
      %p26 = scmp.ge.s32.totalorder %s25, 1
      %s27 = scalar_select %p26, 0, %s25
      %s28 = ssub.s32 %s15, %s27
      %p29 = scmp.eq.s32.totalorder %s28, 0
      %s31 = sadd.s32 %s30, 1
      %s32 = scalar_select %p29, %s30, %s31
      %p35 = pneg %p29
      %p36 = scmp.eq.s32.totalorder %s8, 1
      %p37 = por %p35, %p36
      %p38 = scmp.ne.s32.totalorder %s30, %s33
      %p39 = scmp.eq.s32.totalorder %s8, 0
      %p40 = por %p38, %p39
      %p41 = scmp.ne.s32.totalorder %s30, %s33
      %p42 = scmp.eq.s32.totalorder %s13, 1
      %p43 = por %p41, %p42
      %p44 = scmp.ne.s32.totalorder %s33, %s34
      %p45 = scmp.eq.s32.totalorder %s13, 0
      %p46 = por %p44, %p45
      %p47 = scmp.ne.s32.totalorder %s33, %s34
      %p48 = scmp.eq.s32.totalorder %s14, 1
      %p49 = por %p47, %p48
      %p51 = scmp.ne.s32.totalorder %s34, %s50
      %p52 = scmp.eq.s32.totalorder %s14, 0
      %p53 = por %p51, %p52
      %s54 = ssub.s32 %s16, %s23
      %p55 = scmp.eq.s32.totalorder %s54, 0
      %s57 = sadd.s32 %s56, 1
      %s58 = scalar_select %p55, %s56, %s57
      %p61 = pneg %p55
      %p62 = scmp.eq.s32.totalorder %s8, 1
      %p63 = por %p61, %p62
      %p64 = scmp.ne.s32.totalorder %s56, %s59
      %p65 = scmp.eq.s32.totalorder %s8, 0
      %p66 = por %p64, %p65
      %p67 = scmp.ne.s32.totalorder %s56, %s59
      %p68 = scmp.eq.s32.totalorder %s13, 1
      %p69 = por %p67, %p68
      %p70 = scmp.ne.s32.totalorder %s59, %s60
      %p71 = scmp.eq.s32.totalorder %s13, 0
      %p72 = por %p70, %p71
      %p73 = scmp.ne.s32.totalorder %s59, %s60
      %p74 = scmp.eq.s32.totalorder %s14, 1
      %p75 = por %p73, %p74
      %p77 = scmp.ne.s32.totalorder %s60, %s76
      %p78 = scmp.eq.s32.totalorder %s14, 0
      %p79 = por %p77, %p78
      %s80 = ssub.s32 %s15, %s27
      %s81 = ssub.s32 %s16, %s23
      %s82 = sor.u32 %s80, %s81
      %p83 = scmp.eq.s32.totalorder %s82, 0
      %s85 = sadd.s32 %s84, 1
      %s86 = scalar_select %p83, %s84, %s85
      %p89 = pneg %p83
      %p90 = scmp.eq.s32.totalorder %s8, 1
      %p91 = por %p89, %p90
      %p92 = scmp.ne.s32.totalorder %s84, %s87
      %p93 = scmp.eq.s32.totalorder %s8, 0
      %p94 = por %p92, %p93
      %p95 = scmp.ne.s32.totalorder %s84, %s87
      %p96 = scmp.eq.s32.totalorder %s13, 1
      %p97 = por %p95, %p96
      %p98 = scmp.ne.s32.totalorder %s87, %s88
      %p99 = scmp.eq.s32.totalorder %s13, 0
      %p100 = por %p98, %p99
      %p101 = scmp.ne.s32.totalorder %s87, %s88
      %p102 = scmp.eq.s32.totalorder %s14, 1
      %p103 = por %p101, %p102
      %p105 = scmp.ne.s32.totalorder %s88, %s104
      %p106 = scmp.eq.s32.totalorder %s14, 0
      %p107 = por %p105, %p106
      %p108 = scmp.le.s32.totalorder 1, %s8
      %p109 = scmp.lt.s32.totalorder %s8, 3
      %p110 = pnand %p108, %p109
      %p111 = pneg %p110
      // Predicated region
      $region9: #{model_forward.19} parent=5 // pred_check
        _
      $region10: #{model_forward.19} parent=5 // pred_check_branch
        %113 = sbr.rel (%p110) target = $region12
      $region11: #{model_forward.19} parent=5 // pred_region
        %s114 = ssub.s32 %s8, 1
        // Predicated region
        $region13: #{model_forward.19} parent=11 // pred_check
          %p115 = pneg %p46
        $region14: #{model_forward.19} parent=11 // pred_check_branch
          %117 = sbr.rel (%p115) target = $region16
        $region15: #{model_forward.19} parent=11 // pred_region
          %s118 = smul.u32 22, %s17
          %p119 = scmp.lt.s32.totalorder %s118, 21
          %s120 = scalar_select %p119, %s118, 21
          %s121 = smul.addr %s120, 4
          %s122 = scalar_lea.vmem %s0, %s121
          %s123 = smul.u32 22, %s17
        $region16: #{model_forward.19} parent=11 // pred_fallthru
          _
      $region12: #{model_forward.19} parent=5 // pred_fallthru
        _
      %p124 = scmp.lt.s32.totalorder %s8, 2
      // Predicated region
      $region17: #{model_forward.19} parent=5 // pred_check
        %p125 = pneg %p124
      $region18: #{model_forward.19} parent=5 // pred_check_branch
        %127 = sbr.rel (%p125) target = $region20
      $region19: #{model_forward.19} parent=5 // pred_region
        // Predicated region
        $region21: #{model_forward.19} parent=19 // pred_check
          %p128 = pneg %p66
        $region22: #{model_forward.19} parent=19 // pred_check_branch
          %130 = sbr.rel (%p128) target = $region24
        $region23: #{model_forward.19} parent=19 // pred_region
          %s131 = sand.u32 %s56, 1
          %s132 = sand.u32 %s56, 1
          %s133 = smul.addr %s132, 64
          %s134 = scalar_lea.vmem [#allocation2], %s133
          %s135 = smul.addr %s16, 4
          %s136 = scalar_lea.vmem %s1, %s135
          // Predicated region
          $region25: #{model_forward.19} parent=23 // pred_check
            _
          $region26: #{model_forward.19} parent=23 // pred_check_branch
            %138 = sbr.rel (0) target = $region28
          $region27: #{model_forward.19} parent=23 // pred_region
            // Predicated region
            $region29: #{model_forward.19} parent=27 // pred_check
              _
            $region30: #{model_forward.19} parent=27 // pred_check_branch
              %140 = sbr.rel target = $region32
            $region31: #{model_forward.19} parent=27 // pred_region
              // Predicated region
              $region44: #{model_forward.19} parent=31 // pred_check
                _
              $region45: #{model_forward.19} parent=31 // pred_check_branch
                %186 = sbr.rel (0) target = $region47
              $region46: #{model_forward.19} parent=31 // pred_region
                loop: start=0, step=1, limit=1
                $region48: #{model_forward.19} parent=46 // loop_pre_header
                  _
                $region49: #{model_forward.19} parent=46 // loop_header
                  %s188 = sphi 0, %s192
                  %p189 = scmp.ge.s32.totalorder %s188, 1
                  %s193 = sphi %s136, %s136
                  %s194 = sphi %s134, %s134
                $region50: #{model_forward.19} parent=46 // loop_header_branch
                  %191 = sbr.rel (%p189) target = $region54
                $region51: #{model_forward.19} parent=46 // loop_body
                  _
                $region52: #{model_forward.19} parent=46 // loop_footer
                  %s192 = sadd.s32 1, %s188
                $region53: #{model_forward.19} parent=46 // loop_footer_branch
                  %187 = sbr.rel target = $region49
                $region54: #{model_forward.19} parent=46 // loop_exit
                  _
                %s196 = ssub.s32 16, 1
                loop: start=0, step=1, limit=1
                $region55: #{model_forward.19} parent=46 // loop_pre_header
                  _
                $region56: #{model_forward.19} parent=46 // loop_header
                  %s198 = sphi 0, %s202
                  %p199 = scmp.ge.s32.totalorder %s198, 1
                  %s203 = sphi %s136, %s136
                  %s204 = sphi %s134, %s134
                $region57: #{model_forward.19} parent=46 // loop_header_branch
                  %201 = sbr.rel (%p199) target = $region61
                $region58: #{model_forward.19} parent=46 // loop_body
                  %v205 = vld [vmem:[%s203] sm:%s196]
                  %206 = vst [vmem:[%s204] sm:%s196] %v205
                  %v207 = vld [vmem:[%s203 + $0x8] sm:%s196]
                  %208 = vst [vmem:[%s204 + $0x4] sm:%s196] %v207
                  %v209 = vld [vmem:[%s203 + $0x10] sm:%s196]
                  %210 = vst [vmem:[%s204 + $0x8] sm:%s196] %v209
                  %v211 = vld [vmem:[%s203 + $0x18] sm:%s196]
                  %212 = vst [vmem:[%s204 + $0xc] sm:%s196] %v211
                  %v213 = vld [vmem:[%s203 + $0x20] sm:%s196]
                  %214 = vst [vmem:[%s204 + $0x10] sm:%s196] %v213
                  %v215 = vld [vmem:[%s203 + $0x28] sm:%s196]
                  %216 = vst [vmem:[%s204 + $0x14] sm:%s196] %v215
                  %v217 = vld [vmem:[%s203 + $0x30] sm:%s196]
                  %218 = vst [vmem:[%s204 + $0x18] sm:%s196] %v217
                  %v219 = vld [vmem:[%s203 + $0x38] sm:%s196]
                  %220 = vst [vmem:[%s204 + $0x1c] sm:%s196] %v219
                  %v221 = vld [vmem:[%s203 + $0x40] sm:%s196]
                  %222 = vst [vmem:[%s204 + $0x20] sm:%s196] %v221
                  %v223 = vld [vmem:[%s203 + $0x48] sm:%s196]
                  %224 = vst [vmem:[%s204 + $0x24] sm:%s196] %v223
                  %v225 = vld [vmem:[%s203 + $0x50] sm:%s196]
                  %226 = vst [vmem:[%s204 + $0x28] sm:%s196] %v225
                  %v227 = vld [vmem:[%s203 + $0x58] sm:%s196]
                  %228 = vst [vmem:[%s204 + $0x2c] sm:%s196] %v227
                  %v229 = vld [vmem:[%s203 + $0x60] sm:%s196]
                  %230 = vst [vmem:[%s204 + $0x30] sm:%s196] %v229
                  %v231 = vld [vmem:[%s203 + $0x68] sm:%s196]
                  %232 = vst [vmem:[%s204 + $0x34] sm:%s196] %v231
                  %v233 = vld [vmem:[%s203 + $0x70] sm:%s196]
                  %234 = vst [vmem:[%s204 + $0x38] sm:%s196] %v233
                  %v235 = vld [vmem:[%s203 + $0x78] sm:%s196]
                  %236 = vst [vmem:[%s204 + $0x3c] sm:%s196] %v235
                $region59: #{model_forward.19} parent=46 // loop_footer
                  %s202 = sadd.s32 1, %s198
                $region60: #{model_forward.19} parent=46 // loop_footer_branch
                  %197 = sbr.rel target = $region56
                $region61: #{model_forward.19} parent=46 // loop_exit
                  _
              $region47: #{model_forward.19} parent=31 // pred_fallthru
                _
            $region32: #{model_forward.19} parent=27 // pred_fallthru
              _
            // Predicated region
            $region33: #{model_forward.19} parent=27 // pred_check
              _
            $region34: #{model_forward.19} parent=27 // pred_check_branch
              %142 = sbr.rel (0) target = $region36
            $region35: #{model_forward.19} parent=27 // pred_region
              %s144 = ssub.s32 16, 1
              loop: start=0, step=1, limit=1
              $region37: #{model_forward.19} parent=35 // loop_pre_header
                _
              $region38: #{model_forward.19} parent=35 // loop_header
                %s146 = sphi 0, %s150
                %p147 = scmp.ge.s32.totalorder %s146, 1
                %s151 = sphi %s136, %s136
                %s152 = sphi %s134, %s134
              $region39: #{model_forward.19} parent=35 // loop_header_branch
                %149 = sbr.rel (%p147) target = $region43
              $region40: #{model_forward.19} parent=35 // loop_body
                %v153 = vld [vmem:[%s151] sm:%s144]
                %154 = vst [vmem:[%s152] sm:%s144] %v153
                %v155 = vld [vmem:[%s151 + $0x8] sm:%s144]
                %156 = vst [vmem:[%s152 + $0x4] sm:%s144] %v155
                %v157 = vld [vmem:[%s151 + $0x10] sm:%s144]
                %158 = vst [vmem:[%s152 + $0x8] sm:%s144] %v157
                %v159 = vld [vmem:[%s151 + $0x18] sm:%s144]
                %160 = vst [vmem:[%s152 + $0xc] sm:%s144] %v159
                %v161 = vld [vmem:[%s151 + $0x20] sm:%s144]
                %162 = vst [vmem:[%s152 + $0x10] sm:%s144] %v161
                %v163 = vld [vmem:[%s151 + $0x28] sm:%s144]
                %164 = vst [vmem:[%s152 + $0x14] sm:%s144] %v163
                %v165 = vld [vmem:[%s151 + $0x30] sm:%s144]
                %166 = vst [vmem:[%s152 + $0x18] sm:%s144] %v165
                %v167 = vld [vmem:[%s151 + $0x38] sm:%s144]
                %168 = vst [vmem:[%s152 + $0x1c] sm:%s144] %v167
                %v169 = vld [vmem:[%s151 + $0x40] sm:%s144]
                %170 = vst [vmem:[%s152 + $0x20] sm:%s144] %v169
                %v171 = vld [vmem:[%s151 + $0x48] sm:%s144]
                %172 = vst [vmem:[%s152 + $0x24] sm:%s144] %v171
                %v173 = vld [vmem:[%s151 + $0x50] sm:%s144]
                %174 = vst [vmem:[%s152 + $0x28] sm:%s144] %v173
                %v175 = vld [vmem:[%s151 + $0x58] sm:%s144]
                %176 = vst [vmem:[%s152 + $0x2c] sm:%s144] %v175
                %v177 = vld [vmem:[%s151 + $0x60] sm:%s144]
                %178 = vst [vmem:[%s152 + $0x30] sm:%s144] %v177
                %v179 = vld [vmem:[%s151 + $0x68] sm:%s144]
                %180 = vst [vmem:[%s152 + $0x34] sm:%s144] %v179
                %v181 = vld [vmem:[%s151 + $0x70] sm:%s144]
                %182 = vst [vmem:[%s152 + $0x38] sm:%s144] %v181
                %v183 = vld [vmem:[%s151 + $0x78] sm:%s144]
                %184 = vst [vmem:[%s152 + $0x3c] sm:%s144] %v183
              $region41: #{model_forward.19} parent=35 // loop_footer
                %s150 = sadd.s32 1, %s146
              $region42: #{model_forward.19} parent=35 // loop_footer_branch
                %145 = sbr.rel target = $region38
              $region43: #{model_forward.19} parent=35 // loop_exit
                _
            $region36: #{model_forward.19} parent=27 // pred_fallthru
              _
          $region28: #{model_forward.19} parent=23 // pred_fallthru
            _
          %237 = vnop
        $region24: #{model_forward.19} parent=19 // pred_fallthru
          _
      $region20: #{model_forward.19} parent=5 // pred_fallthru
        _
      %p238 = scmp.le.s32.totalorder 1, %s8
      %p239 = scmp.lt.s32.totalorder %s8, 3
      %p240 = pnand %p238, %p239
      %p241 = pneg %p240
      // Predicated region
      $region62: #{model_forward.19} parent=5 // pred_check
        _
      $region63: #{model_forward.19} parent=5 // pred_check_branch
        %243 = sbr.rel (%p240) target = $region65
      $region64: #{model_forward.19} parent=5 // pred_region
        %s244 = ssub.s32 %s8, 1
        %s245 = sand.u32 %s59, 1
        %s246 = sand.u32 %s59, 1
        %s247 = smul.addr %s246, 64
        %s248 = scalar_lea.vmem [#allocation2], %s247
        // Predicated region
        $region66: #{model_forward.19} parent=64 // pred_check
          %p249 = pneg %p72
        $region67: #{model_forward.19} parent=64 // pred_check_branch
          %251 = sbr.rel (%p249) target = $region69
        $region68: #{model_forward.19} parent=64 // pred_region
          _
        $region69: #{model_forward.19} parent=64 // pred_fallthru
          _
        %s252 = smul.u32 22, %s17
        %p253 = scmp.lt.s32.totalorder %s252, 21
        %s254 = scalar_select %p253, %s252, 21
        %s255 = smul.addr %s254, 4
        %s256 = scalar_lea.vmem %s0, %s255
        %p257 = pneg %p46
        %p258 = pneg %p43
        %s259 = sand.u32 %s59, 1
        %s260 = sand.u32 %s59, 1
        %s261 = smul.addr %s260, 64
        %s262 = scalar_lea.vmem [#allocation2], %s261
        %p263 = pneg %p72
        %p264 = pneg %p69
        %p265 = pneg %p100
        %p266 = pneg %p97
        %s267 = sand.u32 %s87, 1
        %s268 = sand.u32 %s87, 1
        %s269 = smul.addr %s268, 88
        %s270 = scalar_lea.vmem [#allocation3], %s269
        %s271 = smul.u32 22, %s17
        %p272 = scmp.lt.s32.totalorder %s271, 21
        %s273 = scalar_select %p272, %s271, 21
        %s274 = smul.addr %s273, 4
        %s275 = scalar_lea.vmem %s0, %s274
        %s276 = smul.u32 22, %s17
        %s277 = smul.u32 22, %s17
        %v278 = vld [vmem:[%s275] sm:$0xf]
        %v279 = vld [vmem:[%s275 + $0x4] sm:$0xf]
        %v280 = vld [vmem:[%s275 + $0x8] sm:$0xf]
        %v281 = vld [vmem:[%s275 + $0xc] sm:$0xf]
        %v282 = vld [vmem:[%s275 + $0x10] sm:$0xf]
        %v283 = vld [vmem:[%s275 + $0x14] sm:$0xf]
        %v284 = vld [vmem:[%s275 + $0x18] sm:$0xf]
        %v285 = vld [vmem:[%s275 + $0x1c] sm:$0xf]
        %v286 = vld [vmem:[%s275 + $0x20] sm:$0xf]
        %v287 = vld [vmem:[%s275 + $0x24] sm:$0xf]
        %v288 = vld [vmem:[%s275 + $0x28] sm:$0xf]
        %v289 = vld [vmem:[%s275 + $0x2c] sm:$0xf]
        %v290 = vld [vmem:[%s275 + $0x30] sm:$0xf]
        %v291 = vld [vmem:[%s275 + $0x34] sm:$0xf]
        %v292 = vld [vmem:[%s275 + $0x38] sm:$0xf]
        %v293 = vld [vmem:[%s275 + $0x3c] sm:$0xf]
        %v294 = vld [vmem:[%s275 + $0x40] sm:$0xf]
        %v295 = vld [vmem:[%s275 + $0x44] sm:$0xf]
        %v296 = vld [vmem:[%s275 + $0x48] sm:$0xf]
        %v297 = vld [vmem:[%s275 + $0x4c] sm:$0xf]
        %v298 = vld [vmem:[%s275 + $0x50] sm:$0xf]
        %v299 = vld [vmem:[%s275 + $0x54] sm:$0xf]
        %v300 = vld [vmem:[%s248] sm:$0xf]
        %v301 = vld [vmem:[%s248 + $0x4] sm:$0xf]
        %v302 = vld [vmem:[%s248 + $0x8] sm:$0xf]
        %v303 = vld [vmem:[%s248 + $0xc] sm:$0xf]
        %v304 = vld [vmem:[%s248 + $0x10] sm:$0xf]
        %v305 = vld [vmem:[%s248 + $0x14] sm:$0xf]
        %v306 = vld [vmem:[%s248 + $0x18] sm:$0xf]
        %v307 = vld [vmem:[%s248 + $0x1c] sm:$0xf]
        %v308 = vld [vmem:[%s248 + $0x20] sm:$0xf]
        %v309 = vld [vmem:[%s248 + $0x24] sm:$0xf]
        %v310 = vld [vmem:[%s248 + $0x28] sm:$0xf]
        %v311 = vld [vmem:[%s248 + $0x2c] sm:$0xf]
        %v312 = vld [vmem:[%s248 + $0x30] sm:$0xf]
        %v313 = vld [vmem:[%s248 + $0x34] sm:$0xf]
        %v314 = vld [vmem:[%s248 + $0x38] sm:$0xf]
        %v315 = vld [vmem:[%s248 + $0x3c] sm:$0xf]
        %v338 = vunpack.c.l.b16 %v278
        %v339 = vunpack.c.l.b16 %v279
        %v340 = vunpack.c.l.b16 %v280
        %v341 = vunpack.c.l.b16 %v281
        %v342 = vunpack.c.l.b16 %v282
        %v343 = vunpack.c.l.b16 %v283
        %v344 = vunpack.c.l.b16 %v284
        %v345 = vunpack.c.l.b16 %v285
        %v346 = vunpack.c.l.b16 %v286
        %v347 = vunpack.c.l.b16 %v287
        %v348 = vunpack.c.l.b16 %v288
        %v349 = vunpack.c.l.b16 %v289
        %v350 = vunpack.c.l.b16 %v290
        %v351 = vunpack.c.l.b16 %v291
        %v352 = vunpack.c.l.b16 %v292
        %v353 = vunpack.c.l.b16 %v293
        %v354 = vunpack.c.l.b16 %v294
        %v355 = vunpack.c.l.b16 %v295
        %v356 = vunpack.c.l.b16 %v296
        %v357 = vunpack.c.l.b16 %v297
        %v358 = vunpack.c.l.b16 %v298
        %v359 = vunpack.c.l.b16 %v299
        %v360 = vpack.c.b16 %v339, %v338
        %v361 = vpack.c.b16 %v341, %v340
        %v362 = vpack.c.b16 %v343, %v342
        %v363 = vpack.c.b16 %v345, %v344
        %v364 = vpack.c.b16 %v347, %v346
        %v365 = vpack.c.b16 %v349, %v348
        %v366 = vpack.c.b16 %v351, %v350
        %v367 = vpack.c.b16 %v353, %v352
        %v368 = vpack.c.b16 %v355, %v354
        %v369 = vpack.c.b16 %v357, %v356
        %v370 = vpack.c.b16 %v359, %v358
        %v398 = vunpack.c.l.b16 %v300
        %v399 = vunpack.c.l.b16 %v301
        %v400 = vunpack.c.l.b16 %v302
        %v401 = vunpack.c.l.b16 %v303
        %v402 = vunpack.c.l.b16 %v304
        %v403 = vunpack.c.l.b16 %v305
        %v404 = vunpack.c.l.b16 %v306
        %v405 = vunpack.c.l.b16 %v307
        %v406 = vunpack.c.l.b16 %v308
        %v407 = vunpack.c.l.b16 %v309
        %v408 = vunpack.c.l.b16 %v310
        %v409 = vunpack.c.l.b16 %v311
        %v410 = vunpack.c.l.b16 %v312
        %v411 = vunpack.c.l.b16 %v313
        %v412 = vunpack.c.l.b16 %v314
        %v413 = vunpack.c.l.b16 %v315
        %v414 = vpack.c.b16 %v399, %v398
        %v415 = vpack.c.b16 %v401, %v400
        %v416 = vpack.c.b16 %v403, %v402
        %v417 = vpack.c.b16 %v405, %v404
        %v418 = vpack.c.b16 %v407, %v406
        %v419 = vpack.c.b16 %v409, %v408
        %v420 = vpack.c.b16 %v411, %v410
        %v421 = vpack.c.b16 %v413, %v412
        %430 = vmatpush.bf16.msra.mxu0 %v421
        %431 = vmatpush.bf16.msra.mxu0 %v420
        %432 = vmatpush.bf16.msra.mxu0 %v419
        %433 = vmatpush.bf16.msra.mxu0 %v418
        %434 = vmatpush.bf16.msra.mxu0 %v417
        %435 = vmatpush.bf16.msra.mxu0 %v416
        %436 = vmatpush.bf16.msra.mxu0 %v415
        %437 = vmatpush.bf16.msra.mxu0 %v414
        %438 = vmatmul.bf16.gmra.mxu0 %v360
        %v439 = vpop.f32.mrf.mxu0
        %v440 = vadd.f32 0.0, %v439
        %v441 = vpop.f32.mrf.mxu0
        %v442 = vadd.f32 0.0, %v441
        %443 = vmatmul.bf16.gmra.mxu0 %v361
        %v444 = vpop.f32.mrf.mxu0
        %v445 = vadd.f32 0.0, %v444
        %v446 = vpop.f32.mrf.mxu0
        %v447 = vadd.f32 0.0, %v446
        %448 = vmatmul.bf16.gmra.mxu0 %v362
        %v449 = vpop.f32.mrf.mxu0
        %v450 = vadd.f32 0.0, %v449
        %v451 = vpop.f32.mrf.mxu0
        %v452 = vadd.f32 0.0, %v451
        %453 = vmatmul.bf16.gmra.mxu0 %v363
        %v454 = vpop.f32.mrf.mxu0
        %v455 = vadd.f32 0.0, %v454
        %v456 = vpop.f32.mrf.mxu0
        %v457 = vadd.f32 0.0, %v456
        %458 = vmatmul.bf16.gmra.mxu0 %v364
        %v459 = vpop.f32.mrf.mxu0
        %v460 = vadd.f32 0.0, %v459
        %v461 = vpop.f32.mrf.mxu0
        %v462 = vadd.f32 0.0, %v461
        %463 = vmatmul.bf16.gmra.mxu0 %v365
        %v464 = vpop.f32.mrf.mxu0
        %v465 = vadd.f32 0.0, %v464
        %v466 = vpop.f32.mrf.mxu0
        %v467 = vadd.f32 0.0, %v466
        %468 = vmatmul.bf16.gmra.mxu0 %v366
        %v469 = vpop.f32.mrf.mxu0
        %v470 = vadd.f32 0.0, %v469
        %v471 = vpop.f32.mrf.mxu0
        %v472 = vadd.f32 0.0, %v471
        %473 = vmatmul.bf16.gmra.mxu0 %v367
        %v474 = vpop.f32.mrf.mxu0
        %v475 = vadd.f32 0.0, %v474
        %v476 = vpop.f32.mrf.mxu0
        %v477 = vadd.f32 0.0, %v476
        %478 = vmatmul.bf16.gmra.mxu0 %v368
        %v479 = vpop.f32.mrf.mxu0
        %v480 = vadd.f32 0.0, %v479
        %v481 = vpop.f32.mrf.mxu0
        %v482 = vadd.f32 0.0, %v481
        %483 = vmatmul.bf16.gmra.mxu0 %v369
        %v484 = vpop.f32.mrf.mxu0
        %v485 = vadd.f32 0.0, %v484
        %v486 = vpop.f32.mrf.mxu0
        %v487 = vadd.f32 0.0, %v486
        %488 = vmatmul.bf16.gmra.mxu0 %v370
        %v489 = vpop.f32.mrf.mxu0
        %v490 = vadd.f32 0.0, %v489
        %v491 = vpop.f32.mrf.mxu0
        %v492 = vadd.f32 0.0, %v491
        %493 = vdwg.mxu0
        %v494 = vpack.c.bf16 %v440, %v440
        %v495 = vpack.c.bf16 %v442, %v442
        %v496 = vpack.c.bf16 %v445, %v445
        %v497 = vpack.c.bf16 %v447, %v447
        %v498 = vpack.c.bf16 %v450, %v450
        %v499 = vpack.c.bf16 %v452, %v452
        %v500 = vpack.c.bf16 %v455, %v455
        %v501 = vpack.c.bf16 %v457, %v457
        %v502 = vpack.c.bf16 %v460, %v460
        %v503 = vpack.c.bf16 %v462, %v462
        %v504 = vpack.c.bf16 %v465, %v465
        %v505 = vpack.c.bf16 %v467, %v467
        %v506 = vpack.c.bf16 %v470, %v470
        %v507 = vpack.c.bf16 %v472, %v472
        %v508 = vpack.c.bf16 %v475, %v475
        %v509 = vpack.c.bf16 %v477, %v477
        %v510 = vpack.c.bf16 %v480, %v480
        %v511 = vpack.c.bf16 %v482, %v482
        %v512 = vpack.c.bf16 %v485, %v485
        %v513 = vpack.c.bf16 %v487, %v487
        %v514 = vpack.c.bf16 %v490, %v490
        %v515 = vpack.c.bf16 %v492, %v492
        %516 = vst [vmem:[%s270] sm:$0xf] %v494
        %517 = vst [vmem:[%s270 + $0x4] sm:$0xf] %v495
        %518 = vst [vmem:[%s270 + $0x8] sm:$0xf] %v496
        %519 = vst [vmem:[%s270 + $0xc] sm:$0xf] %v497
        %520 = vst [vmem:[%s270 + $0x10] sm:$0xf] %v498
        %521 = vst [vmem:[%s270 + $0x14] sm:$0xf] %v499
        %522 = vst [vmem:[%s270 + $0x18] sm:$0xf] %v500
        %523 = vst [vmem:[%s270 + $0x1c] sm:$0xf] %v501
        %524 = vst [vmem:[%s270 + $0x20] sm:$0xf] %v502
        %525 = vst [vmem:[%s270 + $0x24] sm:$0xf] %v503
        %526 = vst [vmem:[%s270 + $0x28] sm:$0xf] %v504
        %527 = vst [vmem:[%s270 + $0x2c] sm:$0xf] %v505
        %528 = vst [vmem:[%s270 + $0x30] sm:$0xf] %v506
        %529 = vst [vmem:[%s270 + $0x34] sm:$0xf] %v507
        %530 = vst [vmem:[%s270 + $0x38] sm:$0xf] %v508
        %531 = vst [vmem:[%s270 + $0x3c] sm:$0xf] %v509
        %532 = vst [vmem:[%s270 + $0x40] sm:$0xf] %v510
        %533 = vst [vmem:[%s270 + $0x44] sm:$0xf] %v511
        %534 = vst [vmem:[%s270 + $0x48] sm:$0xf] %v512
        %535 = vst [vmem:[%s270 + $0x4c] sm:$0xf] %v513
        %536 = vst [vmem:[%s270 + $0x50] sm:$0xf] %v514
        %537 = vst [vmem:[%s270 + $0x54] sm:$0xf] %v515
        %s538 = sand.u32 %s87, 1
        %s539 = sand.u32 %s87, 1
        %s540 = smul.addr %s539, 88
        %s541 = scalar_lea.vmem [#allocation3], %s540
        // Predicated region
        $region70: #{model_forward.19} parent=64 // pred_check
          %p542 = pneg %p97
        $region71: #{model_forward.19} parent=64 // pred_check_branch
          %544 = sbr.rel (%p542) target = $region73
        $region72: #{model_forward.19} parent=64 // pred_region
          %s545 = smul.u32 22, %s17
          %s546 = smul.addr %s545, 2
          %s547 = sadd.s32 %s18, %s546
          %s548 = smul.addr %s547, 4
          %s549 = scalar_lea.vmem %s2, %s548
          // Predicated region
          $region74: #{model_forward.19} parent=72 // pred_check
            _
          $region75: #{model_forward.19} parent=72 // pred_check_branch
            %551 = sbr.rel (0) target = $region77
          $region76: #{model_forward.19} parent=72 // pred_region
            // Predicated region
            $region78: #{model_forward.19} parent=76 // pred_check
              _
            $region79: #{model_forward.19} parent=76 // pred_check_branch
              %553 = sbr.rel target = $region81
            $region80: #{model_forward.19} parent=76 // pred_region
              // Predicated region
              $region93: #{model_forward.19} parent=80 // pred_check
                _
              $region94: #{model_forward.19} parent=80 // pred_check_branch
                %611 = sbr.rel (0) target = $region96
              $region95: #{model_forward.19} parent=80 // pred_region
                loop: start=0, step=1, limit=1
                $region97: #{model_forward.19} parent=95 // loop_pre_header
                  _
                $region98: #{model_forward.19} parent=95 // loop_header
                  %s613 = sphi 0, %s617
                  %p614 = scmp.ge.s32.totalorder %s613, 1
                  %s618 = sphi %s541, %s541
                  %s619 = sphi %s549, %s549
                $region99: #{model_forward.19} parent=95 // loop_header_branch
                  %616 = sbr.rel (%p614) target = $region103
                $region100: #{model_forward.19} parent=95 // loop_body
                  _
                $region101: #{model_forward.19} parent=95 // loop_footer
                  %s617 = sadd.s32 1, %s613
                $region102: #{model_forward.19} parent=95 // loop_footer_branch
                  %612 = sbr.rel target = $region98
                $region103: #{model_forward.19} parent=95 // loop_exit
                  _
                %s621 = ssub.s32 16, 1
                loop: start=0, step=1, limit=1
                $region104: #{model_forward.19} parent=95 // loop_pre_header
                  _
                $region105: #{model_forward.19} parent=95 // loop_header
                  %s623 = sphi 0, %s627
                  %p624 = scmp.ge.s32.totalorder %s623, 1
                  %s628 = sphi %s541, %s541
                  %s629 = sphi %s549, %s549
                $region106: #{model_forward.19} parent=95 // loop_header_branch
                  %626 = sbr.rel (%p624) target = $region110
                $region107: #{model_forward.19} parent=95 // loop_body
                  %v630 = vld [vmem:[%s628] sm:%s621]
                  %631 = vst [vmem:[%s629] sm:%s621] %v630
                  %v632 = vld [vmem:[%s628 + $0x4] sm:%s621]
                  %633 = vst [vmem:[%s629 + $0x8] sm:%s621] %v632
                  %v634 = vld [vmem:[%s628 + $0x8] sm:%s621]
                  %635 = vst [vmem:[%s629 + $0x10] sm:%s621] %v634
                  %v636 = vld [vmem:[%s628 + $0xc] sm:%s621]
                  %637 = vst [vmem:[%s629 + $0x18] sm:%s621] %v636
                  %v638 = vld [vmem:[%s628 + $0x10] sm:%s621]
                  %639 = vst [vmem:[%s629 + $0x20] sm:%s621] %v638
                  %v640 = vld [vmem:[%s628 + $0x14] sm:%s621]
                  %641 = vst [vmem:[%s629 + $0x28] sm:%s621] %v640
                  %v642 = vld [vmem:[%s628 + $0x18] sm:%s621]
                  %643 = vst [vmem:[%s629 + $0x30] sm:%s621] %v642
                  %v644 = vld [vmem:[%s628 + $0x1c] sm:%s621]
                  %645 = vst [vmem:[%s629 + $0x38] sm:%s621] %v644
                  %v646 = vld [vmem:[%s628 + $0x20] sm:%s621]
                  %647 = vst [vmem:[%s629 + $0x40] sm:%s621] %v646
                  %v648 = vld [vmem:[%s628 + $0x24] sm:%s621]
                  %649 = vst [vmem:[%s629 + $0x48] sm:%s621] %v648
                  %v650 = vld [vmem:[%s628 + $0x28] sm:%s621]
                  %651 = vst [vmem:[%s629 + $0x50] sm:%s621] %v650
                  %v652 = vld [vmem:[%s628 + $0x2c] sm:%s621]
                  %653 = vst [vmem:[%s629 + $0x58] sm:%s621] %v652
                  %v654 = vld [vmem:[%s628 + $0x30] sm:%s621]
                  %655 = vst [vmem:[%s629 + $0x60] sm:%s621] %v654
                  %v656 = vld [vmem:[%s628 + $0x34] sm:%s621]
                  %657 = vst [vmem:[%s629 + $0x68] sm:%s621] %v656
                  %v658 = vld [vmem:[%s628 + $0x38] sm:%s621]
                  %659 = vst [vmem:[%s629 + $0x70] sm:%s621] %v658
                  %v660 = vld [vmem:[%s628 + $0x3c] sm:%s621]
                  %661 = vst [vmem:[%s629 + $0x78] sm:%s621] %v660
                  %v662 = vld [vmem:[%s628 + $0x40] sm:%s621]
                  %663 = vst [vmem:[%s629 + $0x80] sm:%s621] %v662
                  %v664 = vld [vmem:[%s628 + $0x44] sm:%s621]
                  %665 = vst [vmem:[%s629 + $0x88] sm:%s621] %v664
                  %v666 = vld [vmem:[%s628 + $0x48] sm:%s621]
                  %667 = vst [vmem:[%s629 + $0x90] sm:%s621] %v666
                  %v668 = vld [vmem:[%s628 + $0x4c] sm:%s621]
                  %669 = vst [vmem:[%s629 + $0x98] sm:%s621] %v668
                  %v670 = vld [vmem:[%s628 + $0x50] sm:%s621]
                  %671 = vst [vmem:[%s629 + $0xa0] sm:%s621] %v670
                  %v672 = vld [vmem:[%s628 + $0x54] sm:%s621]
                  %673 = vst [vmem:[%s629 + $0xa8] sm:%s621] %v672
                $region108: #{model_forward.19} parent=95 // loop_footer
                  %s627 = sadd.s32 1, %s623
                $region109: #{model_forward.19} parent=95 // loop_footer_branch
                  %622 = sbr.rel target = $region105
                $region110: #{model_forward.19} parent=95 // loop_exit
                  _
              $region96: #{model_forward.19} parent=80 // pred_fallthru
                _
            $region81: #{model_forward.19} parent=76 // pred_fallthru
              _
            // Predicated region
            $region82: #{model_forward.19} parent=76 // pred_check
              _
            $region83: #{model_forward.19} parent=76 // pred_check_branch
              %555 = sbr.rel (0) target = $region85
            $region84: #{model_forward.19} parent=76 // pred_region
              %s557 = ssub.s32 16, 1
              loop: start=0, step=1, limit=1
              $region86: #{model_forward.19} parent=84 // loop_pre_header
                _
              $region87: #{model_forward.19} parent=84 // loop_header
                %s559 = sphi 0, %s563
                %p560 = scmp.ge.s32.totalorder %s559, 1
                %s564 = sphi %s541, %s541
                %s565 = sphi %s549, %s549
              $region88: #{model_forward.19} parent=84 // loop_header_branch
                %562 = sbr.rel (%p560) target = $region92
              $region89: #{model_forward.19} parent=84 // loop_body
                %v566 = vld [vmem:[%s564] sm:%s557]
                %567 = vst [vmem:[%s565] sm:%s557] %v566
                %v568 = vld [vmem:[%s564 + $0x4] sm:%s557]
                %569 = vst [vmem:[%s565 + $0x8] sm:%s557] %v568
                %v570 = vld [vmem:[%s564 + $0x8] sm:%s557]
                %571 = vst [vmem:[%s565 + $0x10] sm:%s557] %v570
                %v572 = vld [vmem:[%s564 + $0xc] sm:%s557]
                %573 = vst [vmem:[%s565 + $0x18] sm:%s557] %v572
                %v574 = vld [vmem:[%s564 + $0x10] sm:%s557]
                %575 = vst [vmem:[%s565 + $0x20] sm:%s557] %v574
                %v576 = vld [vmem:[%s564 + $0x14] sm:%s557]
                %577 = vst [vmem:[%s565 + $0x28] sm:%s557] %v576
                %v578 = vld [vmem:[%s564 + $0x18] sm:%s557]
                %579 = vst [vmem:[%s565 + $0x30] sm:%s557] %v578
                %v580 = vld [vmem:[%s564 + $0x1c] sm:%s557]
                %581 = vst [vmem:[%s565 + $0x38] sm:%s557] %v580
                %v582 = vld [vmem:[%s564 + $0x20] sm:%s557]
                %583 = vst [vmem:[%s565 + $0x40] sm:%s557] %v582
                %v584 = vld [vmem:[%s564 + $0x24] sm:%s557]
                %585 = vst [vmem:[%s565 + $0x48] sm:%s557] %v584
                %v586 = vld [vmem:[%s564 + $0x28] sm:%s557]
                %587 = vst [vmem:[%s565 + $0x50] sm:%s557] %v586
                %v588 = vld [vmem:[%s564 + $0x2c] sm:%s557]
                %589 = vst [vmem:[%s565 + $0x58] sm:%s557] %v588
                %v590 = vld [vmem:[%s564 + $0x30] sm:%s557]
                %591 = vst [vmem:[%s565 + $0x60] sm:%s557] %v590
                %v592 = vld [vmem:[%s564 + $0x34] sm:%s557]
                %593 = vst [vmem:[%s565 + $0x68] sm:%s557] %v592
                %v594 = vld [vmem:[%s564 + $0x38] sm:%s557]
                %595 = vst [vmem:[%s565 + $0x70] sm:%s557] %v594
                %v596 = vld [vmem:[%s564 + $0x3c] sm:%s557]
                %597 = vst [vmem:[%s565 + $0x78] sm:%s557] %v596
                %v598 = vld [vmem:[%s564 + $0x40] sm:%s557]
                %599 = vst [vmem:[%s565 + $0x80] sm:%s557] %v598
                %v600 = vld [vmem:[%s564 + $0x44] sm:%s557]
                %601 = vst [vmem:[%s565 + $0x88] sm:%s557] %v600
                %v602 = vld [vmem:[%s564 + $0x48] sm:%s557]
                %603 = vst [vmem:[%s565 + $0x90] sm:%s557] %v602
                %v604 = vld [vmem:[%s564 + $0x4c] sm:%s557]
                %605 = vst [vmem:[%s565 + $0x98] sm:%s557] %v604
                %v606 = vld [vmem:[%s564 + $0x50] sm:%s557]
                %607 = vst [vmem:[%s565 + $0xa0] sm:%s557] %v606
                %v608 = vld [vmem:[%s564 + $0x54] sm:%s557]
                %609 = vst [vmem:[%s565 + $0xa8] sm:%s557] %v608
              $region90: #{model_forward.19} parent=84 // loop_footer
                %s563 = sadd.s32 1, %s559
              $region91: #{model_forward.19} parent=84 // loop_footer_branch
                %558 = sbr.rel target = $region87
              $region92: #{model_forward.19} parent=84 // loop_exit
                _
            $region85: #{model_forward.19} parent=76 // pred_fallthru
              _
          $region77: #{model_forward.19} parent=72 // pred_fallthru
            _
          %674 = vnop
        $region73: #{model_forward.19} parent=64 // pred_fallthru
          _
      $region65: #{model_forward.19} parent=5 // pred_fallthru
        _
      %p675 = scmp.le.s32.totalorder 2, %s8
      // Predicated region
      $region111: #{model_forward.19} parent=5 // pred_check
        %p676 = pneg %p675
      $region112: #{model_forward.19} parent=5 // pred_check_branch
        %678 = sbr.rel (%p676) target = $region114
      $region113: #{model_forward.19} parent=5 // pred_region
        %s679 = ssub.s32 %s8, 2
        // Predicated region
        $region115: #{model_forward.19} parent=113 // pred_check
          %p680 = pneg %p103
        $region116: #{model_forward.19} parent=113 // pred_check_branch
          %682 = sbr.rel (%p680) target = $region118
        $region117: #{model_forward.19} parent=113 // pred_region
          %s683 = sand.u32 %s88, 1
          %s684 = sand.u32 %s88, 1
          %s685 = smul.addr %s684, 88
          %s686 = scalar_lea.vmem [#allocation3], %s685
        $region118: #{model_forward.19} parent=113 // pred_fallthru
          _
      $region114: #{model_forward.19} parent=5 // pred_fallthru
        _
    $region6: #{model_forward.19} parent=1 // loop_footer
      %s12 = sadd.s32 1, %s8
    $region7: #{model_forward.19} parent=1 // loop_footer_branch
      %7 = sbr.rel target = $region3
    $region8: #{model_forward.19} parent=1 // loop_exit
      _

// kernel: model_forward.20
$region0: #{model_forward.20}
  #allocation0 [shape = 'u32[]', space=smem, size = 0x4, offset = 0x4, fixed_abs, tag = 'smem constant byte address 0x4 - core index']
  #allocation1 [shape = 'u32[72,128]{1,0:T(1,128)}', space=vmem, size = 0x9000, scoped, tag = 'internal scratch']
  %s0 = inlined_call_operand.vmem [shape: bf16[176,128], index: 0, kind: input, shape index: {}]
  %s1 = inlined_call_operand.vmem [shape: bf16[128,256], index: 1, kind: input, shape index: {}]
  %s2 = inlined_call_operand.vmem [shape: bf16[176,256], index: 2, kind: input, shape index: {}]
  %s3 = inlined_call_operand.vmem [shape: bf16[176,256], index: 3, kind: output, shape index: {}]
  %s4 = sld [smem:[#allocation0]]
  $region164: #{model_forward.20} parent=0
    _
  %s6 = ssub.s32 1, %s4
  %s7 = scalar_select 0, %s6, %s4
  $region1: #{model_forward.20} parent=0
    #allocation2 [shape = 'u8[65536]{0}', space=vmem, size = 0x10000, scoped, tag = 'input window, operand 1']
    #allocation3 [shape = 'u8[90112]{0}', space=vmem, size = 0x16000, scoped, tag = 'input window, operand 2']
    #allocation4 [shape = 'u8[90112]{0}', space=vmem, size = 0x16000, scoped, tag = 'output window, operand 0']
    loop: start=0, step=1, limit=4
    $region2: #{model_forward.20} parent=1 // loop_pre_header
      _
    $region3: #{model_forward.20} parent=1 // loop_header
      %s9 = sphi 0, %s13
      %p10 = scmp.ge.s32.totalorder %s9, 4
      %s16 = sphi 0, %s28
      %s17 = sphi 0, %s24
      %s18 = sphi 0, %s16
      %s19 = sphi 0, %s17
      %s20 = sphi 0, %s18
      %s21 = sphi 0, %s19
      %s31 = sphi 0, %s33
      %s34 = sphi 0, %s31
      %s35 = sphi 0, %s34
      %s51 = sphi 0, %s35
      %s57 = sphi 0, %s59
      %s60 = sphi 0, %s57
      %s61 = sphi 0, %s60
      %s77 = sphi 0, %s61
      %s85 = sphi 0, %s87
      %s88 = sphi 0, %s85
      %s89 = sphi 0, %s88
      %s105 = sphi 0, %s89
      %s113 = sphi 0, %s115
      %s116 = sphi 0, %s113
      %s117 = sphi 0, %s116
      %s133 = sphi 0, %s117
    $region4: #{model_forward.20} parent=1 // loop_header_branch
      %12 = sbr.rel (%p10) target = $region8
    $region5: #{model_forward.20} parent=1 // loop_body
      %s14 = ssub.s32 %s9, 1
      %s15 = ssub.s32 %s9, 2
      %s22 = sadd.s32 1, %s17
      %p23 = scmp.ge.s32.totalorder %s22, 2
      %s24 = scalar_select %p23, 0, %s22
      %s25 = sadd.s32 1, %s16
      %s26 = scalar_select %p23, %s25, %s16
      %p27 = scmp.ge.s32.totalorder %s26, 1
      %s28 = scalar_select %p27, 0, %s26
      %s29 = ssub.s32 %s16, %s28
      %p30 = scmp.eq.s32.totalorder %s29, 0
      %s32 = sadd.s32 %s31, 1
      %s33 = scalar_select %p30, %s31, %s32
      %p36 = pneg %p30
      %p37 = scmp.eq.s32.totalorder %s9, 1
      %p38 = por %p36, %p37
      %p39 = scmp.ne.s32.totalorder %s31, %s34
      %p40 = scmp.eq.s32.totalorder %s9, 0
      %p41 = por %p39, %p40
      %p42 = scmp.ne.s32.totalorder %s31, %s34
      %p43 = scmp.eq.s32.totalorder %s14, 1
      %p44 = por %p42, %p43
      %p45 = scmp.ne.s32.totalorder %s34, %s35
      %p46 = scmp.eq.s32.totalorder %s14, 0
      %p47 = por %p45, %p46
      %p48 = scmp.ne.s32.totalorder %s34, %s35
      %p49 = scmp.eq.s32.totalorder %s15, 1
      %p50 = por %p48, %p49
      %p52 = scmp.ne.s32.totalorder %s35, %s51
      %p53 = scmp.eq.s32.totalorder %s15, 0
      %p54 = por %p52, %p53
      %s55 = ssub.s32 %s17, %s24
      %p56 = scmp.eq.s32.totalorder %s55, 0
      %s58 = sadd.s32 %s57, 1
      %s59 = scalar_select %p56, %s57, %s58
      %p62 = pneg %p56
      %p63 = scmp.eq.s32.totalorder %s9, 1
      %p64 = por %p62, %p63
      %p65 = scmp.ne.s32.totalorder %s57, %s60
      %p66 = scmp.eq.s32.totalorder %s9, 0
      %p67 = por %p65, %p66
      %p68 = scmp.ne.s32.totalorder %s57, %s60
      %p69 = scmp.eq.s32.totalorder %s14, 1
      %p70 = por %p68, %p69
      %p71 = scmp.ne.s32.totalorder %s60, %s61
      %p72 = scmp.eq.s32.totalorder %s14, 0
      %p73 = por %p71, %p72
      %p74 = scmp.ne.s32.totalorder %s60, %s61
      %p75 = scmp.eq.s32.totalorder %s15, 1
      %p76 = por %p74, %p75
      %p78 = scmp.ne.s32.totalorder %s61, %s77
      %p79 = scmp.eq.s32.totalorder %s15, 0
      %p80 = por %p78, %p79
      %s81 = ssub.s32 %s16, %s28
      %s82 = ssub.s32 %s17, %s24
      %s83 = sor.u32 %s81, %s82
      %p84 = scmp.eq.s32.totalorder %s83, 0
      %s86 = sadd.s32 %s85, 1
      %s87 = scalar_select %p84, %s85, %s86
      %p90 = pneg %p84
      %p91 = scmp.eq.s32.totalorder %s9, 1
      %p92 = por %p90, %p91
      %p93 = scmp.ne.s32.totalorder %s85, %s88
      %p94 = scmp.eq.s32.totalorder %s9, 0
      %p95 = por %p93, %p94
      %p96 = scmp.ne.s32.totalorder %s85, %s88
      %p97 = scmp.eq.s32.totalorder %s14, 1
      %p98 = por %p96, %p97
      %p99 = scmp.ne.s32.totalorder %s88, %s89
      %p100 = scmp.eq.s32.totalorder %s14, 0
      %p101 = por %p99, %p100
      %p102 = scmp.ne.s32.totalorder %s88, %s89
      %p103 = scmp.eq.s32.totalorder %s15, 1
      %p104 = por %p102, %p103
      %p106 = scmp.ne.s32.totalorder %s89, %s105
      %p107 = scmp.eq.s32.totalorder %s15, 0
      %p108 = por %p106, %p107
      %s109 = ssub.s32 %s16, %s28
      %s110 = ssub.s32 %s17, %s24
      %s111 = sor.u32 %s109, %s110
      %p112 = scmp.eq.s32.totalorder %s111, 0
      %s114 = sadd.s32 %s113, 1
      %s115 = scalar_select %p112, %s113, %s114
      %p118 = pneg %p112
      %p119 = scmp.eq.s32.totalorder %s9, 1
      %p120 = por %p118, %p119
      %p121 = scmp.ne.s32.totalorder %s113, %s116
      %p122 = scmp.eq.s32.totalorder %s9, 0
      %p123 = por %p121, %p122
      %p124 = scmp.ne.s32.totalorder %s113, %s116
      %p125 = scmp.eq.s32.totalorder %s14, 1
      %p126 = por %p124, %p125
      %p127 = scmp.ne.s32.totalorder %s116, %s117
      %p128 = scmp.eq.s32.totalorder %s14, 0
      %p129 = por %p127, %p128
      %p130 = scmp.ne.s32.totalorder %s116, %s117
      %p131 = scmp.eq.s32.totalorder %s15, 1
      %p132 = por %p130, %p131
      %p134 = scmp.ne.s32.totalorder %s117, %s133
      %p135 = scmp.eq.s32.totalorder %s15, 0
      %p136 = por %p134, %p135
      %p137 = scmp.le.s32.totalorder 1, %s9
      %p138 = scmp.lt.s32.totalorder %s9, 3
      %p139 = pnand %p137, %p138
      %p140 = pneg %p139
      // Predicated region
      $region9: #{model_forward.20} parent=5 // pred_check
        _
      $region10: #{model_forward.20} parent=5 // pred_check_branch
        %142 = sbr.rel (%p139) target = $region12
      $region11: #{model_forward.20} parent=5 // pred_region
        %s143 = ssub.s32 %s9, 1
        // Predicated region
        $region13: #{model_forward.20} parent=11 // pred_check
          %p144 = pneg %p47
        $region14: #{model_forward.20} parent=11 // pred_check_branch
          %146 = sbr.rel (%p144) target = $region16
        $region15: #{model_forward.20} parent=11 // pred_region
          %s147 = smul.u32 22, %s18
          %p148 = scmp.lt.s32.totalorder %s147, 21
          %s149 = scalar_select %p148, %s147, 21
          %s150 = smul.addr %s149, 4
          %s151 = scalar_lea.vmem %s0, %s150
          %s152 = smul.u32 22, %s18
        $region16: #{model_forward.20} parent=11 // pred_fallthru
          _
      $region12: #{model_forward.20} parent=5 // pred_fallthru
        _
      %p153 = scmp.lt.s32.totalorder %s9, 2
      // Predicated region
      $region17: #{model_forward.20} parent=5 // pred_check
        %p154 = pneg %p153
      $region18: #{model_forward.20} parent=5 // pred_check_branch
        %156 = sbr.rel (%p154) target = $region20
      $region19: #{model_forward.20} parent=5 // pred_region
        // Predicated region
        $region21: #{model_forward.20} parent=19 // pred_check
          %p157 = pneg %p67
        $region22: #{model_forward.20} parent=19 // pred_check_branch
          %159 = sbr.rel (%p157) target = $region24
        $region23: #{model_forward.20} parent=19 // pred_region
          %s160 = sand.u32 %s57, 1
          %s161 = sand.u32 %s57, 1
          %s162 = smul.addr %s161, 64
          %s163 = scalar_lea.vmem [#allocation2], %s162
          %s164 = smul.addr %s17, 4
          %s165 = scalar_lea.vmem %s1, %s164
          // Predicated region
          $region25: #{model_forward.20} parent=23 // pred_check
            _
          $region26: #{model_forward.20} parent=23 // pred_check_branch
            %167 = sbr.rel (0) target = $region28
          $region27: #{model_forward.20} parent=23 // pred_region
            // Predicated region
            $region29: #{model_forward.20} parent=27 // pred_check
              _
            $region30: #{model_forward.20} parent=27 // pred_check_branch
              %169 = sbr.rel target = $region32
            $region31: #{model_forward.20} parent=27 // pred_region
              // Predicated region
              $region44: #{model_forward.20} parent=31 // pred_check
                _
              $region45: #{model_forward.20} parent=31 // pred_check_branch
                %215 = sbr.rel (0) target = $region47
              $region46: #{model_forward.20} parent=31 // pred_region
                loop: start=0, step=1, limit=1
                $region48: #{model_forward.20} parent=46 // loop_pre_header
                  _
                $region49: #{model_forward.20} parent=46 // loop_header
                  %s217 = sphi 0, %s221
                  %p218 = scmp.ge.s32.totalorder %s217, 1
                  %s222 = sphi %s165, %s165
                  %s223 = sphi %s163, %s163
                $region50: #{model_forward.20} parent=46 // loop_header_branch
                  %220 = sbr.rel (%p218) target = $region54
                $region51: #{model_forward.20} parent=46 // loop_body
                  _
                $region52: #{model_forward.20} parent=46 // loop_footer
                  %s221 = sadd.s32 1, %s217
                $region53: #{model_forward.20} parent=46 // loop_footer_branch
                  %216 = sbr.rel target = $region49
                $region54: #{model_forward.20} parent=46 // loop_exit
                  _
                %s225 = ssub.s32 16, 1
                loop: start=0, step=1, limit=1
                $region55: #{model_forward.20} parent=46 // loop_pre_header
                  _
                $region56: #{model_forward.20} parent=46 // loop_header
                  %s227 = sphi 0, %s231
                  %p228 = scmp.ge.s32.totalorder %s227, 1
                  %s232 = sphi %s165, %s165
                  %s233 = sphi %s163, %s163
                $region57: #{model_forward.20} parent=46 // loop_header_branch
                  %230 = sbr.rel (%p228) target = $region61
                $region58: #{model_forward.20} parent=46 // loop_body
                  %v234 = vld [vmem:[%s232] sm:%s225]
                  %235 = vst [vmem:[%s233] sm:%s225] %v234
                  %v236 = vld [vmem:[%s232 + $0x8] sm:%s225]
                  %237 = vst [vmem:[%s233 + $0x4] sm:%s225] %v236
                  %v238 = vld [vmem:[%s232 + $0x10] sm:%s225]
                  %239 = vst [vmem:[%s233 + $0x8] sm:%s225] %v238
                  %v240 = vld [vmem:[%s232 + $0x18] sm:%s225]
                  %241 = vst [vmem:[%s233 + $0xc] sm:%s225] %v240
                  %v242 = vld [vmem:[%s232 + $0x20] sm:%s225]
                  %243 = vst [vmem:[%s233 + $0x10] sm:%s225] %v242
                  %v244 = vld [vmem:[%s232 + $0x28] sm:%s225]
                  %245 = vst [vmem:[%s233 + $0x14] sm:%s225] %v244
                  %v246 = vld [vmem:[%s232 + $0x30] sm:%s225]
                  %247 = vst [vmem:[%s233 + $0x18] sm:%s225] %v246
                  %v248 = vld [vmem:[%s232 + $0x38] sm:%s225]
                  %249 = vst [vmem:[%s233 + $0x1c] sm:%s225] %v248
                  %v250 = vld [vmem:[%s232 + $0x40] sm:%s225]
                  %251 = vst [vmem:[%s233 + $0x20] sm:%s225] %v250
                  %v252 = vld [vmem:[%s232 + $0x48] sm:%s225]
                  %253 = vst [vmem:[%s233 + $0x24] sm:%s225] %v252
                  %v254 = vld [vmem:[%s232 + $0x50] sm:%s225]
                  %255 = vst [vmem:[%s233 + $0x28] sm:%s225] %v254
                  %v256 = vld [vmem:[%s232 + $0x58] sm:%s225]
                  %257 = vst [vmem:[%s233 + $0x2c] sm:%s225] %v256
                  %v258 = vld [vmem:[%s232 + $0x60] sm:%s225]
                  %259 = vst [vmem:[%s233 + $0x30] sm:%s225] %v258
                  %v260 = vld [vmem:[%s232 + $0x68] sm:%s225]
                  %261 = vst [vmem:[%s233 + $0x34] sm:%s225] %v260
                  %v262 = vld [vmem:[%s232 + $0x70] sm:%s225]
                  %263 = vst [vmem:[%s233 + $0x38] sm:%s225] %v262
                  %v264 = vld [vmem:[%s232 + $0x78] sm:%s225]
                  %265 = vst [vmem:[%s233 + $0x3c] sm:%s225] %v264
                $region59: #{model_forward.20} parent=46 // loop_footer
                  %s231 = sadd.s32 1, %s227
                $region60: #{model_forward.20} parent=46 // loop_footer_branch
                  %226 = sbr.rel target = $region56
                $region61: #{model_forward.20} parent=46 // loop_exit
                  _
              $region47: #{model_forward.20} parent=31 // pred_fallthru
                _
            $region32: #{model_forward.20} parent=27 // pred_fallthru
              _
            // Predicated region
            $region33: #{model_forward.20} parent=27 // pred_check
              _
            $region34: #{model_forward.20} parent=27 // pred_check_branch
              %171 = sbr.rel (0) target = $region36
            $region35: #{model_forward.20} parent=27 // pred_region
              %s173 = ssub.s32 16, 1
              loop: start=0, step=1, limit=1
              $region37: #{model_forward.20} parent=35 // loop_pre_header
                _
              $region38: #{model_forward.20} parent=35 // loop_header
                %s175 = sphi 0, %s179
                %p176 = scmp.ge.s32.totalorder %s175, 1
                %s180 = sphi %s165, %s165
                %s181 = sphi %s163, %s163
              $region39: #{model_forward.20} parent=35 // loop_header_branch
                %178 = sbr.rel (%p176) target = $region43
              $region40: #{model_forward.20} parent=35 // loop_body
                %v182 = vld [vmem:[%s180] sm:%s173]
                %183 = vst [vmem:[%s181] sm:%s173] %v182
                %v184 = vld [vmem:[%s180 + $0x8] sm:%s173]
                %185 = vst [vmem:[%s181 + $0x4] sm:%s173] %v184
                %v186 = vld [vmem:[%s180 + $0x10] sm:%s173]
                %187 = vst [vmem:[%s181 + $0x8] sm:%s173] %v186
                %v188 = vld [vmem:[%s180 + $0x18] sm:%s173]
                %189 = vst [vmem:[%s181 + $0xc] sm:%s173] %v188
                %v190 = vld [vmem:[%s180 + $0x20] sm:%s173]
                %191 = vst [vmem:[%s181 + $0x10] sm:%s173] %v190
                %v192 = vld [vmem:[%s180 + $0x28] sm:%s173]
                %193 = vst [vmem:[%s181 + $0x14] sm:%s173] %v192
                %v194 = vld [vmem:[%s180 + $0x30] sm:%s173]
                %195 = vst [vmem:[%s181 + $0x18] sm:%s173] %v194
                %v196 = vld [vmem:[%s180 + $0x38] sm:%s173]
                %197 = vst [vmem:[%s181 + $0x1c] sm:%s173] %v196
                %v198 = vld [vmem:[%s180 + $0x40] sm:%s173]
                %199 = vst [vmem:[%s181 + $0x20] sm:%s173] %v198
                %v200 = vld [vmem:[%s180 + $0x48] sm:%s173]
                %201 = vst [vmem:[%s181 + $0x24] sm:%s173] %v200
                %v202 = vld [vmem:[%s180 + $0x50] sm:%s173]
                %203 = vst [vmem:[%s181 + $0x28] sm:%s173] %v202
                %v204 = vld [vmem:[%s180 + $0x58] sm:%s173]
                %205 = vst [vmem:[%s181 + $0x2c] sm:%s173] %v204
                %v206 = vld [vmem:[%s180 + $0x60] sm:%s173]
                %207 = vst [vmem:[%s181 + $0x30] sm:%s173] %v206
                %v208 = vld [vmem:[%s180 + $0x68] sm:%s173]
                %209 = vst [vmem:[%s181 + $0x34] sm:%s173] %v208
                %v210 = vld [vmem:[%s180 + $0x70] sm:%s173]
                %211 = vst [vmem:[%s181 + $0x38] sm:%s173] %v210
                %v212 = vld [vmem:[%s180 + $0x78] sm:%s173]
                %213 = vst [vmem:[%s181 + $0x3c] sm:%s173] %v212
              $region41: #{model_forward.20} parent=35 // loop_footer
                %s179 = sadd.s32 1, %s175
              $region42: #{model_forward.20} parent=35 // loop_footer_branch
                %174 = sbr.rel target = $region38
              $region43: #{model_forward.20} parent=35 // loop_exit
                _
            $region36: #{model_forward.20} parent=27 // pred_fallthru
              _
          $region28: #{model_forward.20} parent=23 // pred_fallthru
            _
          %266 = vnop
        $region24: #{model_forward.20} parent=19 // pred_fallthru
          _
        // Predicated region
        $region62: #{model_forward.20} parent=19 // pred_check
          %p267 = pneg %p95
        $region63: #{model_forward.20} parent=19 // pred_check_branch
          %269 = sbr.rel (%p267) target = $region65
        $region64: #{model_forward.20} parent=19 // pred_region
          %s270 = sand.u32 %s85, 1
          %s271 = sand.u32 %s85, 1
          %s272 = smul.addr %s271, 88
          %s273 = scalar_lea.vmem [#allocation3], %s272
          %s274 = smul.u32 22, %s16
          %s275 = smul.addr %s274, 2
          %s276 = sadd.s32 %s17, %s275
          %s277 = smul.addr %s276, 4
          %s278 = scalar_lea.vmem %s2, %s277
          // Predicated region
          $region66: #{model_forward.20} parent=64 // pred_check
            _
          $region67: #{model_forward.20} parent=64 // pred_check_branch
            %280 = sbr.rel (0) target = $region69
          $region68: #{model_forward.20} parent=64 // pred_region
            // Predicated region
            $region70: #{model_forward.20} parent=68 // pred_check
              _
            $region71: #{model_forward.20} parent=68 // pred_check_branch
              %282 = sbr.rel target = $region73
            $region72: #{model_forward.20} parent=68 // pred_region
              // Predicated region
              $region85: #{model_forward.20} parent=72 // pred_check
                _
              $region86: #{model_forward.20} parent=72 // pred_check_branch
                %340 = sbr.rel (0) target = $region88
              $region87: #{model_forward.20} parent=72 // pred_region
                loop: start=0, step=1, limit=1
                $region89: #{model_forward.20} parent=87 // loop_pre_header
                  _
                $region90: #{model_forward.20} parent=87 // loop_header
                  %s342 = sphi 0, %s346
                  %p343 = scmp.ge.s32.totalorder %s342, 1
                  %s347 = sphi %s278, %s278
                  %s348 = sphi %s273, %s273
                $region91: #{model_forward.20} parent=87 // loop_header_branch
                  %345 = sbr.rel (%p343) target = $region95
                $region92: #{model_forward.20} parent=87 // loop_body
                  _
                $region93: #{model_forward.20} parent=87 // loop_footer
                  %s346 = sadd.s32 1, %s342
                $region94: #{model_forward.20} parent=87 // loop_footer_branch
                  %341 = sbr.rel target = $region90
                $region95: #{model_forward.20} parent=87 // loop_exit
                  _
                %s350 = ssub.s32 16, 1
                loop: start=0, step=1, limit=1
                $region96: #{model_forward.20} parent=87 // loop_pre_header
                  _
                $region97: #{model_forward.20} parent=87 // loop_header
                  %s352 = sphi 0, %s356
                  %p353 = scmp.ge.s32.totalorder %s352, 1
                  %s357 = sphi %s278, %s278
                  %s358 = sphi %s273, %s273
                $region98: #{model_forward.20} parent=87 // loop_header_branch
                  %355 = sbr.rel (%p353) target = $region102
                $region99: #{model_forward.20} parent=87 // loop_body
                  %v359 = vld [vmem:[%s357] sm:%s350]
                  %360 = vst [vmem:[%s358] sm:%s350] %v359
                  %v361 = vld [vmem:[%s357 + $0x8] sm:%s350]
                  %362 = vst [vmem:[%s358 + $0x4] sm:%s350] %v361
                  %v363 = vld [vmem:[%s357 + $0x10] sm:%s350]
                  %364 = vst [vmem:[%s358 + $0x8] sm:%s350] %v363
                  %v365 = vld [vmem:[%s357 + $0x18] sm:%s350]
                  %366 = vst [vmem:[%s358 + $0xc] sm:%s350] %v365
                  %v367 = vld [vmem:[%s357 + $0x20] sm:%s350]
                  %368 = vst [vmem:[%s358 + $0x10] sm:%s350] %v367
                  %v369 = vld [vmem:[%s357 + $0x28] sm:%s350]
                  %370 = vst [vmem:[%s358 + $0x14] sm:%s350] %v369
                  %v371 = vld [vmem:[%s357 + $0x30] sm:%s350]
                  %372 = vst [vmem:[%s358 + $0x18] sm:%s350] %v371
                  %v373 = vld [vmem:[%s357 + $0x38] sm:%s350]
                  %374 = vst [vmem:[%s358 + $0x1c] sm:%s350] %v373
                  %v375 = vld [vmem:[%s357 + $0x40] sm:%s350]
                  %376 = vst [vmem:[%s358 + $0x20] sm:%s350] %v375
                  %v377 = vld [vmem:[%s357 + $0x48] sm:%s350]
                  %378 = vst [vmem:[%s358 + $0x24] sm:%s350] %v377
                  %v379 = vld [vmem:[%s357 + $0x50] sm:%s350]
                  %380 = vst [vmem:[%s358 + $0x28] sm:%s350] %v379
                  %v381 = vld [vmem:[%s357 + $0x58] sm:%s350]
                  %382 = vst [vmem:[%s358 + $0x2c] sm:%s350] %v381
                  %v383 = vld [vmem:[%s357 + $0x60] sm:%s350]
                  %384 = vst [vmem:[%s358 + $0x30] sm:%s350] %v383
                  %v385 = vld [vmem:[%s357 + $0x68] sm:%s350]
                  %386 = vst [vmem:[%s358 + $0x34] sm:%s350] %v385
                  %v387 = vld [vmem:[%s357 + $0x70] sm:%s350]
                  %388 = vst [vmem:[%s358 + $0x38] sm:%s350] %v387
                  %v389 = vld [vmem:[%s357 + $0x78] sm:%s350]
                  %390 = vst [vmem:[%s358 + $0x3c] sm:%s350] %v389
                  %v391 = vld [vmem:[%s357 + $0x80] sm:%s350]
                  %392 = vst [vmem:[%s358 + $0x40] sm:%s350] %v391
                  %v393 = vld [vmem:[%s357 + $0x88] sm:%s350]
                  %394 = vst [vmem:[%s358 + $0x44] sm:%s350] %v393
                  %v395 = vld [vmem:[%s357 + $0x90] sm:%s350]
                  %396 = vst [vmem:[%s358 + $0x48] sm:%s350] %v395
                  %v397 = vld [vmem:[%s357 + $0x98] sm:%s350]
                  %398 = vst [vmem:[%s358 + $0x4c] sm:%s350] %v397
                  %v399 = vld [vmem:[%s357 + $0xa0] sm:%s350]
                  %400 = vst [vmem:[%s358 + $0x50] sm:%s350] %v399
                  %v401 = vld [vmem:[%s357 + $0xa8] sm:%s350]
                  %402 = vst [vmem:[%s358 + $0x54] sm:%s350] %v401
                $region100: #{model_forward.20} parent=87 // loop_footer
                  %s356 = sadd.s32 1, %s352
                $region101: #{model_forward.20} parent=87 // loop_footer_branch
                  %351 = sbr.rel target = $region97
                $region102: #{model_forward.20} parent=87 // loop_exit
                  _
              $region88: #{model_forward.20} parent=72 // pred_fallthru
                _
            $region73: #{model_forward.20} parent=68 // pred_fallthru
              _
            // Predicated region
            $region74: #{model_forward.20} parent=68 // pred_check
              _
            $region75: #{model_forward.20} parent=68 // pred_check_branch
              %284 = sbr.rel (0) target = $region77
            $region76: #{model_forward.20} parent=68 // pred_region
              %s286 = ssub.s32 16, 1
              loop: start=0, step=1, limit=1
              $region78: #{model_forward.20} parent=76 // loop_pre_header
                _
              $region79: #{model_forward.20} parent=76 // loop_header
                %s288 = sphi 0, %s292
                %p289 = scmp.ge.s32.totalorder %s288, 1
                %s293 = sphi %s278, %s278
                %s294 = sphi %s273, %s273
              $region80: #{model_forward.20} parent=76 // loop_header_branch
                %291 = sbr.rel (%p289) target = $region84
              $region81: #{model_forward.20} parent=76 // loop_body
                %v295 = vld [vmem:[%s293] sm:%s286]
                %296 = vst [vmem:[%s294] sm:%s286] %v295
                %v297 = vld [vmem:[%s293 + $0x8] sm:%s286]
                %298 = vst [vmem:[%s294 + $0x4] sm:%s286] %v297
                %v299 = vld [vmem:[%s293 + $0x10] sm:%s286]
                %300 = vst [vmem:[%s294 + $0x8] sm:%s286] %v299
                %v301 = vld [vmem:[%s293 + $0x18] sm:%s286]
                %302 = vst [vmem:[%s294 + $0xc] sm:%s286] %v301
                %v303 = vld [vmem:[%s293 + $0x20] sm:%s286]
                %304 = vst [vmem:[%s294 + $0x10] sm:%s286] %v303
                %v305 = vld [vmem:[%s293 + $0x28] sm:%s286]
                %306 = vst [vmem:[%s294 + $0x14] sm:%s286] %v305
                %v307 = vld [vmem:[%s293 + $0x30] sm:%s286]
                %308 = vst [vmem:[%s294 + $0x18] sm:%s286] %v307
                %v309 = vld [vmem:[%s293 + $0x38] sm:%s286]
                %310 = vst [vmem:[%s294 + $0x1c] sm:%s286] %v309
                %v311 = vld [vmem:[%s293 + $0x40] sm:%s286]
                %312 = vst [vmem:[%s294 + $0x20] sm:%s286] %v311
                %v313 = vld [vmem:[%s293 + $0x48] sm:%s286]
                %314 = vst [vmem:[%s294 + $0x24] sm:%s286] %v313
                %v315 = vld [vmem:[%s293 + $0x50] sm:%s286]
                %316 = vst [vmem:[%s294 + $0x28] sm:%s286] %v315
                %v317 = vld [vmem:[%s293 + $0x58] sm:%s286]
                %318 = vst [vmem:[%s294 + $0x2c] sm:%s286] %v317
                %v319 = vld [vmem:[%s293 + $0x60] sm:%s286]
                %320 = vst [vmem:[%s294 + $0x30] sm:%s286] %v319
                %v321 = vld [vmem:[%s293 + $0x68] sm:%s286]
                %322 = vst [vmem:[%s294 + $0x34] sm:%s286] %v321
                %v323 = vld [vmem:[%s293 + $0x70] sm:%s286]
                %324 = vst [vmem:[%s294 + $0x38] sm:%s286] %v323
                %v325 = vld [vmem:[%s293 + $0x78] sm:%s286]
                %326 = vst [vmem:[%s294 + $0x3c] sm:%s286] %v325
                %v327 = vld [vmem:[%s293 + $0x80] sm:%s286]
                %328 = vst [vmem:[%s294 + $0x40] sm:%s286] %v327
                %v329 = vld [vmem:[%s293 + $0x88] sm:%s286]
                %330 = vst [vmem:[%s294 + $0x44] sm:%s286] %v329
                %v331 = vld [vmem:[%s293 + $0x90] sm:%s286]
                %332 = vst [vmem:[%s294 + $0x48] sm:%s286] %v331
                %v333 = vld [vmem:[%s293 + $0x98] sm:%s286]
                %334 = vst [vmem:[%s294 + $0x4c] sm:%s286] %v333
                %v335 = vld [vmem:[%s293 + $0xa0] sm:%s286]
                %336 = vst [vmem:[%s294 + $0x50] sm:%s286] %v335
                %v337 = vld [vmem:[%s293 + $0xa8] sm:%s286]
                %338 = vst [vmem:[%s294 + $0x54] sm:%s286] %v337
              $region82: #{model_forward.20} parent=76 // loop_footer
                %s292 = sadd.s32 1, %s288
              $region83: #{model_forward.20} parent=76 // loop_footer_branch
                %287 = sbr.rel target = $region79
              $region84: #{model_forward.20} parent=76 // loop_exit
                _
            $region77: #{model_forward.20} parent=68 // pred_fallthru
              _
          $region69: #{model_forward.20} parent=64 // pred_fallthru
            _
          %403 = vnop
        $region65: #{model_forward.20} parent=19 // pred_fallthru
          _
      $region20: #{model_forward.20} parent=5 // pred_fallthru
        _
      %p404 = scmp.le.s32.totalorder 1, %s9
      %p405 = scmp.lt.s32.totalorder %s9, 3
      %p406 = pnand %p404, %p405
      %p407 = pneg %p406
      // Predicated region
      $region103: #{model_forward.20} parent=5 // pred_check
        _
      $region104: #{model_forward.20} parent=5 // pred_check_branch
        %409 = sbr.rel (%p406) target = $region106
      $region105: #{model_forward.20} parent=5 // pred_region
        %s410 = ssub.s32 %s9, 1
        %s411 = sand.u32 %s60, 1
        %s412 = sand.u32 %s60, 1
        %s413 = smul.addr %s412, 64
        %s414 = scalar_lea.vmem [#allocation2], %s413
        // Predicated region
        $region107: #{model_forward.20} parent=105 // pred_check
          %p415 = pneg %p73
        $region108: #{model_forward.20} parent=105 // pred_check_branch
          %417 = sbr.rel (%p415) target = $region110
        $region109: #{model_forward.20} parent=105 // pred_region
          _
        $region110: #{model_forward.20} parent=105 // pred_fallthru
          _
        %s418 = sand.u32 %s88, 1
        %s419 = sand.u32 %s88, 1
        %s420 = smul.addr %s419, 88
        %s421 = scalar_lea.vmem [#allocation3], %s420
        // Predicated region
        $region111: #{model_forward.20} parent=105 // pred_check
          %p422 = pneg %p101
        $region112: #{model_forward.20} parent=105 // pred_check_branch
          %424 = sbr.rel (%p422) target = $region114
        $region113: #{model_forward.20} parent=105 // pred_region
          _
        $region114: #{model_forward.20} parent=105 // pred_fallthru
          _
        %s425 = smul.u32 22, %s18
        %p426 = scmp.lt.s32.totalorder %s425, 21
        %s427 = scalar_select %p426, %s425, 21
        %s428 = smul.addr %s427, 4
        %s429 = scalar_lea.vmem %s0, %s428
        %p430 = pneg %p47
        %p431 = pneg %p44
        %s432 = sand.u32 %s60, 1
        %s433 = sand.u32 %s60, 1
        %s434 = smul.addr %s433, 64
        %s435 = scalar_lea.vmem [#allocation2], %s434
        %p436 = pneg %p73
        %p437 = pneg %p70
        %s438 = sand.u32 %s88, 1
        %s439 = sand.u32 %s88, 1
        %s440 = smul.addr %s439, 88
        %s441 = scalar_lea.vmem [#allocation3], %s440
        %p442 = pneg %p101
        %p443 = pneg %p98
        %p444 = pneg %p129
        %p445 = pneg %p126
        %s446 = sand.u32 %s116, 1
        %s447 = sand.u32 %s116, 1
        %s448 = smul.addr %s447, 88
        %s449 = scalar_lea.vmem [#allocation4], %s448
        %s450 = smul.u32 22, %s18
        %p451 = scmp.lt.s32.totalorder %s450, 21
        %s452 = scalar_select %p451, %s450, 21
        %s453 = smul.addr %s452, 4
        %s454 = scalar_lea.vmem %s0, %s453
        %s455 = smul.u32 22, %s18
        %s456 = smul.u32 22, %s18
        %s457 = smul.u32 22, %s18
        %v458 = vld [vmem:[%s454] sm:$0xf]
        %v459 = vld [vmem:[%s454 + $0x4] sm:$0xf]
        %v460 = vld [vmem:[%s454 + $0x8] sm:$0xf]
        %v461 = vld [vmem:[%s454 + $0xc] sm:$0xf]
        %v462 = vld [vmem:[%s454 + $0x10] sm:$0xf]
        %v463 = vld [vmem:[%s454 + $0x14] sm:$0xf]
        %v464 = vld [vmem:[%s454 + $0x18] sm:$0xf]
        %v465 = vld [vmem:[%s454 + $0x1c] sm:$0xf]
        %v466 = vld [vmem:[%s454 + $0x20] sm:$0xf]
        %v467 = vld [vmem:[%s454 + $0x24] sm:$0xf]
        %v468 = vld [vmem:[%s454 + $0x28] sm:$0xf]
        %v469 = vld [vmem:[%s454 + $0x2c] sm:$0xf]
        %v470 = vld [vmem:[%s454 + $0x30] sm:$0xf]
        %v471 = vld [vmem:[%s454 + $0x34] sm:$0xf]
        %v472 = vld [vmem:[%s454 + $0x38] sm:$0xf]
        %v473 = vld [vmem:[%s454 + $0x3c] sm:$0xf]
        %v474 = vld [vmem:[%s454 + $0x40] sm:$0xf]
        %v475 = vld [vmem:[%s454 + $0x44] sm:$0xf]
        %v476 = vld [vmem:[%s454 + $0x48] sm:$0xf]
        %v477 = vld [vmem:[%s454 + $0x4c] sm:$0xf]
        %v478 = vld [vmem:[%s454 + $0x50] sm:$0xf]
        %v479 = vld [vmem:[%s454 + $0x54] sm:$0xf]
        %v480 = vld [vmem:[%s414] sm:$0xf]
        %v481 = vld [vmem:[%s414 + $0x4] sm:$0xf]
        %v482 = vld [vmem:[%s414 + $0x8] sm:$0xf]
        %v483 = vld [vmem:[%s414 + $0xc] sm:$0xf]
        %v484 = vld [vmem:[%s414 + $0x10] sm:$0xf]
        %v485 = vld [vmem:[%s414 + $0x14] sm:$0xf]
        %v486 = vld [vmem:[%s414 + $0x18] sm:$0xf]
        %v487 = vld [vmem:[%s414 + $0x1c] sm:$0xf]
        %v488 = vld [vmem:[%s414 + $0x20] sm:$0xf]
        %v489 = vld [vmem:[%s414 + $0x24] sm:$0xf]
        %v490 = vld [vmem:[%s414 + $0x28] sm:$0xf]
        %v491 = vld [vmem:[%s414 + $0x2c] sm:$0xf]
        %v492 = vld [vmem:[%s414 + $0x30] sm:$0xf]
        %v493 = vld [vmem:[%s414 + $0x34] sm:$0xf]
        %v494 = vld [vmem:[%s414 + $0x38] sm:$0xf]
        %v495 = vld [vmem:[%s414 + $0x3c] sm:$0xf]
        %v496 = vld [vmem:[%s421] sm:$0xf]
        %v497 = vld [vmem:[%s421 + $0x4] sm:$0xf]
        %v498 = vld [vmem:[%s421 + $0x8] sm:$0xf]
        %v499 = vld [vmem:[%s421 + $0xc] sm:$0xf]
        %v500 = vld [vmem:[%s421 + $0x10] sm:$0xf]
        %v501 = vld [vmem:[%s421 + $0x14] sm:$0xf]
        %v502 = vld [vmem:[%s421 + $0x18] sm:$0xf]
        %v503 = vld [vmem:[%s421 + $0x1c] sm:$0xf]
        %v504 = vld [vmem:[%s421 + $0x20] sm:$0xf]
        %v505 = vld [vmem:[%s421 + $0x24] sm:$0xf]
        %v506 = vld [vmem:[%s421 + $0x28] sm:$0xf]
        %v507 = vld [vmem:[%s421 + $0x2c] sm:$0xf]
        %v508 = vld [vmem:[%s421 + $0x30] sm:$0xf]
        %v509 = vld [vmem:[%s421 + $0x34] sm:$0xf]
        %v510 = vld [vmem:[%s421 + $0x38] sm:$0xf]
        %v511 = vld [vmem:[%s421 + $0x3c] sm:$0xf]
        %v512 = vld [vmem:[%s421 + $0x40] sm:$0xf]
        %v513 = vld [vmem:[%s421 + $0x44] sm:$0xf]
        %v514 = vld [vmem:[%s421 + $0x48] sm:$0xf]
        %v515 = vld [vmem:[%s421 + $0x4c] sm:$0xf]
        %v516 = vld [vmem:[%s421 + $0x50] sm:$0xf]
        %v517 = vld [vmem:[%s421 + $0x54] sm:$0xf]
        %v518 = vunpack.c.l.bf16 %v496
        %v519 = vunpack.c.l.bf16 %v497
        %v520 = vunpack.c.l.bf16 %v498
        %v521 = vunpack.c.l.bf16 %v499
        %v522 = vunpack.c.l.bf16 %v500
        %v523 = vunpack.c.l.bf16 %v501
        %v524 = vunpack.c.l.bf16 %v502
        %v525 = vunpack.c.l.bf16 %v503
        %v526 = vunpack.c.l.bf16 %v504
        %v527 = vunpack.c.l.bf16 %v505
        %v528 = vunpack.c.l.bf16 %v506
        %v529 = vunpack.c.l.bf16 %v507
        %v530 = vunpack.c.l.bf16 %v508
        %v531 = vunpack.c.l.bf16 %v509
        %v532 = vunpack.c.l.bf16 %v510
        %v533 = vunpack.c.l.bf16 %v511
        %v534 = vunpack.c.l.bf16 %v512
        %v535 = vunpack.c.l.bf16 %v513
        %v536 = vunpack.c.l.bf16 %v514
        %v537 = vunpack.c.l.bf16 %v515
        %v538 = vunpack.c.l.bf16 %v516
        %v539 = vunpack.c.l.bf16 %v517
        %v562 = vunpack.c.l.b16 %v458
        %v563 = vunpack.c.l.b16 %v459
        %v564 = vunpack.c.l.b16 %v460
        %v565 = vunpack.c.l.b16 %v461
        %v566 = vunpack.c.l.b16 %v462
        %v567 = vunpack.c.l.b16 %v463
        %v568 = vunpack.c.l.b16 %v464
        %v569 = vunpack.c.l.b16 %v465
        %v570 = vunpack.c.l.b16 %v466
        %v571 = vunpack.c.l.b16 %v467
        %v572 = vunpack.c.l.b16 %v468
        %v573 = vunpack.c.l.b16 %v469
        %v574 = vunpack.c.l.b16 %v470
        %v575 = vunpack.c.l.b16 %v471
        %v576 = vunpack.c.l.b16 %v472
        %v577 = vunpack.c.l.b16 %v473
        %v578 = vunpack.c.l.b16 %v474
        %v579 = vunpack.c.l.b16 %v475
        %v580 = vunpack.c.l.b16 %v476
        %v581 = vunpack.c.l.b16 %v477
        %v582 = vunpack.c.l.b16 %v478
        %v583 = vunpack.c.l.b16 %v479
        %v584 = vpack.c.b16 %v563, %v562
        %v585 = vpack.c.b16 %v565, %v564
        %v586 = vpack.c.b16 %v567, %v566
        %v587 = vpack.c.b16 %v569, %v568
        %v588 = vpack.c.b16 %v571, %v570
        %v589 = vpack.c.b16 %v573, %v572
        %v590 = vpack.c.b16 %v575, %v574
        %v591 = vpack.c.b16 %v577, %v576
        %v592 = vpack.c.b16 %v579, %v578
        %v593 = vpack.c.b16 %v581, %v580
        %v594 = vpack.c.b16 %v583, %v582
        %v622 = vunpack.c.l.b16 %v480
        %v623 = vunpack.c.l.b16 %v481
        %v624 = vunpack.c.l.b16 %v482
        %v625 = vunpack.c.l.b16 %v483
        %v626 = vunpack.c.l.b16 %v484
        %v627 = vunpack.c.l.b16 %v485
        %v628 = vunpack.c.l.b16 %v486
        %v629 = vunpack.c.l.b16 %v487
        %v630 = vunpack.c.l.b16 %v488
        %v631 = vunpack.c.l.b16 %v489
        %v632 = vunpack.c.l.b16 %v490
        %v633 = vunpack.c.l.b16 %v491
        %v634 = vunpack.c.l.b16 %v492
        %v635 = vunpack.c.l.b16 %v493
        %v636 = vunpack.c.l.b16 %v494
        %v637 = vunpack.c.l.b16 %v495
        %v638 = vpack.c.b16 %v623, %v622
        %v639 = vpack.c.b16 %v625, %v624
        %v640 = vpack.c.b16 %v627, %v626
        %v641 = vpack.c.b16 %v629, %v628
        %v642 = vpack.c.b16 %v631, %v630
        %v643 = vpack.c.b16 %v633, %v632
        %v644 = vpack.c.b16 %v635, %v634
        %v645 = vpack.c.b16 %v637, %v636
        %654 = vmatpush.bf16.msra.mxu0 %v645
        %655 = vmatpush.bf16.msra.mxu0 %v644
        %656 = vmatpush.bf16.msra.mxu0 %v643
        %657 = vmatpush.bf16.msra.mxu0 %v642
        %658 = vmatpush.bf16.msra.mxu0 %v641
        %659 = vmatpush.bf16.msra.mxu0 %v640
        %660 = vmatpush.bf16.msra.mxu0 %v639
        %661 = vmatpush.bf16.msra.mxu0 %v638
        %662 = vmatmul.bf16.gmra.mxu0 %v584
        %v663 = vpop.f32.mrf.mxu0
        %v664 = vadd.f32 %v518, %v663
        %v665 = vpop.f32.mrf.mxu0
        %v666 = vadd.f32 %v519, %v665
        %667 = vmatmul.bf16.gmra.mxu0 %v585
        %v668 = vpop.f32.mrf.mxu0
        %v669 = vadd.f32 %v520, %v668
        %v670 = vpop.f32.mrf.mxu0
        %v671 = vadd.f32 %v521, %v670
        %672 = vmatmul.bf16.gmra.mxu0 %v586
        %v673 = vpop.f32.mrf.mxu0
        %v674 = vadd.f32 %v522, %v673
        %v675 = vpop.f32.mrf.mxu0
        %v676 = vadd.f32 %v523, %v675
        %677 = vmatmul.bf16.gmra.mxu0 %v587
        %v678 = vpop.f32.mrf.mxu0
        %v679 = vadd.f32 %v524, %v678
        %v680 = vpop.f32.mrf.mxu0
        %v681 = vadd.f32 %v525, %v680
        %682 = vmatmul.bf16.gmra.mxu0 %v588
        %v683 = vpop.f32.mrf.mxu0
        %v684 = vadd.f32 %v526, %v683
        %v685 = vpop.f32.mrf.mxu0
        %v686 = vadd.f32 %v527, %v685
        %687 = vmatmul.bf16.gmra.mxu0 %v589
        %v688 = vpop.f32.mrf.mxu0
        %v689 = vadd.f32 %v528, %v688
        %v690 = vpop.f32.mrf.mxu0
        %v691 = vadd.f32 %v529, %v690
        %692 = vmatmul.bf16.gmra.mxu0 %v590
        %v693 = vpop.f32.mrf.mxu0
        %v694 = vadd.f32 %v530, %v693
        %v695 = vpop.f32.mrf.mxu0
        %v696 = vadd.f32 %v531, %v695
        %697 = vmatmul.bf16.gmra.mxu0 %v591
        %v698 = vpop.f32.mrf.mxu0
        %v699 = vadd.f32 %v532, %v698
        %v700 = vpop.f32.mrf.mxu0
        %v701 = vadd.f32 %v533, %v700
        %702 = vmatmul.bf16.gmra.mxu0 %v592
        %v703 = vpop.f32.mrf.mxu0
        %v704 = vadd.f32 %v534, %v703
        %v705 = vpop.f32.mrf.mxu0
        %v706 = vadd.f32 %v535, %v705
        %707 = vmatmul.bf16.gmra.mxu0 %v593
        %v708 = vpop.f32.mrf.mxu0
        %v709 = vadd.f32 %v536, %v708
        %v710 = vpop.f32.mrf.mxu0
        %v711 = vadd.f32 %v537, %v710
        %712 = vmatmul.bf16.gmra.mxu0 %v594
        %v713 = vpop.f32.mrf.mxu0
        %v714 = vadd.f32 %v538, %v713
        %v715 = vpop.f32.mrf.mxu0
        %v716 = vadd.f32 %v539, %v715
        %717 = vdwg.mxu0
        %v718 = vmax.f32 %v664, 0.0
        %v719 = vmax.f32 %v666, 0.0
        %v720 = vmax.f32 %v669, 0.0
        %v721 = vmax.f32 %v671, 0.0
        %v722 = vmax.f32 %v674, 0.0
        %v723 = vmax.f32 %v676, 0.0
        %v724 = vmax.f32 %v679, 0.0
        %v725 = vmax.f32 %v681, 0.0
        %v726 = vmax.f32 %v684, 0.0
        %v727 = vmax.f32 %v686, 0.0
        %v728 = vmax.f32 %v689, 0.0
        %v729 = vmax.f32 %v691, 0.0
        %v730 = vmax.f32 %v694, 0.0
        %v731 = vmax.f32 %v696, 0.0
        %v732 = vmax.f32 %v699, 0.0
        %v733 = vmax.f32 %v701, 0.0
        %v734 = vmax.f32 %v704, 0.0
        %v735 = vmax.f32 %v706, 0.0
        %v736 = vmax.f32 %v709, 0.0
        %v737 = vmax.f32 %v711, 0.0
        %v738 = vmax.f32 %v714, 0.0
        %v739 = vmax.f32 %v716, 0.0
        %v740 = vpack.c.bf16 %v718, %v718
        %v741 = vpack.c.bf16 %v719, %v719
        %v742 = vpack.c.bf16 %v720, %v720
        %v743 = vpack.c.bf16 %v721, %v721
        %v744 = vpack.c.bf16 %v722, %v722
        %v745 = vpack.c.bf16 %v723, %v723
        %v746 = vpack.c.bf16 %v724, %v724
        %v747 = vpack.c.bf16 %v725, %v725
        %v748 = vpack.c.bf16 %v726, %v726
        %v749 = vpack.c.bf16 %v727, %v727
        %v750 = vpack.c.bf16 %v728, %v728
        %v751 = vpack.c.bf16 %v729, %v729
        %v752 = vpack.c.bf16 %v730, %v730
        %v753 = vpack.c.bf16 %v731, %v731
        %v754 = vpack.c.bf16 %v732, %v732
        %v755 = vpack.c.bf16 %v733, %v733
        %v756 = vpack.c.bf16 %v734, %v734
        %v757 = vpack.c.bf16 %v735, %v735
        %v758 = vpack.c.bf16 %v736, %v736
        %v759 = vpack.c.bf16 %v737, %v737
        %v760 = vpack.c.bf16 %v738, %v738
        %v761 = vpack.c.bf16 %v739, %v739
        %762 = vst [vmem:[%s449] sm:$0xf] %v740
        %763 = vst [vmem:[%s449 + $0x4] sm:$0xf] %v741
        %764 = vst [vmem:[%s449 + $0x8] sm:$0xf] %v742
        %765 = vst [vmem:[%s449 + $0xc] sm:$0xf] %v743
        %766 = vst [vmem:[%s449 + $0x10] sm:$0xf] %v744
        %767 = vst [vmem:[%s449 + $0x14] sm:$0xf] %v745
        %768 = vst [vmem:[%s449 + $0x18] sm:$0xf] %v746
        %769 = vst [vmem:[%s449 + $0x1c] sm:$0xf] %v747
        %770 = vst [vmem:[%s449 + $0x20] sm:$0xf] %v748
        %771 = vst [vmem:[%s449 + $0x24] sm:$0xf] %v749
        %772 = vst [vmem:[%s449 + $0x28] sm:$0xf] %v750
        %773 = vst [vmem:[%s449 + $0x2c] sm:$0xf] %v751
        %774 = vst [vmem:[%s449 + $0x30] sm:$0xf] %v752
        %775 = vst [vmem:[%s449 + $0x34] sm:$0xf] %v753
        %776 = vst [vmem:[%s449 + $0x38] sm:$0xf] %v754
        %777 = vst [vmem:[%s449 + $0x3c] sm:$0xf] %v755
        %778 = vst [vmem:[%s449 + $0x40] sm:$0xf] %v756
        %779 = vst [vmem:[%s449 + $0x44] sm:$0xf] %v757
        %780 = vst [vmem:[%s449 + $0x48] sm:$0xf] %v758
        %781 = vst [vmem:[%s449 + $0x4c] sm:$0xf] %v759
        %782 = vst [vmem:[%s449 + $0x50] sm:$0xf] %v760
        %783 = vst [vmem:[%s449 + $0x54] sm:$0xf] %v761
        %s784 = sand.u32 %s116, 1
        %s785 = sand.u32 %s116, 1
        %s786 = smul.addr %s785, 88
        %s787 = scalar_lea.vmem [#allocation4], %s786
        // Predicated region
        $region115: #{model_forward.20} parent=105 // pred_check
          %p788 = pneg %p126
        $region116: #{model_forward.20} parent=105 // pred_check_branch
          %790 = sbr.rel (%p788) target = $region118
        $region117: #{model_forward.20} parent=105 // pred_region
          %s791 = smul.u32 22, %s18
          %s792 = smul.addr %s791, 2
          %s793 = sadd.s32 %s19, %s792
          %s794 = smul.addr %s793, 4
          %s795 = scalar_lea.vmem %s3, %s794
          // Predicated region
          $region119: #{model_forward.20} parent=117 // pred_check
            _
          $region120: #{model_forward.20} parent=117 // pred_check_branch
            %797 = sbr.rel (0) target = $region122
          $region121: #{model_forward.20} parent=117 // pred_region
            // Predicated region
            $region123: #{model_forward.20} parent=121 // pred_check
              _
            $region124: #{model_forward.20} parent=121 // pred_check_branch
              %799 = sbr.rel target = $region126
            $region125: #{model_forward.20} parent=121 // pred_region
              // Predicated region
              $region138: #{model_forward.20} parent=125 // pred_check
                _
              $region139: #{model_forward.20} parent=125 // pred_check_branch
                %857 = sbr.rel (0) target = $region141
              $region140: #{model_forward.20} parent=125 // pred_region
                loop: start=0, step=1, limit=1
                $region142: #{model_forward.20} parent=140 // loop_pre_header
                  _
                $region143: #{model_forward.20} parent=140 // loop_header
                  %s859 = sphi 0, %s863
                  %p860 = scmp.ge.s32.totalorder %s859, 1
                  %s864 = sphi %s787, %s787
                  %s865 = sphi %s795, %s795
                $region144: #{model_forward.20} parent=140 // loop_header_branch
                  %862 = sbr.rel (%p860) target = $region148
                $region145: #{model_forward.20} parent=140 // loop_body
                  _
                $region146: #{model_forward.20} parent=140 // loop_footer
                  %s863 = sadd.s32 1, %s859
                $region147: #{model_forward.20} parent=140 // loop_footer_branch
                  %858 = sbr.rel target = $region143
                $region148: #{model_forward.20} parent=140 // loop_exit
                  _
                %s867 = ssub.s32 16, 1
                loop: start=0, step=1, limit=1
                $region149: #{model_forward.20} parent=140 // loop_pre_header
                  _
                $region150: #{model_forward.20} parent=140 // loop_header
                  %s869 = sphi 0, %s873
                  %p870 = scmp.ge.s32.totalorder %s869, 1
                  %s874 = sphi %s787, %s787
                  %s875 = sphi %s795, %s795
                $region151: #{model_forward.20} parent=140 // loop_header_branch
                  %872 = sbr.rel (%p870) target = $region155
                $region152: #{model_forward.20} parent=140 // loop_body
                  %v876 = vld [vmem:[%s874] sm:%s867]
                  %877 = vst [vmem:[%s875] sm:%s867] %v876
                  %v878 = vld [vmem:[%s874 + $0x4] sm:%s867]
                  %879 = vst [vmem:[%s875 + $0x8] sm:%s867] %v878
                  %v880 = vld [vmem:[%s874 + $0x8] sm:%s867]
                  %881 = vst [vmem:[%s875 + $0x10] sm:%s867] %v880
                  %v882 = vld [vmem:[%s874 + $0xc] sm:%s867]
                  %883 = vst [vmem:[%s875 + $0x18] sm:%s867] %v882
                  %v884 = vld [vmem:[%s874 + $0x10] sm:%s867]
                  %885 = vst [vmem:[%s875 + $0x20] sm:%s867] %v884
                  %v886 = vld [vmem:[%s874 + $0x14] sm:%s867]
                  %887 = vst [vmem:[%s875 + $0x28] sm:%s867] %v886
                  %v888 = vld [vmem:[%s874 + $0x18] sm:%s867]
                  %889 = vst [vmem:[%s875 + $0x30] sm:%s867] %v888
                  %v890 = vld [vmem:[%s874 + $0x1c] sm:%s867]
                  %891 = vst [vmem:[%s875 + $0x38] sm:%s867] %v890
                  %v892 = vld [vmem:[%s874 + $0x20] sm:%s867]
                  %893 = vst [vmem:[%s875 + $0x40] sm:%s867] %v892
                  %v894 = vld [vmem:[%s874 + $0x24] sm:%s867]
                  %895 = vst [vmem:[%s875 + $0x48] sm:%s867] %v894
                  %v896 = vld [vmem:[%s874 + $0x28] sm:%s867]
                  %897 = vst [vmem:[%s875 + $0x50] sm:%s867] %v896
                  %v898 = vld [vmem:[%s874 + $0x2c] sm:%s867]
                  %899 = vst [vmem:[%s875 + $0x58] sm:%s867] %v898
                  %v900 = vld [vmem:[%s874 + $0x30] sm:%s867]
                  %901 = vst [vmem:[%s875 + $0x60] sm:%s867] %v900
                  %v902 = vld [vmem:[%s874 + $0x34] sm:%s867]
                  %903 = vst [vmem:[%s875 + $0x68] sm:%s867] %v902
                  %v904 = vld [vmem:[%s874 + $0x38] sm:%s867]
                  %905 = vst [vmem:[%s875 + $0x70] sm:%s867] %v904
                  %v906 = vld [vmem:[%s874 + $0x3c] sm:%s867]
                  %907 = vst [vmem:[%s875 + $0x78] sm:%s867] %v906
                  %v908 = vld [vmem:[%s874 + $0x40] sm:%s867]
                  %909 = vst [vmem:[%s875 + $0x80] sm:%s867] %v908
                  %v910 = vld [vmem:[%s874 + $0x44] sm:%s867]
                  %911 = vst [vmem:[%s875 + $0x88] sm:%s867] %v910
                  %v912 = vld [vmem:[%s874 + $0x48] sm:%s867]
                  %913 = vst [vmem:[%s875 + $0x90] sm:%s867] %v912
                  %v914 = vld [vmem:[%s874 + $0x4c] sm:%s867]
                  %915 = vst [vmem:[%s875 + $0x98] sm:%s867] %v914
                  %v916 = vld [vmem:[%s874 + $0x50] sm:%s867]
                  %917 = vst [vmem:[%s875 + $0xa0] sm:%s867] %v916
                  %v918 = vld [vmem:[%s874 + $0x54] sm:%s867]
                  %919 = vst [vmem:[%s875 + $0xa8] sm:%s867] %v918
                $region153: #{model_forward.20} parent=140 // loop_footer
                  %s873 = sadd.s32 1, %s869
                $region154: #{model_forward.20} parent=140 // loop_footer_branch
                  %868 = sbr.rel target = $region150
                $region155: #{model_forward.20} parent=140 // loop_exit
                  _
              $region141: #{model_forward.20} parent=125 // pred_fallthru
                _
            $region126: #{model_forward.20} parent=121 // pred_fallthru
              _
            // Predicated region
            $region127: #{model_forward.20} parent=121 // pred_check
              _
            $region128: #{model_forward.20} parent=121 // pred_check_branch
              %801 = sbr.rel (0) target = $region130
            $region129: #{model_forward.20} parent=121 // pred_region
              %s803 = ssub.s32 16, 1
              loop: start=0, step=1, limit=1
              $region131: #{model_forward.20} parent=129 // loop_pre_header
                _
              $region132: #{model_forward.20} parent=129 // loop_header
                %s805 = sphi 0, %s809
                %p806 = scmp.ge.s32.totalorder %s805, 1
                %s810 = sphi %s787, %s787
                %s811 = sphi %s795, %s795
              $region133: #{model_forward.20} parent=129 // loop_header_branch
                %808 = sbr.rel (%p806) target = $region137
              $region134: #{model_forward.20} parent=129 // loop_body
                %v812 = vld [vmem:[%s810] sm:%s803]
                %813 = vst [vmem:[%s811] sm:%s803] %v812
                %v814 = vld [vmem:[%s810 + $0x4] sm:%s803]
                %815 = vst [vmem:[%s811 + $0x8] sm:%s803] %v814
                %v816 = vld [vmem:[%s810 + $0x8] sm:%s803]
                %817 = vst [vmem:[%s811 + $0x10] sm:%s803] %v816
                %v818 = vld [vmem:[%s810 + $0xc] sm:%s803]
                %819 = vst [vmem:[%s811 + $0x18] sm:%s803] %v818
                %v820 = vld [vmem:[%s810 + $0x10] sm:%s803]
                %821 = vst [vmem:[%s811 + $0x20] sm:%s803] %v820
                %v822 = vld [vmem:[%s810 + $0x14] sm:%s803]
                %823 = vst [vmem:[%s811 + $0x28] sm:%s803] %v822
                %v824 = vld [vmem:[%s810 + $0x18] sm:%s803]
                %825 = vst [vmem:[%s811 + $0x30] sm:%s803] %v824
                %v826 = vld [vmem:[%s810 + $0x1c] sm:%s803]
                %827 = vst [vmem:[%s811 + $0x38] sm:%s803] %v826
                %v828 = vld [vmem:[%s810 + $0x20] sm:%s803]
                %829 = vst [vmem:[%s811 + $0x40] sm:%s803] %v828
                %v830 = vld [vmem:[%s810 + $0x24] sm:%s803]
                %831 = vst [vmem:[%s811 + $0x48] sm:%s803] %v830
                %v832 = vld [vmem:[%s810 + $0x28] sm:%s803]
                %833 = vst [vmem:[%s811 + $0x50] sm:%s803] %v832
                %v834 = vld [vmem:[%s810 + $0x2c] sm:%s803]
                %835 = vst [vmem:[%s811 + $0x58] sm:%s803] %v834
                %v836 = vld [vmem:[%s810 + $0x30] sm:%s803]
                %837 = vst [vmem:[%s811 + $0x60] sm:%s803] %v836
                %v838 = vld [vmem:[%s810 + $0x34] sm:%s803]
                %839 = vst [vmem:[%s811 + $0x68] sm:%s803] %v838
                %v840 = vld [vmem:[%s810 + $0x38] sm:%s803]
                %841 = vst [vmem:[%s811 + $0x70] sm:%s803] %v840
                %v842 = vld [vmem:[%s810 + $0x3c] sm:%s803]
                %843 = vst [vmem:[%s811 + $0x78] sm:%s803] %v842
                %v844 = vld [vmem:[%s810 + $0x40] sm:%s803]
                %845 = vst [vmem:[%s811 + $0x80] sm:%s803] %v844
                %v846 = vld [vmem:[%s810 + $0x44] sm:%s803]
                %847 = vst [vmem:[%s811 + $0x88] sm:%s803] %v846
                %v848 = vld [vmem:[%s810 + $0x48] sm:%s803]
                %849 = vst [vmem:[%s811 + $0x90] sm:%s803] %v848
                %v850 = vld [vmem:[%s810 + $0x4c] sm:%s803]
                %851 = vst [vmem:[%s811 + $0x98] sm:%s803] %v850
                %v852 = vld [vmem:[%s810 + $0x50] sm:%s803]
                %853 = vst [vmem:[%s811 + $0xa0] sm:%s803] %v852
                %v854 = vld [vmem:[%s810 + $0x54] sm:%s803]
                %855 = vst [vmem:[%s811 + $0xa8] sm:%s803] %v854
              $region135: #{model_forward.20} parent=129 // loop_footer
                %s809 = sadd.s32 1, %s805
              $region136: #{model_forward.20} parent=129 // loop_footer_branch
                %804 = sbr.rel target = $region132
              $region137: #{model_forward.20} parent=129 // loop_exit
                _
            $region130: #{model_forward.20} parent=121 // pred_fallthru
              _
          $region122: #{model_forward.20} parent=117 // pred_fallthru
            _
          %920 = vnop
        $region118: #{model_forward.20} parent=105 // pred_fallthru
          _
      $region106: #{model_forward.20} parent=5 // pred_fallthru
        _
      %p921 = scmp.le.s32.totalorder 2, %s9
      // Predicated region
      $region156: #{model_forward.20} parent=5 // pred_check
        %p922 = pneg %p921
      $region157: #{model_forward.20} parent=5 // pred_check_branch
        %924 = sbr.rel (%p922) target = $region159
      $region158: #{model_forward.20} parent=5 // pred_region
        %s925 = ssub.s32 %s9, 2
        // Predicated region
        $region160: #{model_forward.20} parent=158 // pred_check
          %p926 = pneg %p132
        $region161: #{model_forward.20} parent=158 // pred_check_branch
          %928 = sbr.rel (%p926) target = $region163
        $region162: #{model_forward.20} parent=158 // pred_region
          %s929 = sand.u32 %s117, 1
          %s930 = sand.u32 %s117, 1
          %s931 = smul.addr %s930, 88
          %s932 = scalar_lea.vmem [#allocation4], %s931
        $region163: #{model_forward.20} parent=158 // pred_fallthru
          _
      $region159: #{model_forward.20} parent=5 // pred_fallthru
        _
    $region6: #{model_forward.20} parent=1 // loop_footer
      %s13 = sadd.s32 1, %s9
    $region7: #{model_forward.20} parent=1 // loop_footer_branch
      %8 = sbr.rel target = $region3
    $region8: #{model_forward.20} parent=1 // loop_exit
      _

// kernel: model_forward.21
$region0: #{model_forward.21}
  #allocation0 [shape = 'u32[]', space=smem, size = 0x4, offset = 0x4, fixed_abs, tag = 'smem constant byte address 0x4 - core index']
  #allocation1 [shape = 'u32[72,128]{1,0:T(1,128)}', space=vmem, size = 0x9000, scoped, tag = 'internal scratch']
  %s0 = inlined_call_operand.vmem [shape: bf16[176,256], index: 0, kind: input, shape index: {}]
  %s1 = inlined_call_operand.vmem [shape: bf16[256,128], index: 1, kind: input, shape index: {}]
  %s2 = inlined_call_operand.vmem [shape: bf16[176,128], index: 2, kind: output, shape index: {}]
  %s3 = sld [smem:[#allocation0]]
  $region18: #{model_forward.21} parent=0
    _
  %s5 = ssub.s32 1, %s3
  %s6 = scalar_select 0, %s5, %s3
  // Predicated region
  $region2: #{model_forward.21} parent=0 // pred_check
    _
  $region3: #{model_forward.21} parent=0 // pred_check_branch
    %8 = sbr.rel (0) target = $region5
  $region4: #{model_forward.21} parent=0 // pred_region
    _
  $region5: #{model_forward.21} parent=0 // pred_fallthru
    _
  // Predicated region
  $region6: #{model_forward.21} parent=0 // pred_check
    _
  $region7: #{model_forward.21} parent=0 // pred_check_branch
    %10 = sbr.rel (0) target = $region9
  $region8: #{model_forward.21} parent=0 // pred_region
    _
  $region9: #{model_forward.21} parent=0 // pred_fallthru
    _
  %v11 = vld [vmem:[%s0] sm:$0xff]
  %v12 = vld [vmem:[%s0 + $0x8] sm:$0xff]
  %v13 = vld [vmem:[%s0 + $0x10] sm:$0xff]
  %v14 = vld [vmem:[%s0 + $0x18] sm:$0xff]
  %v15 = vld [vmem:[%s0 + $0x20] sm:$0xff]
  %v16 = vld [vmem:[%s0 + $0x28] sm:$0xff]
  %v17 = vld [vmem:[%s0 + $0x30] sm:$0xff]
  %v18 = vld [vmem:[%s0 + $0x38] sm:$0xff]
  %v19 = vld [vmem:[%s0 + $0x40] sm:$0xff]
  %v20 = vld [vmem:[%s0 + $0x48] sm:$0xff]
  %v21 = vld [vmem:[%s0 + $0x50] sm:$0xff]
  %v22 = vld [vmem:[%s0 + $0x58] sm:$0xff]
  %v23 = vld [vmem:[%s0 + $0x60] sm:$0xff]
  %v24 = vld [vmem:[%s0 + $0x68] sm:$0xff]
  %v25 = vld [vmem:[%s0 + $0x70] sm:$0xff]
  %v26 = vld [vmem:[%s0 + $0x78] sm:$0xff]
  %v27 = vld [vmem:[%s0 + $0x80] sm:$0xff]
  %v28 = vld [vmem:[%s0 + $0x88] sm:$0xff]
  %v29 = vld [vmem:[%s0 + $0x90] sm:$0xff]
  %v30 = vld [vmem:[%s0 + $0x98] sm:$0xff]
  %v31 = vld [vmem:[%s0 + $0xa0] sm:$0xff]
  %v32 = vld [vmem:[%s0 + $0xa8] sm:$0xff]
  %v33 = vld [vmem:[%s1] sm:$0xf]
  %v34 = vld [vmem:[%s1 + $0x4] sm:$0xf]
  %v35 = vld [vmem:[%s1 + $0x8] sm:$0xf]
  %v36 = vld [vmem:[%s1 + $0xc] sm:$0xf]
  %v37 = vld [vmem:[%s1 + $0x10] sm:$0xf]
  %v38 = vld [vmem:[%s1 + $0x14] sm:$0xf]
  %v39 = vld [vmem:[%s1 + $0x18] sm:$0xf]
  %v40 = vld [vmem:[%s1 + $0x1c] sm:$0xf]
  %v41 = vld [vmem:[%s1 + $0x20] sm:$0xf]
  %v42 = vld [vmem:[%s1 + $0x24] sm:$0xf]
  %v43 = vld [vmem:[%s1 + $0x28] sm:$0xf]
  %v44 = vld [vmem:[%s1 + $0x2c] sm:$0xf]
  %v45 = vld [vmem:[%s1 + $0x30] sm:$0xf]
  %v46 = vld [vmem:[%s1 + $0x34] sm:$0xf]
  %v47 = vld [vmem:[%s1 + $0x38] sm:$0xf]
  %v48 = vld [vmem:[%s1 + $0x3c] sm:$0xf]
  %v49 = vld [vmem:[%s1 + $0x40] sm:$0xf]
  %v50 = vld [vmem:[%s1 + $0x44] sm:$0xf]
  %v51 = vld [vmem:[%s1 + $0x48] sm:$0xf]
  %v52 = vld [vmem:[%s1 + $0x4c] sm:$0xf]
  %v53 = vld [vmem:[%s1 + $0x50] sm:$0xf]
  %v54 = vld [vmem:[%s1 + $0x54] sm:$0xf]
  %v55 = vld [vmem:[%s1 + $0x58] sm:$0xf]
  %v56 = vld [vmem:[%s1 + $0x5c] sm:$0xf]
  %v57 = vld [vmem:[%s1 + $0x60] sm:$0xf]
  %v58 = vld [vmem:[%s1 + $0x64] sm:$0xf]
  %v59 = vld [vmem:[%s1 + $0x68] sm:$0xf]
  %v60 = vld [vmem:[%s1 + $0x6c] sm:$0xf]
  %v61 = vld [vmem:[%s1 + $0x70] sm:$0xf]
  %v62 = vld [vmem:[%s1 + $0x74] sm:$0xf]
  %v63 = vld [vmem:[%s1 + $0x78] sm:$0xf]
  %v64 = vld [vmem:[%s1 + $0x7c] sm:$0xf]
  %v87 = vunpack.c.l.b16 %v11
  %v88 = vunpack.c.h.b16 %v11
  %v89 = vunpack.c.l.b16 %v12
  %v90 = vunpack.c.h.b16 %v12
  %v91 = vunpack.c.l.b16 %v13
  %v92 = vunpack.c.h.b16 %v13
  %v93 = vunpack.c.l.b16 %v14
  %v94 = vunpack.c.h.b16 %v14
  %v95 = vunpack.c.l.b16 %v15
  %v96 = vunpack.c.h.b16 %v15
  %v97 = vunpack.c.l.b16 %v16
  %v98 = vunpack.c.h.b16 %v16
  %v99 = vunpack.c.l.b16 %v17
  %v100 = vunpack.c.h.b16 %v17
  %v101 = vunpack.c.l.b16 %v18
  %v102 = vunpack.c.h.b16 %v18
  %v103 = vunpack.c.l.b16 %v19
  %v104 = vunpack.c.h.b16 %v19
  %v105 = vunpack.c.l.b16 %v20
  %v106 = vunpack.c.h.b16 %v20
  %v107 = vunpack.c.l.b16 %v21
  %v108 = vunpack.c.h.b16 %v21
  %v109 = vunpack.c.l.b16 %v22
  %v110 = vunpack.c.h.b16 %v22
  %v111 = vunpack.c.l.b16 %v23
  %v112 = vunpack.c.h.b16 %v23
  %v113 = vunpack.c.l.b16 %v24
  %v114 = vunpack.c.h.b16 %v24
  %v115 = vunpack.c.l.b16 %v25
  %v116 = vunpack.c.h.b16 %v25
  %v117 = vunpack.c.l.b16 %v26
  %v118 = vunpack.c.h.b16 %v26
  %v119 = vunpack.c.l.b16 %v27
  %v120 = vunpack.c.h.b16 %v27
  %v121 = vunpack.c.l.b16 %v28
  %v122 = vunpack.c.h.b16 %v28
  %v123 = vunpack.c.l.b16 %v29
  %v124 = vunpack.c.h.b16 %v29
  %v125 = vunpack.c.l.b16 %v30
  %v126 = vunpack.c.h.b16 %v30
  %v127 = vunpack.c.l.b16 %v31
  %v128 = vunpack.c.h.b16 %v31
  %v129 = vunpack.c.l.b16 %v32
  %v130 = vunpack.c.h.b16 %v32
  %v131 = vpack.c.b16 %v89, %v87
  %v132 = vpack.c.b16 %v90, %v88
  %v133 = vpack.c.b16 %v93, %v91
  %v134 = vpack.c.b16 %v94, %v92
  %v135 = vpack.c.b16 %v97, %v95
  %v136 = vpack.c.b16 %v98, %v96
  %v137 = vpack.c.b16 %v101, %v99
  %v138 = vpack.c.b16 %v102, %v100
  %v139 = vpack.c.b16 %v105, %v103
  %v140 = vpack.c.b16 %v106, %v104
  %v141 = vpack.c.b16 %v109, %v107
  %v142 = vpack.c.b16 %v110, %v108
  %v143 = vpack.c.b16 %v113, %v111
  %v144 = vpack.c.b16 %v114, %v112
  %v145 = vpack.c.b16 %v117, %v115
  %v146 = vpack.c.b16 %v118, %v116
  %v147 = vpack.c.b16 %v121, %v119
  %v148 = vpack.c.b16 %v122, %v120
  %v149 = vpack.c.b16 %v125, %v123
  %v150 = vpack.c.b16 %v126, %v124
  %v151 = vpack.c.b16 %v129, %v127
  %v152 = vpack.c.b16 %v130, %v128
  %v207 = vunpack.c.l.b16 %v33
  %v208 = vunpack.c.l.b16 %v34
  %v209 = vunpack.c.l.b16 %v35
  %v210 = vunpack.c.l.b16 %v36
  %v211 = vunpack.c.l.b16 %v37
  %v212 = vunpack.c.l.b16 %v38
  %v213 = vunpack.c.l.b16 %v39
  %v214 = vunpack.c.l.b16 %v40
  %v215 = vunpack.c.l.b16 %v41
  %v216 = vunpack.c.l.b16 %v42
  %v217 = vunpack.c.l.b16 %v43
  %v218 = vunpack.c.l.b16 %v44
  %v219 = vunpack.c.l.b16 %v45
  %v220 = vunpack.c.l.b16 %v46
  %v221 = vunpack.c.l.b16 %v47
  %v222 = vunpack.c.l.b16 %v48
  %v223 = vunpack.c.l.b16 %v49
  %v224 = vunpack.c.l.b16 %v50
  %v225 = vunpack.c.l.b16 %v51
  %v226 = vunpack.c.l.b16 %v52
  %v227 = vunpack.c.l.b16 %v53
  %v228 = vunpack.c.l.b16 %v54
  %v229 = vunpack.c.l.b16 %v55
  %v230 = vunpack.c.l.b16 %v56
  %v231 = vunpack.c.l.b16 %v57
  %v232 = vunpack.c.l.b16 %v58
  %v233 = vunpack.c.l.b16 %v59
  %v234 = vunpack.c.l.b16 %v60
  %v235 = vunpack.c.l.b16 %v61
  %v236 = vunpack.c.l.b16 %v62
  %v237 = vunpack.c.l.b16 %v63
  %v238 = vunpack.c.l.b16 %v64
  %v239 = vpack.c.b16 %v208, %v207
  %v240 = vpack.c.b16 %v210, %v209
  %v241 = vpack.c.b16 %v212, %v211
  %v242 = vpack.c.b16 %v214, %v213
  %v243 = vpack.c.b16 %v216, %v215
  %v244 = vpack.c.b16 %v218, %v217
  %v245 = vpack.c.b16 %v220, %v219
  %v246 = vpack.c.b16 %v222, %v221
  %v247 = vpack.c.b16 %v224, %v223
  %v248 = vpack.c.b16 %v226, %v225
  %v249 = vpack.c.b16 %v228, %v227
  %v250 = vpack.c.b16 %v230, %v229
  %v251 = vpack.c.b16 %v232, %v231
  %v252 = vpack.c.b16 %v234, %v233
  %v253 = vpack.c.b16 %v236, %v235
  %v254 = vpack.c.b16 %v238, %v237
  %271 = vmatpush.bf16.msra.mxu0 %v246
  %272 = vmatpush.bf16.msra.mxu0 %v245
  %273 = vmatpush.bf16.msra.mxu0 %v244
  %274 = vmatpush.bf16.msra.mxu0 %v243
  %275 = vmatpush.bf16.msra.mxu0 %v242
  %276 = vmatpush.bf16.msra.mxu0 %v241
  %277 = vmatpush.bf16.msra.mxu0 %v240
  %278 = vmatpush.bf16.msra.mxu0 %v239
  %279 = vmatmul.bf16.gmra.mxu0 %v131
  %v280 = vpop.f32.mrf.mxu0
  %v281 = vadd.f32 0.0, %v280
  %v282 = vpop.f32.mrf.mxu0
  %v283 = vadd.f32 0.0, %v282
  %284 = vmatmul.bf16.gmra.mxu0 %v133
  %v285 = vpop.f32.mrf.mxu0
  %v286 = vadd.f32 0.0, %v285
  %v287 = vpop.f32.mrf.mxu0
  %v288 = vadd.f32 0.0, %v287
  %289 = vmatmul.bf16.gmra.mxu0 %v135
  %v290 = vpop.f32.mrf.mxu0
  %v291 = vadd.f32 0.0, %v290
  %v292 = vpop.f32.mrf.mxu0
  %v293 = vadd.f32 0.0, %v292
  %294 = vmatmul.bf16.gmra.mxu0 %v137
  %v295 = vpop.f32.mrf.mxu0
  %v296 = vadd.f32 0.0, %v295
  %v297 = vpop.f32.mrf.mxu0
  %v298 = vadd.f32 0.0, %v297
  %299 = vmatmul.bf16.gmra.mxu0 %v139
  %v300 = vpop.f32.mrf.mxu0
  %v301 = vadd.f32 0.0, %v300
  %v302 = vpop.f32.mrf.mxu0
  %v303 = vadd.f32 0.0, %v302
  %304 = vmatmul.bf16.gmra.mxu0 %v141
  %v305 = vpop.f32.mrf.mxu0
  %v306 = vadd.f32 0.0, %v305
  %v307 = vpop.f32.mrf.mxu0
  %v308 = vadd.f32 0.0, %v307
  %309 = vmatmul.bf16.gmra.mxu0 %v143
  %v310 = vpop.f32.mrf.mxu0
  %v311 = vadd.f32 0.0, %v310
  %v312 = vpop.f32.mrf.mxu0
  %v313 = vadd.f32 0.0, %v312
  %314 = vmatmul.bf16.gmra.mxu0 %v145
  %v315 = vpop.f32.mrf.mxu0
  %v316 = vadd.f32 0.0, %v315
  %v317 = vpop.f32.mrf.mxu0
  %v318 = vadd.f32 0.0, %v317
  %319 = vmatmul.bf16.gmra.mxu0 %v147
  %v320 = vpop.f32.mrf.mxu0
  %v321 = vadd.f32 0.0, %v320
  %v322 = vpop.f32.mrf.mxu0
  %v323 = vadd.f32 0.0, %v322
  %324 = vmatmul.bf16.gmra.mxu0 %v149
  %v325 = vpop.f32.mrf.mxu0
  %v326 = vadd.f32 0.0, %v325
  %v327 = vpop.f32.mrf.mxu0
  %v328 = vadd.f32 0.0, %v327
  %329 = vmatmul.bf16.gmra.mxu0 %v151
  %v330 = vpop.f32.mrf.mxu0
  %v331 = vadd.f32 0.0, %v330
  %v332 = vpop.f32.mrf.mxu0
  %v333 = vadd.f32 0.0, %v332
  %334 = vdwg.mxu0
  %335 = vmatpush.bf16.msra.mxu0 %v254
  %336 = vmatpush.bf16.msra.mxu0 %v253
  %337 = vmatpush.bf16.msra.mxu0 %v252
  %338 = vmatpush.bf16.msra.mxu0 %v251
  %339 = vmatpush.bf16.msra.mxu0 %v250
  %340 = vmatpush.bf16.msra.mxu0 %v249
  %341 = vmatpush.bf16.msra.mxu0 %v248
  %342 = vmatpush.bf16.msra.mxu0 %v247
  %343 = vmatmul.bf16.gmra.mxu0 %v132
  %v344 = vpop.f32.mrf.mxu0
  %v345 = vadd.f32 %v281, %v344
  %v346 = vpop.f32.mrf.mxu0
  %v347 = vadd.f32 %v283, %v346
  %348 = vmatmul.bf16.gmra.mxu0 %v134
  %v349 = vpop.f32.mrf.mxu0
  %v350 = vadd.f32 %v286, %v349
  %v351 = vpop.f32.mrf.mxu0
  %v352 = vadd.f32 %v288, %v351
  %353 = vmatmul.bf16.gmra.mxu0 %v136
  %v354 = vpop.f32.mrf.mxu0
  %v355 = vadd.f32 %v291, %v354
  %v356 = vpop.f32.mrf.mxu0
  %v357 = vadd.f32 %v293, %v356
  %358 = vmatmul.bf16.gmra.mxu0 %v138
  %v359 = vpop.f32.mrf.mxu0
  %v360 = vadd.f32 %v296, %v359
  %v361 = vpop.f32.mrf.mxu0
  %v362 = vadd.f32 %v298, %v361
  %363 = vmatmul.bf16.gmra.mxu0 %v140
  %v364 = vpop.f32.mrf.mxu0
  %v365 = vadd.f32 %v301, %v364
  %v366 = vpop.f32.mrf.mxu0
  %v367 = vadd.f32 %v303, %v366
  %368 = vmatmul.bf16.gmra.mxu0 %v142
  %v369 = vpop.f32.mrf.mxu0
  %v370 = vadd.f32 %v306, %v369
  %v371 = vpop.f32.mrf.mxu0
  %v372 = vadd.f32 %v308, %v371
  %373 = vmatmul.bf16.gmra.mxu0 %v144
  %v374 = vpop.f32.mrf.mxu0
  %v375 = vadd.f32 %v311, %v374
  %v376 = vpop.f32.mrf.mxu0
  %v377 = vadd.f32 %v313, %v376
  %378 = vmatmul.bf16.gmra.mxu0 %v146
  %v379 = vpop.f32.mrf.mxu0
  %v380 = vadd.f32 %v316, %v379
  %v381 = vpop.f32.mrf.mxu0
  %v382 = vadd.f32 %v318, %v381
  %383 = vmatmul.bf16.gmra.mxu0 %v148
  %v384 = vpop.f32.mrf.mxu0
  %v385 = vadd.f32 %v321, %v384
  %v386 = vpop.f32.mrf.mxu0
  %v387 = vadd.f32 %v323, %v386
  %388 = vmatmul.bf16.gmra.mxu0 %v150
  %v389 = vpop.f32.mrf.mxu0
  %v390 = vadd.f32 %v326, %v389
  %v391 = vpop.f32.mrf.mxu0
  %v392 = vadd.f32 %v328, %v391
  %393 = vmatmul.bf16.gmra.mxu0 %v152
  %v394 = vpop.f32.mrf.mxu0
  %v395 = vadd.f32 %v331, %v394
  %v396 = vpop.f32.mrf.mxu0
  %v397 = vadd.f32 %v333, %v396
  %398 = vdwg.mxu0
  %v399 = vmax.f32 %v345, 0.0
  %v400 = vmax.f32 %v347, 0.0
  %v401 = vmax.f32 %v350, 0.0
  %v402 = vmax.f32 %v352, 0.0
  %v403 = vmax.f32 %v355, 0.0
  %v404 = vmax.f32 %v357, 0.0
  %v405 = vmax.f32 %v360, 0.0
  %v406 = vmax.f32 %v362, 0.0
  %v407 = vmax.f32 %v365, 0.0
  %v408 = vmax.f32 %v367, 0.0
  %v409 = vmax.f32 %v370, 0.0
  %v410 = vmax.f32 %v372, 0.0
  %v411 = vmax.f32 %v375, 0.0
  %v412 = vmax.f32 %v377, 0.0
  %v413 = vmax.f32 %v380, 0.0
  %v414 = vmax.f32 %v382, 0.0
  %v415 = vmax.f32 %v385, 0.0
  %v416 = vmax.f32 %v387, 0.0
  %v417 = vmax.f32 %v390, 0.0
  %v418 = vmax.f32 %v392, 0.0
  %v419 = vmax.f32 %v395, 0.0
  %v420 = vmax.f32 %v397, 0.0
  %v421 = vpack.c.bf16 %v399, %v399
  %v422 = vpack.c.bf16 %v400, %v400
  %v423 = vpack.c.bf16 %v401, %v401
  %v424 = vpack.c.bf16 %v402, %v402
  %v425 = vpack.c.bf16 %v403, %v403
  %v426 = vpack.c.bf16 %v404, %v404
  %v427 = vpack.c.bf16 %v405, %v405
  %v428 = vpack.c.bf16 %v406, %v406
  %v429 = vpack.c.bf16 %v407, %v407
  %v430 = vpack.c.bf16 %v408, %v408
  %v431 = vpack.c.bf16 %v409, %v409
  %v432 = vpack.c.bf16 %v410, %v410
  %v433 = vpack.c.bf16 %v411, %v411
  %v434 = vpack.c.bf16 %v412, %v412
  %v435 = vpack.c.bf16 %v413, %v413
  %v436 = vpack.c.bf16 %v414, %v414
  %v437 = vpack.c.bf16 %v415, %v415
  %v438 = vpack.c.bf16 %v416, %v416
  %v439 = vpack.c.bf16 %v417, %v417
  %v440 = vpack.c.bf16 %v418, %v418
  %v441 = vpack.c.bf16 %v419, %v419
  %v442 = vpack.c.bf16 %v420, %v420
  %443 = vst [vmem:[%s2] sm:$0xf] %v421
  %444 = vst [vmem:[%s2 + $0x4] sm:$0xf] %v422
  %445 = vst [vmem:[%s2 + $0x8] sm:$0xf] %v423
  %446 = vst [vmem:[%s2 + $0xc] sm:$0xf] %v424
  %447 = vst [vmem:[%s2 + $0x10] sm:$0xf] %v425
  %448 = vst [vmem:[%s2 + $0x14] sm:$0xf] %v426
  %449 = vst [vmem:[%s2 + $0x18] sm:$0xf] %v427
  %450 = vst [vmem:[%s2 + $0x1c] sm:$0xf] %v428
  %451 = vst [vmem:[%s2 + $0x20] sm:$0xf] %v429
  %452 = vst [vmem:[%s2 + $0x24] sm:$0xf] %v430
  %453 = vst [vmem:[%s2 + $0x28] sm:$0xf] %v431
  %454 = vst [vmem:[%s2 + $0x2c] sm:$0xf] %v432
  %455 = vst [vmem:[%s2 + $0x30] sm:$0xf] %v433
  %456 = vst [vmem:[%s2 + $0x34] sm:$0xf] %v434
  %457 = vst [vmem:[%s2 + $0x38] sm:$0xf] %v435
  %458 = vst [vmem:[%s2 + $0x3c] sm:$0xf] %v436
  %459 = vst [vmem:[%s2 + $0x40] sm:$0xf] %v437
  %460 = vst [vmem:[%s2 + $0x44] sm:$0xf] %v438
  %461 = vst [vmem:[%s2 + $0x48] sm:$0xf] %v439
  %462 = vst [vmem:[%s2 + $0x4c] sm:$0xf] %v440
  %463 = vst [vmem:[%s2 + $0x50] sm:$0xf] %v441
  %464 = vst [vmem:[%s2 + $0x54] sm:$0xf] %v442
  // Predicated region
  $region10: #{model_forward.21} parent=0 // pred_check
    _
  $region11: #{model_forward.21} parent=0 // pred_check_branch
    %466 = sbr.rel (0) target = $region13
  $region12: #{model_forward.21} parent=0 // pred_region
    _
  $region13: #{model_forward.21} parent=0 // pred_fallthru
    _
  // Predicated region
  $region14: #{model_forward.21} parent=0 // pred_check
    _
  $region15: #{model_forward.21} parent=0 // pred_check_branch
    %468 = sbr.rel (0) target = $region17
  $region16: #{model_forward.21} parent=0 // pred_region
    _
  $region17: #{model_forward.21} parent=0 // pred_fallthru
    _

</llo_original>
